<compile_context>
chip_gen: v7x
topology: tpu7x:2x2x1
jax: 0.10.0
libtpu: 0.0.40
codegen_flags: <defaults>
</compile_context>

<pallas_src>
import jax
import jax.numpy as jnp
from jax.experimental import pallas as pl
from jax.experimental.pallas import tpu as pltpu


# ---------------------------------------------------------------------------
# In-kernel math helpers (traced inside the Pallas kernel).
# ---------------------------------------------------------------------------
def _headwise_layer_norm(h, avg, gamma, beta, eps=1e-5):
    """LayerNorm over each head's H features of a stacked (tile_b, 2H) tensor.

    `avg` is a (2H, 2H) block-diagonal matrix with 1/H inside each head block,
    so `h @ avg` broadcasts each head's mean back to that head's lanes.
    Variance uses E[h^2] - mu^2 so both MXU pushes depend only on h.
    """
    mu = jnp.dot(h, avg, preferred_element_type=jnp.float32)
    m2 = jnp.dot(h * h, avg, preferred_element_type=jnp.float32)
    var = jnp.maximum(m2 - mu * mu, 0.0)
    return (h - mu) * jax.lax.rsqrt(var + eps) * gamma + beta


def _mish(x):
    """torch.nn.Mish = x * tanh(softplus(x)) with softplus threshold 20.

    tanh(log1p(e^x)) == n / (n + 2) with n = e^x * (e^x + 2), so a single exp
    plus one (approximate, EUP) reciprocal suffices.
    """
    e = jnp.exp(jnp.minimum(x, 20.0))
    n = e * (e + 2.0)
    y = x * n * pl.reciprocal(n + 2.0, approx=True)
    return jnp.where(x > 20.0, x, y)


# ---------------------------------------------------------------------------
# Kernel: one batch tile, both Q heads.
#   vecs rows: 0 b1, 1 g1, 2 be1, 3 b2, 4 g2, 5 be2, 6 b3, 7 g3, 8 be3
#   mats planes: 0 W2 (block-diag), 1 W3 (block-diag), 2 avg (block-diag 1/H)
# ---------------------------------------------------------------------------
def dql_critic_kernel(obs_ref, act_ref, w1o_ref, w1a_ref, mats_ref, vecs_ref,
                      w4_ref, b4_ref, out_ref):
    avg = mats_ref[2]

    # Layer 1: split-input linear (no wrapper concat) -> per-head LN -> tanh
    h = (jnp.dot(obs_ref[...], w1o_ref[...], preferred_element_type=jnp.float32)
         + jnp.dot(act_ref[...], w1a_ref[...], preferred_element_type=jnp.float32)
         + vecs_ref[0:1, :])
    h = jnp.tanh(_headwise_layer_norm(h, avg, vecs_ref[1:2, :], vecs_ref[2:3, :]))

    # Layer 2: block-diagonal (both heads) linear -> per-head LN -> mish
    h = jnp.dot(h, mats_ref[0], preferred_element_type=jnp.float32) + vecs_ref[3:4, :]
    h = _mish(_headwise_layer_norm(h, avg, vecs_ref[4:5, :], vecs_ref[5:6, :]))

    # Layer 3: block-diagonal linear -> per-head LN -> mish
    h = jnp.dot(h, mats_ref[1], preferred_element_type=jnp.float32) + vecs_ref[6:7, :]
    h = _mish(_headwise_layer_norm(h, avg, vecs_ref[7:8, :], vecs_ref[8:9, :]))

    # Head projections: (tile_b, 2H) @ (2H, 2) -> (tile_b, 2) = [q1, q2]
    out_ref[...] = (jnp.dot(h, w4_ref[...], preferred_element_type=jnp.float32)
                    + b4_ref[...])


# ---------------------------------------------------------------------------
# Parameter construction / fusion.
# ---------------------------------------------------------------------------
def init_qnet_params(key, in_dim, hidden_dim):
    """Per-head params, matching the PyTorch module's parameter shapes.
    Linear weights stored as [in, out] (transposed vs torch's [out, in])."""
    ks = jax.random.split(key, 8)

    def lin(kw, kb, fan_in, fan_out):
        bound = 1.0 / jnp.sqrt(jnp.float32(fan_in))
        w = jax.random.uniform(kw, (fan_in, fan_out), jnp.float32, -bound, bound)
        b = jax.random.uniform(kb, (1, fan_out), jnp.float32, -bound, bound)
        return w, b

    w1, b1 = lin(ks[0], ks[1], in_dim, hidden_dim)
    w2, b2 = lin(ks[2], ks[3], hidden_dim, hidden_dim)
    w3, b3 = lin(ks[4], ks[5], hidden_dim, hidden_dim)
    w4, b4 = lin(ks[6], ks[7], hidden_dim, 1)
    ones = jnp.ones((1, hidden_dim), jnp.float32)
    zeros = jnp.zeros((1, hidden_dim), jnp.float32)
    return (w1, b1, ones, zeros,
            w2, b2, ones, zeros,
            w3, b3, ones, zeros,
            w4, b4)


def _block_diag2(a, b):
    z1 = jnp.zeros((a.shape[0], b.shape[1]), a.dtype)
    z2 = jnp.zeros((b.shape[0], a.shape[1]), a.dtype)
    return jnp.block([[a, z1], [z2, b]])


def fuse_dql_params(q1_params, q2_params, obs_dim, hidden_dim):
    """Stack/pack the two Q heads' params so one kernel computes both heads."""
    H = hidden_dim
    (w1a, b1a, g1a, be1a, w2a, b2a, g2a, be2a,
     w3a, b3a, g3a, be3a, w4a, b4a) = q1_params
    (w1b, b1b, g1b, be1b, w2b, b2b, g2b, be2b,
     w3b, b3b, g3b, be3b, w4b, b4b) = q2_params

    cat = lambda a, b: jnp.concatenate([a, b], axis=-1)

    w4 = jnp.zeros((2 * H, 2), jnp.float32)
    w4 = w4.at[:H, 0].set(w4a[:, 0]).at[H:, 1].set(w4b[:, 0])

    avg = _block_diag2(jnp.full((H, H), 1.0 / H, jnp.float32),
                       jnp.full((H, H), 1.0 / H, jnp.float32))
    mats = jnp.stack([_block_diag2(w2a, w2b),
                      _block_diag2(w3a, w3b),
                      avg], axis=0)                               # (3, 2H, 2H)
    vecs = jnp.concatenate(
        [cat(b1a, b1b), cat(g1a, g1b), cat(be1a, be1b),
         cat(b2a, b2b), cat(g2a, g2b), cat(be2a, be2b),
         cat(b3a, b3b), cat(g3a, g3b), cat(be3a, be3b)], axis=0)  # (9, 2H)

    return {
        "w1_obs": cat(w1a[:obs_dim], w1b[:obs_dim]),   # (obs_dim, 2H)
        "w1_act": cat(w1a[obs_dim:], w1b[obs_dim:]),   # (act_dim, 2H)
        "mats": mats, "vecs": vecs,
        "w4": w4, "b4": cat(b4a, b4b),                 # (2H, 2), (1, 2)
    }


# ---------------------------------------------------------------------------
# Wrapper.
# ---------------------------------------------------------------------------
_MAX_TILE = 2048  # rows; per-tile activation footprint stays ~1-2 MiB


def _plan_batch(batch):
    """Return (padded_batch, tile_b, num_steps).

    Single tile if the padded batch fits (best on single-TC v5e/v6e); otherwise
    an EVEN number of <=_MAX_TILE tiles so the parallel axis splits evenly
    across v7x's two TensorCores."""
    padded = max(8, -(-batch // 8) * 8)
    if padded <= _MAX_TILE:
        return padded, padded, 1
    steps = 2 * (-(-padded // (2 * _MAX_TILE)))
    tile = -(-padded // steps)
    tile = -(-tile // 8) * 8
    return tile * steps, tile, steps


@jax.jit
def dql_critic_forward(obs, act, fused_params):
    obs = obs.astype(jnp.float32)
    act = act.astype(jnp.float32)
    batch, obs_dim = obs.shape
    act_dim = act.shape[1]

    padded, tile_b, steps = _plan_batch(batch)
    if padded != batch:
        obs = jnp.pad(obs, ((0, padded - batch), (0, 0)))
        act = jnp.pad(act, ((0, padded - batch), (0, 0)))

    w1o = fused_params["w1_obs"]
    w1a = fused_params["w1_act"]
    mats = fused_params["mats"]
    vecs = fused_params["vecs"]
    w4 = fused_params["w4"]
    b4 = fused_params["b4"]

    # Weights/LN params: full-array blocks with constant index maps -> DMA'd
    # once and resident in VMEM across all batch tiles.
    param_specs = [
        pl.BlockSpec(w1o.shape, lambda i: (0, 0)),
        pl.BlockSpec(w1a.shape, lambda i: (0, 0)),
        pl.BlockSpec(mats.shape, lambda i: (0, 0, 0)),
        pl.BlockSpec(vecs.shape, lambda i: (0, 0)),
        pl.BlockSpec(w4.shape, lambda i: (0, 0)),
        pl.BlockSpec(b4.shape, lambda i: (0, 0)),
    ]

    out = pl.pallas_call(
        dql_critic_kernel,
        out_shape=jax.ShapeDtypeStruct((padded, 2), jnp.float32),
        grid=(steps,),
        in_specs=[pl.BlockSpec((tile_b, obs_dim), lambda i: (i, 0)),
                  pl.BlockSpec((tile_b, act_dim), lambda i: (i, 0))] + param_specs,
        out_specs=pl.BlockSpec((tile_b, 2), lambda i: (i, 0)),
        compiler_params=pltpu.CompilerParams(
            dimension_semantics=("parallel",)),
    )(obs, act, w1o, w1a, mats, vecs, w4, b4)

    q = out[:batch]
    return q[:, 0:1], q[:, 1:2]


# ---------------------------------------------------------------------------
# Pure-JAX reference (per head), mirroring the PyTorch module.
# ---------------------------------------------------------------------------
def _ref_mish(x):
    sp = jnp.where(x > 20.0, x, jnp.log1p(jnp.exp(jnp.minimum(x, 20.0))))
    return x * jnp.tanh(sp)


def _reference_qnet(obs, act, p):
    hi = jax.lax.Precision.HIGHEST
    x = jnp.concatenate([obs, act], axis=-1).astype(jnp.float32)
    (w1, b1, g1, be1, w2, b2, g2, be2, w3, b3, g3, be3, w4, b4) = p

    def ln(h, g, b, eps=1e-5):
        mu = jnp.mean(h, -1, keepdims=True)
        var = jnp.mean((h - mu) ** 2, -1, keepdims=True)
        return (h - mu) * jax.lax.rsqrt(var + eps) * g + b

    h = jnp.tanh(ln(jnp.dot(x, w1, precision=hi) + b1, g1, be1))
    h = _ref_mish(ln(jnp.dot(h, w2, precision=hi) + b2, g2, be2))
    h = _ref_mish(ln(jnp.dot(h, w3, precision=hi) + b3, g3, be3))
    return jnp.dot(h, w4, precision=hi) + b4


if __name__ == "__main__":
    # Small shapes consistent with the module's forward (obs, act -> q1, q2).
    batch, obs_dim, act_dim, hidden_dim = 256, 24, 8, 32

    key = jax.random.PRNGKey(0)
    k_obs, k_act, k_q1, k_q2 = jax.random.split(key, 4)
    obs = jax.random.normal(k_obs, (batch, obs_dim), jnp.float32)
    act = jax.random.normal(k_act, (batch, act_dim), jnp.float32)

    q1_params = init_qnet_params(k_q1, obs_dim + act_dim, hidden_dim)
    q2_params = init_qnet_params(k_q2, obs_dim + act_dim, hidden_dim)
    fused = fuse_dql_params(q1_params, q2_params, obs_dim, hidden_dim)

    q1, q2 = dql_critic_forward(obs, act, fused)
    jax.block_until_ready((q1, q2))

    q1_ref = _reference_qnet(obs, act, q1_params)
    q2_ref = _reference_qnet(obs, act, q2_params)
    assert q1.shape == (batch, 1) and q2.shape == (batch, 1)
    # Tolerance covers default-precision in-kernel f32 matmuls, the E[h^2]-mu^2
    # variance formulation, and the EUP approximate reciprocal in mish.
    assert jnp.allclose(q1, q1_ref, atol=3e-3, rtol=3e-3), \
        float(jnp.max(jnp.abs(q1 - q1_ref)))
    assert jnp.allclose(q2, q2_ref, atol=3e-3, rtol=3e-3), \
        float(jnp.max(jnp.abs(q2 - q2_ref)))

    print("KERNEL_OK")
</pallas_src>

<mosaic_0001>
module attributes {stable_mosaic.version = 11 : i64} {
  func.func @dql_critic_kernel(%arg0: i32, %arg1: memref<256x24xf32, #tpu.memory_space<vmem>>, %arg2: memref<256x8xf32, #tpu.memory_space<vmem>>, %arg3: memref<24x64xf32, #tpu.memory_space<vmem>>, %arg4: memref<8x64xf32, #tpu.memory_space<vmem>>, %arg5: memref<3x64x64xf32, #tpu.memory_space<vmem>>, %arg6: memref<9x64xf32, #tpu.memory_space<vmem>>, %arg7: memref<64x2xf32, #tpu.memory_space<vmem>>, %arg8: memref<1x2xf32, #tpu.memory_space<vmem>>, %arg9: memref<256x2xf32, #tpu.memory_space<vmem>>) attributes {dimension_semantics = [#tpu.dimension_semantics<parallel>], iteration_bounds = array<i64: 1>, scalar_prefetch = 0 : i64, scratch_operands = 0 : i64, tpu.core_type = #tpu.core_type<tc>, window_params = [{transform_indices = @transform_0, window_bounds = array<i64: 256, 24>}, {transform_indices = @transform_1, window_bounds = array<i64: 256, 8>}, {pipeline_mode = #tpu.pipeline_mode<synchronous>, transform_indices = @transform_2, window_bounds = array<i64: 24, 64>}, {pipeline_mode = #tpu.pipeline_mode<synchronous>, transform_indices = @transform_3, window_bounds = array<i64: 8, 64>}, {pipeline_mode = #tpu.pipeline_mode<synchronous>, transform_indices = @transform_4, window_bounds = array<i64: 3, 64, 64>}, {pipeline_mode = #tpu.pipeline_mode<synchronous>, transform_indices = @transform_5, window_bounds = array<i64: 9, 64>}, {pipeline_mode = #tpu.pipeline_mode<synchronous>, transform_indices = @transform_6, window_bounds = array<i64: 64, 2>}, {pipeline_mode = #tpu.pipeline_mode<synchronous>, transform_indices = @transform_7, window_bounds = array<i64: 1, 2>}, {transform_indices = @transform_8, window_bounds = array<i64: 256, 2>}]} {
    %c2 = arith.constant 2 : index
    %c0 = arith.constant 0 : index
    %c0_0 = arith.constant 0 : index
    %0 = vector.load %arg5[%c2, %c0, %c0_0] : memref<3x64x64xf32, #tpu.memory_space<vmem>>, vector<1x64x64xf32>
    %1 = vector.shape_cast %0 : vector<1x64x64xf32> to vector<64x64xf32>
    %c0_1 = arith.constant 0 : index
    %c0_2 = arith.constant 0 : index
    %2 = vector.load %arg1[%c0_1, %c0_2] : memref<256x24xf32, #tpu.memory_space<vmem>>, vector<256x24xf32>
    %c0_3 = arith.constant 0 : index
    %c0_4 = arith.constant 0 : index
    %3 = vector.load %arg3[%c0_3, %c0_4] : memref<24x64xf32, #tpu.memory_space<vmem>>, vector<24x64xf32>
    %cst = arith.constant dense<0.000000e+00> : vector<256x64xf32>
    %4 = tpu.matmul %2, %3, %cst {dimension_numbers = #tpu.dot_dimension_numbers<[1], [0], [0], [1], [0, 0, 1, 1], [], []>} : vector<256x24xf32>, vector<24x64xf32>, vector<256x64xf32> -> vector<256x64xf32>
    %c0_5 = arith.constant 0 : index
    %c0_6 = arith.constant 0 : index
    %5 = vector.load %arg2[%c0_5, %c0_6] : memref<256x8xf32, #tpu.memory_space<vmem>>, vector<256x8xf32>
    %c0_7 = arith.constant 0 : index
    %c0_8 = arith.constant 0 : index
    %6 = vector.load %arg4[%c0_7, %c0_8] : memref<8x64xf32, #tpu.memory_space<vmem>>, vector<8x64xf32>
    %cst_9 = arith.constant dense<0.000000e+00> : vector<256x64xf32>
    %7 = tpu.matmul %5, %6, %cst_9 {dimension_numbers = #tpu.dot_dimension_numbers<[1], [0], [0], [1], [0, 0, 1, 1], [], []>} : vector<256x8xf32>, vector<8x64xf32>, vector<256x64xf32> -> vector<256x64xf32>
    %8 = arith.addf %4, %7 : vector<256x64xf32>
    %c0_10 = arith.constant 0 : index
    %c0_11 = arith.constant 0 : index
    %9 = vector.load %arg6[%c0_10, %c0_11] : memref<9x64xf32, #tpu.memory_space<vmem>>, vector<1x64xf32>
    %10 = vector.broadcast %9 : vector<1x64xf32> to vector<256x64xf32>
    %11 = arith.addf %8, %10 : vector<256x64xf32>
    %c1 = arith.constant 1 : index
    %c0_12 = arith.constant 0 : index
    %12 = vector.load %arg6[%c1, %c0_12] : memref<9x64xf32, #tpu.memory_space<vmem>>, vector<1x64xf32>
    %c2_13 = arith.constant 2 : index
    %c0_14 = arith.constant 0 : index
    %13 = vector.load %arg6[%c2_13, %c0_14] : memref<9x64xf32, #tpu.memory_space<vmem>>, vector<1x64xf32>
    %cst_15 = arith.constant dense<0.000000e+00> : vector<256x64xf32>
    %14 = tpu.matmul %11, %1, %cst_15 {dimension_numbers = #tpu.dot_dimension_numbers<[1], [0], [0], [1], [0, 0, 1, 1], [], []>} : vector<256x64xf32>, vector<64x64xf32>, vector<256x64xf32> -> vector<256x64xf32>
    %15 = arith.mulf %11, %11 : vector<256x64xf32>
    %cst_16 = arith.constant dense<0.000000e+00> : vector<256x64xf32>
    %16 = tpu.matmul %15, %1, %cst_16 {dimension_numbers = #tpu.dot_dimension_numbers<[1], [0], [0], [1], [0, 0, 1, 1], [], []>} : vector<256x64xf32>, vector<64x64xf32>, vector<256x64xf32> -> vector<256x64xf32>
    %17 = arith.mulf %14, %14 : vector<256x64xf32>
    %18 = arith.subf %16, %17 : vector<256x64xf32>
    %cst_17 = arith.constant 0.000000e+00 : f32
    %19 = vector.broadcast %cst_17 : f32 to vector<256x64xf32>
    %20 = arith.maximumf %18, %19 : vector<256x64xf32>
    %21 = arith.subf %11, %14 : vector<256x64xf32>
    %cst_18 = arith.constant 9.99999974E-6 : f32
    %22 = vector.broadcast %cst_18 : f32 to vector<256x64xf32>
    %23 = arith.addf %20, %22 : vector<256x64xf32>
    %24 = math.rsqrt %23 : vector<256x64xf32>
    %25 = arith.mulf %21, %24 : vector<256x64xf32>
    %26 = vector.broadcast %12 : vector<1x64xf32> to vector<256x64xf32>
    %27 = arith.mulf %25, %26 : vector<256x64xf32>
    %28 = vector.broadcast %13 : vector<1x64xf32> to vector<256x64xf32>
    %29 = arith.addf %27, %28 : vector<256x64xf32>
    %30 = math.tanh %29 : vector<256x64xf32>
    %c0_19 = arith.constant 0 : index
    %c0_20 = arith.constant 0 : index
    %c0_21 = arith.constant 0 : index
    %31 = vector.load %arg5[%c0_19, %c0_20, %c0_21] : memref<3x64x64xf32, #tpu.memory_space<vmem>>, vector<1x64x64xf32>
    %32 = vector.shape_cast %31 : vector<1x64x64xf32> to vector<64x64xf32>
    %cst_22 = arith.constant dense<0.000000e+00> : vector<256x64xf32>
    %33 = tpu.matmul %30, %32, %cst_22 {dimension_numbers = #tpu.dot_dimension_numbers<[1], [0], [0], [1], [0, 0, 1, 1], [], []>} : vector<256x64xf32>, vector<64x64xf32>, vector<256x64xf32> -> vector<256x64xf32>
    %c3 = arith.constant 3 : index
    %c0_23 = arith.constant 0 : index
    %34 = vector.load %arg6[%c3, %c0_23] : memref<9x64xf32, #tpu.memory_space<vmem>>, vector<1x64xf32>
    %35 = vector.broadcast %34 : vector<1x64xf32> to vector<256x64xf32>
    %36 = arith.addf %33, %35 : vector<256x64xf32>
    %c4 = arith.constant 4 : index
    %c0_24 = arith.constant 0 : index
    %37 = vector.load %arg6[%c4, %c0_24] : memref<9x64xf32, #tpu.memory_space<vmem>>, vector<1x64xf32>
    %c5 = arith.constant 5 : index
    %c0_25 = arith.constant 0 : index
    %38 = vector.load %arg6[%c5, %c0_25] : memref<9x64xf32, #tpu.memory_space<vmem>>, vector<1x64xf32>
    %cst_26 = arith.constant dense<0.000000e+00> : vector<256x64xf32>
    %39 = tpu.matmul %36, %1, %cst_26 {dimension_numbers = #tpu.dot_dimension_numbers<[1], [0], [0], [1], [0, 0, 1, 1], [], []>} : vector<256x64xf32>, vector<64x64xf32>, vector<256x64xf32> -> vector<256x64xf32>
    %40 = arith.mulf %36, %36 : vector<256x64xf32>
    %cst_27 = arith.constant dense<0.000000e+00> : vector<256x64xf32>
    %41 = tpu.matmul %40, %1, %cst_27 {dimension_numbers = #tpu.dot_dimension_numbers<[1], [0], [0], [1], [0, 0, 1, 1], [], []>} : vector<256x64xf32>, vector<64x64xf32>, vector<256x64xf32> -> vector<256x64xf32>
    %42 = arith.mulf %39, %39 : vector<256x64xf32>
    %43 = arith.subf %41, %42 : vector<256x64xf32>
    %cst_28 = arith.constant 0.000000e+00 : f32
    %44 = vector.broadcast %cst_28 : f32 to vector<256x64xf32>
    %45 = arith.maximumf %43, %44 : vector<256x64xf32>
    %46 = arith.subf %36, %39 : vector<256x64xf32>
    %cst_29 = arith.constant 9.99999974E-6 : f32
    %47 = vector.broadcast %cst_29 : f32 to vector<256x64xf32>
    %48 = arith.addf %45, %47 : vector<256x64xf32>
    %49 = math.rsqrt %48 : vector<256x64xf32>
    %50 = arith.mulf %46, %49 : vector<256x64xf32>
    %51 = vector.broadcast %37 : vector<1x64xf32> to vector<256x64xf32>
    %52 = arith.mulf %50, %51 : vector<256x64xf32>
    %53 = vector.broadcast %38 : vector<1x64xf32> to vector<256x64xf32>
    %54 = arith.addf %52, %53 : vector<256x64xf32>
    %cst_30 = arith.constant 2.000000e+01 : f32
    %55 = vector.broadcast %cst_30 : f32 to vector<256x64xf32>
    %56 = arith.minimumf %54, %55 : vector<256x64xf32>
    %57 = math.exp %56 : vector<256x64xf32>
    %cst_31 = arith.constant 2.000000e+00 : f32
    %58 = vector.broadcast %cst_31 : f32 to vector<256x64xf32>
    %59 = arith.addf %57, %58 : vector<256x64xf32>
    %60 = arith.mulf %57, %59 : vector<256x64xf32>
    %61 = arith.mulf %54, %60 : vector<256x64xf32>
    %cst_32 = arith.constant 2.000000e+00 : f32
    %62 = vector.broadcast %cst_32 : f32 to vector<256x64xf32>
    %63 = arith.addf %60, %62 : vector<256x64xf32>
    %64 = tpu.reciprocal %63 {approx = true} : vector<256x64xf32> -> vector<256x64xf32>
    %65 = arith.mulf %61, %64 : vector<256x64xf32>
    %cst_33 = arith.constant 2.000000e+01 : f32
    %66 = vector.broadcast %cst_33 : f32 to vector<256x64xf32>
    %67 = arith.cmpf ogt, %54, %66 : vector<256x64xf32>
    %68 = arith.select %67, %54, %65 : vector<256x64xi1>, vector<256x64xf32>
    %c1_34 = arith.constant 1 : index
    %c0_35 = arith.constant 0 : index
    %c0_36 = arith.constant 0 : index
    %69 = vector.load %arg5[%c1_34, %c0_35, %c0_36] : memref<3x64x64xf32, #tpu.memory_space<vmem>>, vector<1x64x64xf32>
    %70 = vector.shape_cast %69 : vector<1x64x64xf32> to vector<64x64xf32>
    %cst_37 = arith.constant dense<0.000000e+00> : vector<256x64xf32>
    %71 = tpu.matmul %68, %70, %cst_37 {dimension_numbers = #tpu.dot_dimension_numbers<[1], [0], [0], [1], [0, 0, 1, 1], [], []>} : vector<256x64xf32>, vector<64x64xf32>, vector<256x64xf32> -> vector<256x64xf32>
    %c6 = arith.constant 6 : index
    %c0_38 = arith.constant 0 : index
    %72 = vector.load %arg6[%c6, %c0_38] : memref<9x64xf32, #tpu.memory_space<vmem>>, vector<1x64xf32>
    %73 = vector.broadcast %72 : vector<1x64xf32> to vector<256x64xf32>
    %74 = arith.addf %71, %73 : vector<256x64xf32>
    %c7 = arith.constant 7 : index
    %c0_39 = arith.constant 0 : index
    %75 = vector.load %arg6[%c7, %c0_39] : memref<9x64xf32, #tpu.memory_space<vmem>>, vector<1x64xf32>
    %c8 = arith.constant 8 : index
    %c0_40 = arith.constant 0 : index
    %76 = vector.load %arg6[%c8, %c0_40] : memref<9x64xf32, #tpu.memory_space<vmem>>, vector<1x64xf32>
    %cst_41 = arith.constant dense<0.000000e+00> : vector<256x64xf32>
    %77 = tpu.matmul %74, %1, %cst_41 {dimension_numbers = #tpu.dot_dimension_numbers<[1], [0], [0], [1], [0, 0, 1, 1], [], []>} : vector<256x64xf32>, vector<64x64xf32>, vector<256x64xf32> -> vector<256x64xf32>
    %78 = arith.mulf %74, %74 : vector<256x64xf32>
    %cst_42 = arith.constant dense<0.000000e+00> : vector<256x64xf32>
    %79 = tpu.matmul %78, %1, %cst_42 {dimension_numbers = #tpu.dot_dimension_numbers<[1], [0], [0], [1], [0, 0, 1, 1], [], []>} : vector<256x64xf32>, vector<64x64xf32>, vector<256x64xf32> -> vector<256x64xf32>
    %80 = arith.mulf %77, %77 : vector<256x64xf32>
    %81 = arith.subf %79, %80 : vector<256x64xf32>
    %cst_43 = arith.constant 0.000000e+00 : f32
    %82 = vector.broadcast %cst_43 : f32 to vector<256x64xf32>
    %83 = arith.maximumf %81, %82 : vector<256x64xf32>
    %84 = arith.subf %74, %77 : vector<256x64xf32>
    %cst_44 = arith.constant 9.99999974E-6 : f32
    %85 = vector.broadcast %cst_44 : f32 to vector<256x64xf32>
    %86 = arith.addf %83, %85 : vector<256x64xf32>
    %87 = math.rsqrt %86 : vector<256x64xf32>
    %88 = arith.mulf %84, %87 : vector<256x64xf32>
    %89 = vector.broadcast %75 : vector<1x64xf32> to vector<256x64xf32>
    %90 = arith.mulf %88, %89 : vector<256x64xf32>
    %91 = vector.broadcast %76 : vector<1x64xf32> to vector<256x64xf32>
    %92 = arith.addf %90, %91 : vector<256x64xf32>
    %cst_45 = arith.constant 2.000000e+01 : f32
    %93 = vector.broadcast %cst_45 : f32 to vector<256x64xf32>
    %94 = arith.minimumf %92, %93 : vector<256x64xf32>
    %95 = math.exp %94 : vector<256x64xf32>
    %cst_46 = arith.constant 2.000000e+00 : f32
    %96 = vector.broadcast %cst_46 : f32 to vector<256x64xf32>
    %97 = arith.addf %95, %96 : vector<256x64xf32>
    %98 = arith.mulf %95, %97 : vector<256x64xf32>
    %99 = arith.mulf %92, %98 : vector<256x64xf32>
    %cst_47 = arith.constant 2.000000e+00 : f32
    %100 = vector.broadcast %cst_47 : f32 to vector<256x64xf32>
    %101 = arith.addf %98, %100 : vector<256x64xf32>
    %102 = tpu.reciprocal %101 {approx = true} : vector<256x64xf32> -> vector<256x64xf32>
    %103 = arith.mulf %99, %102 : vector<256x64xf32>
    %cst_48 = arith.constant 2.000000e+01 : f32
    %104 = vector.broadcast %cst_48 : f32 to vector<256x64xf32>
    %105 = arith.cmpf ogt, %92, %104 : vector<256x64xf32>
    %106 = arith.select %105, %92, %103 : vector<256x64xi1>, vector<256x64xf32>
    %c0_49 = arith.constant 0 : index
    %c0_50 = arith.constant 0 : index
    %107 = vector.load %arg7[%c0_49, %c0_50] : memref<64x2xf32, #tpu.memory_space<vmem>>, vector<64x2xf32>
    %cst_51 = arith.constant dense<0.000000e+00> : vector<256x2xf32>
    %108 = tpu.matmul %106, %107, %cst_51 {dimension_numbers = #tpu.dot_dimension_numbers<[1], [0], [0], [1], [0, 0, 1, 1], [], []>} : vector<256x64xf32>, vector<64x2xf32>, vector<256x2xf32> -> vector<256x2xf32>
    %c0_52 = arith.constant 0 : index
    %c0_53 = arith.constant 0 : index
    %109 = vector.load %arg8[%c0_52, %c0_53] : memref<1x2xf32, #tpu.memory_space<vmem>>, vector<1x2xf32>
    %110 = vector.broadcast %109 : vector<1x2xf32> to vector<256x2xf32>
    %111 = arith.addf %108, %110 : vector<256x2xf32>
    %c0_54 = arith.constant 0 : index
    %c0_55 = arith.constant 0 : index
    %112 = vector.load %arg9[%c0_54, %c0_55] : memref<256x2xf32, #tpu.memory_space<vmem>>, vector<256x2xf32>
    tpu.vector_store %arg9[%c0_54, %c0_55], %111 {strides = array<i32>} : memref<256x2xf32, #tpu.memory_space<vmem>>, vector<256x2xf32>,
    return
  }
  func.func @transform_0(%arg0: i32) -> (i32, i32) {
    %c0_i32 = arith.constant 0 : i32
    %c0_i32_0 = arith.constant 0 : i32
    return %arg0, %c0_i32 : i32, i32
  }
  func.func @transform_1(%arg0: i32) -> (i32, i32) {
    %c0_i32 = arith.constant 0 : i32
    %c0_i32_0 = arith.constant 0 : i32
    return %arg0, %c0_i32 : i32, i32
  }
  func.func @transform_2(%arg0: i32) -> (i32, i32) {
    %c0_i32 = arith.constant 0 : i32
    %c0_i32_0 = arith.constant 0 : i32
    %c0_i32_1 = arith.constant 0 : i32
    return %c0_i32, %c0_i32_0 : i32, i32
  }
  func.func @transform_3(%arg0: i32) -> (i32, i32) {
    %c0_i32 = arith.constant 0 : i32
    %c0_i32_0 = arith.constant 0 : i32
    %c0_i32_1 = arith.constant 0 : i32
    return %c0_i32, %c0_i32_0 : i32, i32
  }
  func.func @transform_4(%arg0: i32) -> (i32, i32, i32) {
    %c0_i32 = arith.constant 0 : i32
    %c0_i32_0 = arith.constant 0 : i32
    %c0_i32_1 = arith.constant 0 : i32
    %c0_i32_2 = arith.constant 0 : i32
    return %c0_i32, %c0_i32_0, %c0_i32_1 : i32, i32, i32
  }
  func.func @transform_5(%arg0: i32) -> (i32, i32) {
    %c0_i32 = arith.constant 0 : i32
    %c0_i32_0 = arith.constant 0 : i32
    %c0_i32_1 = arith.constant 0 : i32
    return %c0_i32, %c0_i32_0 : i32, i32
  }
  func.func @transform_6(%arg0: i32) -> (i32, i32) {
    %c0_i32 = arith.constant 0 : i32
    %c0_i32_0 = arith.constant 0 : i32
    %c0_i32_1 = arith.constant 0 : i32
    return %c0_i32, %c0_i32_0 : i32, i32
  }
  func.func @transform_7(%arg0: i32) -> (i32, i32) {
    %c0_i32 = arith.constant 0 : i32
    %c0_i32_0 = arith.constant 0 : i32
    %c0_i32_1 = arith.constant 0 : i32
    return %c0_i32, %c0_i32_0 : i32, i32
  }
  func.func @transform_8(%arg0: i32) -> (i32, i32) {
    %c0_i32 = arith.constant 0 : i32
    %c0_i32_0 = arith.constant 0 : i32
    return %arg0, %c0_i32 : i32, i32
  }
}

</mosaic_0001>

<llo_original>
// kernel: dql_critic_forward.1
$region0: #{dql_critic_forward.1}
  #allocation0 [shape = 'u32[]', space=smem, size = 0x4, offset = 0x4, fixed_abs, tag = 'smem constant byte address 0x4 - core index']
  #allocation1 [shape = 'u32[144,128]{1,0:T(1,128)}', space=vmem, size = 0x12000, scoped, tag = 'internal scratch']
  %s0 = inlined_call_operand.vmem [shape: f32[256,24], index: 0, kind: input, shape index: {}]
  %s1 = inlined_call_operand.vmem [shape: f32[256,8], index: 1, kind: input, shape index: {}]
  %s2 = inlined_call_operand.vmem [shape: f32[24,64], index: 2, kind: input, shape index: {}]
  %s3 = inlined_call_operand.vmem [shape: f32[8,64], index: 3, kind: input, shape index: {}]
  %s4 = inlined_call_operand.vmem [shape: f32[3,64,64], index: 4, kind: input, shape index: {}]
  %s5 = inlined_call_operand.vmem [shape: f32[9,64], index: 5, kind: input, shape index: {}]
  %s6 = inlined_call_operand.vmem [shape: f32[64,2], index: 6, kind: input, shape index: {}]
  %s7 = inlined_call_operand.vmem [shape: f32[1,2], index: 7, kind: input, shape index: {}]
  %s8 = inlined_call_operand.vmem [shape: f32[256,2], index: 8, kind: output, shape index: {}]
  %s9 = sld [smem:[#allocation0]]
  $region42: #{dql_critic_forward.1} parent=0
    _
  %s11 = ssub.s32 1, %s9
  %s12 = scalar_select 0, %s11, %s9
  // Predicated region
  $region2: #{dql_critic_forward.1} parent=0 // pred_check
    _
  $region3: #{dql_critic_forward.1} parent=0 // pred_check_branch
    %14 = sbr.rel (0) target = $region5
  $region4: #{dql_critic_forward.1} parent=0 // pred_region
    _
  $region5: #{dql_critic_forward.1} parent=0 // pred_fallthru
    _
  // Predicated region
  $region6: #{dql_critic_forward.1} parent=0 // pred_check
    _
  $region7: #{dql_critic_forward.1} parent=0 // pred_check_branch
    %16 = sbr.rel (0) target = $region9
  $region8: #{dql_critic_forward.1} parent=0 // pred_region
    _
  $region9: #{dql_critic_forward.1} parent=0 // pred_fallthru
    _
  // Predicated region
  $region10: #{dql_critic_forward.1} parent=0 // pred_check
    _
  $region11: #{dql_critic_forward.1} parent=0 // pred_check_branch
    %18 = sbr.rel (0) target = $region13
  $region12: #{dql_critic_forward.1} parent=0 // pred_region
    _
  $region13: #{dql_critic_forward.1} parent=0 // pred_fallthru
    _
  // Predicated region
  $region14: #{dql_critic_forward.1} parent=0 // pred_check
    _
  $region15: #{dql_critic_forward.1} parent=0 // pred_check_branch
    %20 = sbr.rel (0) target = $region17
  $region16: #{dql_critic_forward.1} parent=0 // pred_region
    _
  $region17: #{dql_critic_forward.1} parent=0 // pred_fallthru
    _
  // Predicated region
  $region18: #{dql_critic_forward.1} parent=0 // pred_check
    _
  $region19: #{dql_critic_forward.1} parent=0 // pred_check_branch
    %22 = sbr.rel (0) target = $region21
  $region20: #{dql_critic_forward.1} parent=0 // pred_region
    _
  $region21: #{dql_critic_forward.1} parent=0 // pred_fallthru
    _
  // Predicated region
  $region22: #{dql_critic_forward.1} parent=0 // pred_check
    _
  $region23: #{dql_critic_forward.1} parent=0 // pred_check_branch
    %24 = sbr.rel (0) target = $region25
  $region24: #{dql_critic_forward.1} parent=0 // pred_region
    _
  $region25: #{dql_critic_forward.1} parent=0 // pred_fallthru
    _
  // Predicated region
  $region26: #{dql_critic_forward.1} parent=0 // pred_check
    _
  $region27: #{dql_critic_forward.1} parent=0 // pred_check_branch
    %26 = sbr.rel (0) target = $region29
  $region28: #{dql_critic_forward.1} parent=0 // pred_region
    _
  $region29: #{dql_critic_forward.1} parent=0 // pred_fallthru
    _
  // Predicated region
  $region30: #{dql_critic_forward.1} parent=0 // pred_check
    _
  $region31: #{dql_critic_forward.1} parent=0 // pred_check_branch
    %28 = sbr.rel (0) target = $region33
  $region32: #{dql_critic_forward.1} parent=0 // pred_region
    _
  $region33: #{dql_critic_forward.1} parent=0 // pred_fallthru
    _
  %s29 = scalar_lea.vmem %s4, 128
  %v30 = vld [vmem:[%s29] sm:$0xff]
  %v31 = vld [vmem:[%s29 + $0x8] sm:$0xff]
  %v32 = vld [vmem:[%s29 + $0x10] sm:$0xff]
  %v33 = vld [vmem:[%s29 + $0x18] sm:$0xff]
  %v34 = vld [vmem:[%s29 + $0x20] sm:$0xff]
  %v35 = vld [vmem:[%s29 + $0x28] sm:$0xff]
  %v36 = vld [vmem:[%s29 + $0x30] sm:$0xff]
  %v37 = vld [vmem:[%s29 + $0x38] sm:$0xff]
  %v38 = vld [vmem:[%s0] sm:$0xff]
  %v39 = vld [vmem:[%s0 + $0x8] sm:$0xff]
  %v40 = vld [vmem:[%s0 + $0x10] sm:$0xff]
  %v41 = vld [vmem:[%s0 + $0x18] sm:$0xff]
  %v42 = vld [vmem:[%s0 + $0x20] sm:$0xff]
  %v43 = vld [vmem:[%s0 + $0x28] sm:$0xff]
  %v44 = vld [vmem:[%s0 + $0x30] sm:$0xff]
  %v45 = vld [vmem:[%s0 + $0x38] sm:$0xff]
  %v46 = vld [vmem:[%s0 + $0x40] sm:$0xff]
  %v47 = vld [vmem:[%s0 + $0x48] sm:$0xff]
  %v48 = vld [vmem:[%s0 + $0x50] sm:$0xff]
  %v49 = vld [vmem:[%s0 + $0x58] sm:$0xff]
  %v50 = vld [vmem:[%s0 + $0x60] sm:$0xff]
  %v51 = vld [vmem:[%s0 + $0x68] sm:$0xff]
  %v52 = vld [vmem:[%s0 + $0x70] sm:$0xff]
  %v53 = vld [vmem:[%s0 + $0x78] sm:$0xff]
  %v54 = vld [vmem:[%s0 + $0x80] sm:$0xff]
  %v55 = vld [vmem:[%s0 + $0x88] sm:$0xff]
  %v56 = vld [vmem:[%s0 + $0x90] sm:$0xff]
  %v57 = vld [vmem:[%s0 + $0x98] sm:$0xff]
  %v58 = vld [vmem:[%s0 + $0xa0] sm:$0xff]
  %v59 = vld [vmem:[%s0 + $0xa8] sm:$0xff]
  %v60 = vld [vmem:[%s0 + $0xb0] sm:$0xff]
  %v61 = vld [vmem:[%s0 + $0xb8] sm:$0xff]
  %v62 = vld [vmem:[%s0 + $0xc0] sm:$0xff]
  %v63 = vld [vmem:[%s0 + $0xc8] sm:$0xff]
  %v64 = vld [vmem:[%s0 + $0xd0] sm:$0xff]
  %v65 = vld [vmem:[%s0 + $0xd8] sm:$0xff]
  %v66 = vld [vmem:[%s0 + $0xe0] sm:$0xff]
  %v67 = vld [vmem:[%s0 + $0xe8] sm:$0xff]
  %v68 = vld [vmem:[%s0 + $0xf0] sm:$0xff]
  %v69 = vld [vmem:[%s0 + $0xf8] sm:$0xff]
  %v70 = vld [vmem:[%s2] sm:$0xff]
  %v71 = vld [vmem:[%s2 + $0x8] sm:$0xff]
  %v72 = vld [vmem:[%s2 + $0x10] sm:$0xff]
  %v73 = vld [vmem:[%s1] sm:$0xff]
  %v74 = vld [vmem:[%s1 + $0x8] sm:$0xff]
  %v75 = vld [vmem:[%s1 + $0x10] sm:$0xff]
  %v76 = vld [vmem:[%s1 + $0x18] sm:$0xff]
  %v77 = vld [vmem:[%s1 + $0x20] sm:$0xff]
  %v78 = vld [vmem:[%s1 + $0x28] sm:$0xff]
  %v79 = vld [vmem:[%s1 + $0x30] sm:$0xff]
  %v80 = vld [vmem:[%s1 + $0x38] sm:$0xff]
  %v81 = vld [vmem:[%s1 + $0x40] sm:$0xff]
  %v82 = vld [vmem:[%s1 + $0x48] sm:$0xff]
  %v83 = vld [vmem:[%s1 + $0x50] sm:$0xff]
  %v84 = vld [vmem:[%s1 + $0x58] sm:$0xff]
  %v85 = vld [vmem:[%s1 + $0x60] sm:$0xff]
  %v86 = vld [vmem:[%s1 + $0x68] sm:$0xff]
  %v87 = vld [vmem:[%s1 + $0x70] sm:$0xff]
  %v88 = vld [vmem:[%s1 + $0x78] sm:$0xff]
  %v89 = vld [vmem:[%s1 + $0x80] sm:$0xff]
  %v90 = vld [vmem:[%s1 + $0x88] sm:$0xff]
  %v91 = vld [vmem:[%s1 + $0x90] sm:$0xff]
  %v92 = vld [vmem:[%s1 + $0x98] sm:$0xff]
  %v93 = vld [vmem:[%s1 + $0xa0] sm:$0xff]
  %v94 = vld [vmem:[%s1 + $0xa8] sm:$0xff]
  %v95 = vld [vmem:[%s1 + $0xb0] sm:$0xff]
  %v96 = vld [vmem:[%s1 + $0xb8] sm:$0xff]
  %v97 = vld [vmem:[%s1 + $0xc0] sm:$0xff]
  %v98 = vld [vmem:[%s1 + $0xc8] sm:$0xff]
  %v99 = vld [vmem:[%s1 + $0xd0] sm:$0xff]
  %v100 = vld [vmem:[%s1 + $0xd8] sm:$0xff]
  %v101 = vld [vmem:[%s1 + $0xe0] sm:$0xff]
  %v102 = vld [vmem:[%s1 + $0xe8] sm:$0xff]
  %v103 = vld [vmem:[%s1 + $0xf0] sm:$0xff]
  %v104 = vld [vmem:[%s1 + $0xf8] sm:$0xff]
  %v105 = vld [vmem:[%s3] sm:$0xff]
  %vm106 = vcmask 64512
  %v108 = vsel %vm106, %v73, 0
  %v111 = vsel %vm106, %v74, 0
  %v114 = vsel %vm106, %v75, 0
  %v117 = vsel %vm106, %v76, 0
  %v120 = vsel %vm106, %v77, 0
  %v123 = vsel %vm106, %v78, 0
  %v126 = vsel %vm106, %v79, 0
  %v129 = vsel %vm106, %v80, 0
  %v132 = vsel %vm106, %v81, 0
  %v135 = vsel %vm106, %v82, 0
  %v138 = vsel %vm106, %v83, 0
  %v141 = vsel %vm106, %v84, 0
  %v144 = vsel %vm106, %v85, 0
  %v147 = vsel %vm106, %v86, 0
  %v150 = vsel %vm106, %v87, 0
  %v153 = vsel %vm106, %v88, 0
  %v156 = vsel %vm106, %v89, 0
  %v159 = vsel %vm106, %v90, 0
  %v162 = vsel %vm106, %v91, 0
  %v165 = vsel %vm106, %v92, 0
  %v168 = vsel %vm106, %v93, 0
  %v171 = vsel %vm106, %v94, 0
  %v174 = vsel %vm106, %v95, 0
  %v177 = vsel %vm106, %v96, 0
  %v180 = vsel %vm106, %v97, 0
  %v183 = vsel %vm106, %v98, 0
  %v186 = vsel %vm106, %v99, 0
  %v189 = vsel %vm106, %v100, 0
  %v192 = vsel %vm106, %v101, 0
  %v195 = vsel %vm106, %v102, 0
  %v198 = vsel %vm106, %v103, 0
  %v201 = vsel %vm106, %v104, 0
  %203 = vmatprep.subr.mxu0 0.0
  %204 = vmatpush1.msra.mxu0 %v105
  %205 = vmatprep.subr.mxu0 0.0
  %206 = vmatpush1.msra.mxu0 0.0
  %207 = vmatprep.subr.mxu0 0.0
  %208 = vmatpush1.msra.mxu0 0.0
  %209 = vmatprep.subr.mxu0 0.0
  %210 = vmatpush1.msra.mxu0 0.0
  %211 = vmatprep.subr.mxu0 0.0
  %212 = vmatpush1.msra.mxu0 0.0
  %213 = vmatprep.subr.mxu0 0.0
  %214 = vmatpush1.msra.mxu0 0.0
  %215 = vmatprep.subr.mxu0 0.0
  %216 = vmatpush1.msra.mxu0 0.0
  %217 = vmatprep.subr.mxu0 0.0
  %218 = vmatpush1.msra.mxu0 0.0
  %219 = vmatprep.subr.mxu0 0.0
  %220 = vmatpush1.msra.mxu0 0.0
  %221 = vmatprep.subr.mxu0 0.0
  %222 = vmatpush1.msra.mxu0 0.0
  %223 = vmatprep.subr.mxu0 0.0
  %224 = vmatpush1.msra.mxu0 0.0
  %225 = vmatprep.subr.mxu0 0.0
  %226 = vmatpush1.msra.mxu0 0.0
  %227 = vmatprep.subr.mxu0 0.0
  %228 = vmatpush1.msra.mxu0 0.0
  %229 = vmatprep.subr.mxu0 0.0
  %230 = vmatpush1.msra.mxu0 0.0
  %231 = vmatprep.subr.mxu0 0.0
  %232 = vmatpush1.msra.mxu0 0.0
  %233 = vmatprep.subr.mxu0 0.0
  %234 = vmatpush1.msra.mxu0 0.0
  %235 = vmatprep.subr.mxu0 0.0
  %236 = vmatpush1.msra.mxu0 0.0
  %237 = vmatprep.subr.mxu0 0.0
  %238 = vmatpush1.msra.mxu0 0.0
  %239 = vmatprep.subr.mxu0 0.0
  %240 = vmatpush1.msra.mxu0 0.0
  %241 = vmatprep.subr.mxu0 0.0
  %242 = vmatpush1.msra.mxu0 0.0
  %243 = vmatprep.subr.mxu0 0.0
  %244 = vmatpush1.msra.mxu0 0.0
  %245 = vmatprep.subr.mxu0 0.0
  %246 = vmatpush1.msra.mxu0 0.0
  %247 = vmatprep.subr.mxu0 0.0
  %248 = vmatpush1.msra.mxu0 0.0
  %249 = vmatprep.subr.mxu0 0.0
  %250 = vmatpush1.msra.mxu0 0.0
  %251 = vmatprep.subr.mxu0 0.0
  %252 = vmatpush1.msra.mxu0 0.0
  %253 = vmatprep.subr.mxu0 0.0
  %254 = vmatpush1.msra.mxu0 0.0
  %255 = vmatprep.subr.mxu0 0.0
  %256 = vmatpush1.msra.mxu0 0.0
  %257 = vmatprep.subr.mxu0 0.0
  %258 = vmatpush1.msra.mxu0 0.0
  %259 = vmatprep.subr.mxu0 0.0
  %260 = vmatpush1.msra.mxu0 0.0
  %261 = vmatprep.subr.mxu0 0.0
  %262 = vmatpush1.msra.mxu0 0.0
  %263 = vmatprep.subr.mxu0 0.0
  %264 = vmatpush1.msra.mxu0 0.0
  %265 = vmatprep.subr.mxu0 0.0
  %266 = vmatpush1.msra.mxu0 0.0
  %267 = vmatprep.mubr.f32.mxu0 0.0
  %268 = vmatmul.mubr.f32.gmra.mrb[0].mxu0 %v108
  %v269 = vpop.f32.mrb[0].mxu0
  %v270 = vadd.f32 0.0, %v269
  %v271 = vpop.f32.mrb[0].mxu0
  %272 = vmatprep.mubr.f32.mxu0 0.0
  %273 = vmatmul.mubr.f32.gmra.mrb[0].mxu0 %v111
  %v274 = vpop.f32.mrb[0].mxu0
  %v275 = vadd.f32 0.0, %v274
  %v276 = vpop.f32.mrb[0].mxu0
  %277 = vmatprep.mubr.f32.mxu0 0.0
  %278 = vmatmul.mubr.f32.gmra.mrb[0].mxu0 %v114
  %v279 = vpop.f32.mrb[0].mxu0
  %v280 = vadd.f32 0.0, %v279
  %v281 = vpop.f32.mrb[0].mxu0
  %282 = vmatprep.mubr.f32.mxu0 0.0
  %283 = vmatmul.mubr.f32.gmra.mrb[0].mxu0 %v117
  %v284 = vpop.f32.mrb[0].mxu0
  %v285 = vadd.f32 0.0, %v284
  %v286 = vpop.f32.mrb[0].mxu0
  %287 = vmatprep.mubr.f32.mxu0 0.0
  %288 = vmatmul.mubr.f32.gmra.mrb[0].mxu0 %v120
  %v289 = vpop.f32.mrb[0].mxu0
  %v290 = vadd.f32 0.0, %v289
  %v291 = vpop.f32.mrb[0].mxu0
  %292 = vmatprep.mubr.f32.mxu0 0.0
  %293 = vmatmul.mubr.f32.gmra.mrb[0].mxu0 %v123
  %v294 = vpop.f32.mrb[0].mxu0
  %v295 = vadd.f32 0.0, %v294
  %v296 = vpop.f32.mrb[0].mxu0
  %297 = vmatprep.mubr.f32.mxu0 0.0
  %298 = vmatmul.mubr.f32.gmra.mrb[0].mxu0 %v126
  %v299 = vpop.f32.mrb[0].mxu0
  %v300 = vadd.f32 0.0, %v299
  %v301 = vpop.f32.mrb[0].mxu0
  %302 = vmatprep.mubr.f32.mxu0 0.0
  %303 = vmatmul.mubr.f32.gmra.mrb[0].mxu0 %v129
  %v304 = vpop.f32.mrb[0].mxu0
  %v305 = vadd.f32 0.0, %v304
  %v306 = vpop.f32.mrb[0].mxu0
  %307 = vmatprep.mubr.f32.mxu0 0.0
  %308 = vmatmul.mubr.f32.gmra.mrb[0].mxu0 %v132
  %v309 = vpop.f32.mrb[0].mxu0
  %v310 = vadd.f32 0.0, %v309
  %v311 = vpop.f32.mrb[0].mxu0
  %312 = vmatprep.mubr.f32.mxu0 0.0
  %313 = vmatmul.mubr.f32.gmra.mrb[0].mxu0 %v135
  %v314 = vpop.f32.mrb[0].mxu0
  %v315 = vadd.f32 0.0, %v314
  %v316 = vpop.f32.mrb[0].mxu0
  %317 = vmatprep.mubr.f32.mxu0 0.0
  %318 = vmatmul.mubr.f32.gmra.mrb[0].mxu0 %v138
  %v319 = vpop.f32.mrb[0].mxu0
  %v320 = vadd.f32 0.0, %v319
  %v321 = vpop.f32.mrb[0].mxu0
  %322 = vmatprep.mubr.f32.mxu0 0.0
  %323 = vmatmul.mubr.f32.gmra.mrb[0].mxu0 %v141
  %v324 = vpop.f32.mrb[0].mxu0
  %v325 = vadd.f32 0.0, %v324
  %v326 = vpop.f32.mrb[0].mxu0
  %327 = vmatprep.mubr.f32.mxu0 0.0
  %328 = vmatmul.mubr.f32.gmra.mrb[0].mxu0 %v144
  %v329 = vpop.f32.mrb[0].mxu0
  %v330 = vadd.f32 0.0, %v329
  %v331 = vpop.f32.mrb[0].mxu0
  %332 = vmatprep.mubr.f32.mxu0 0.0
  %333 = vmatmul.mubr.f32.gmra.mrb[0].mxu0 %v147
  %v334 = vpop.f32.mrb[0].mxu0
  %v335 = vadd.f32 0.0, %v334
  %v336 = vpop.f32.mrb[0].mxu0
  %337 = vmatprep.mubr.f32.mxu0 0.0
  %338 = vmatmul.mubr.f32.gmra.mrb[0].mxu0 %v150
  %v339 = vpop.f32.mrb[0].mxu0
  %v340 = vadd.f32 0.0, %v339
  %v341 = vpop.f32.mrb[0].mxu0
  %342 = vmatprep.mubr.f32.mxu0 0.0
  %343 = vmatmul.mubr.f32.gmra.mrb[0].mxu0 %v153
  %v344 = vpop.f32.mrb[0].mxu0
  %v345 = vadd.f32 0.0, %v344
  %v346 = vpop.f32.mrb[0].mxu0
  %347 = vmatprep.mubr.f32.mxu0 0.0
  %348 = vmatmul.mubr.f32.gmra.mrb[0].mxu0 %v156
  %v349 = vpop.f32.mrb[0].mxu0
  %v350 = vadd.f32 0.0, %v349
  %v351 = vpop.f32.mrb[0].mxu0
  %352 = vmatprep.mubr.f32.mxu0 0.0
  %353 = vmatmul.mubr.f32.gmra.mrb[0].mxu0 %v159
  %v354 = vpop.f32.mrb[0].mxu0
  %v355 = vadd.f32 0.0, %v354
  %v356 = vpop.f32.mrb[0].mxu0
  %357 = vmatprep.mubr.f32.mxu0 0.0
  %358 = vmatmul.mubr.f32.gmra.mrb[0].mxu0 %v162
  %v359 = vpop.f32.mrb[0].mxu0
  %v360 = vadd.f32 0.0, %v359
  %v361 = vpop.f32.mrb[0].mxu0
  %362 = vmatprep.mubr.f32.mxu0 0.0
  %363 = vmatmul.mubr.f32.gmra.mrb[0].mxu0 %v165
  %v364 = vpop.f32.mrb[0].mxu0
  %v365 = vadd.f32 0.0, %v364
  %v366 = vpop.f32.mrb[0].mxu0
  %367 = vmatprep.mubr.f32.mxu0 0.0
  %368 = vmatmul.mubr.f32.gmra.mrb[0].mxu0 %v168
  %v369 = vpop.f32.mrb[0].mxu0
  %v370 = vadd.f32 0.0, %v369
  %v371 = vpop.f32.mrb[0].mxu0
  %372 = vmatprep.mubr.f32.mxu0 0.0
  %373 = vmatmul.mubr.f32.gmra.mrb[0].mxu0 %v171
  %v374 = vpop.f32.mrb[0].mxu0
  %v375 = vadd.f32 0.0, %v374
  %v376 = vpop.f32.mrb[0].mxu0
  %377 = vmatprep.mubr.f32.mxu0 0.0
  %378 = vmatmul.mubr.f32.gmra.mrb[0].mxu0 %v174
  %v379 = vpop.f32.mrb[0].mxu0
  %v380 = vadd.f32 0.0, %v379
  %v381 = vpop.f32.mrb[0].mxu0
  %382 = vmatprep.mubr.f32.mxu0 0.0
  %383 = vmatmul.mubr.f32.gmra.mrb[0].mxu0 %v177
  %v384 = vpop.f32.mrb[0].mxu0
  %v385 = vadd.f32 0.0, %v384
  %v386 = vpop.f32.mrb[0].mxu0
  %387 = vmatprep.mubr.f32.mxu0 0.0
  %388 = vmatmul.mubr.f32.gmra.mrb[0].mxu0 %v180
  %v389 = vpop.f32.mrb[0].mxu0
  %v390 = vadd.f32 0.0, %v389
  %v391 = vpop.f32.mrb[0].mxu0
  %392 = vmatprep.mubr.f32.mxu0 0.0
  %393 = vmatmul.mubr.f32.gmra.mrb[0].mxu0 %v183
  %v394 = vpop.f32.mrb[0].mxu0
  %v395 = vadd.f32 0.0, %v394
  %v396 = vpop.f32.mrb[0].mxu0
  %397 = vmatprep.mubr.f32.mxu0 0.0
  %398 = vmatmul.mubr.f32.gmra.mrb[0].mxu0 %v186
  %v399 = vpop.f32.mrb[0].mxu0
  %v400 = vadd.f32 0.0, %v399
  %v401 = vpop.f32.mrb[0].mxu0
  %402 = vmatprep.mubr.f32.mxu0 0.0
  %403 = vmatmul.mubr.f32.gmra.mrb[0].mxu0 %v189
  %v404 = vpop.f32.mrb[0].mxu0
  %v405 = vadd.f32 0.0, %v404
  %v406 = vpop.f32.mrb[0].mxu0
  %407 = vmatprep.mubr.f32.mxu0 0.0
  %408 = vmatmul.mubr.f32.gmra.mrb[0].mxu0 %v192
  %v409 = vpop.f32.mrb[0].mxu0
  %v410 = vadd.f32 0.0, %v409
  %v411 = vpop.f32.mrb[0].mxu0
  %412 = vmatprep.mubr.f32.mxu0 0.0
  %413 = vmatmul.mubr.f32.gmra.mrb[0].mxu0 %v195
  %v414 = vpop.f32.mrb[0].mxu0
  %v415 = vadd.f32 0.0, %v414
  %v416 = vpop.f32.mrb[0].mxu0
  %417 = vmatprep.mubr.f32.mxu0 0.0
  %418 = vmatmul.mubr.f32.gmra.mrb[0].mxu0 %v198
  %v419 = vpop.f32.mrb[0].mxu0
  %v420 = vadd.f32 0.0, %v419
  %v421 = vpop.f32.mrb[0].mxu0
  %422 = vmatprep.mubr.f32.mxu0 0.0
  %423 = vmatmul.mubr.f32.gmra.mrb[0].mxu0 %v201
  %v424 = vpop.f32.mrb[0].mxu0
  %v425 = vadd.f32 0.0, %v424
  %v426 = vpop.f32.mrb[0].mxu0
  %427 = vdwg.mxu0
  %vm428 = vcmask 195584
  %v430 = vsel %vm428, %v38, 0
  %v433 = vsel %vm428, %v39, 0
  %v436 = vsel %vm428, %v40, 0
  %v439 = vsel %vm428, %v41, 0
  %v442 = vsel %vm428, %v42, 0
  %v445 = vsel %vm428, %v43, 0
  %v448 = vsel %vm428, %v44, 0
  %v451 = vsel %vm428, %v45, 0
  %v454 = vsel %vm428, %v46, 0
  %v457 = vsel %vm428, %v47, 0
  %v460 = vsel %vm428, %v48, 0
  %v463 = vsel %vm428, %v49, 0
  %v466 = vsel %vm428, %v50, 0
  %v469 = vsel %vm428, %v51, 0
  %v472 = vsel %vm428, %v52, 0
  %v475 = vsel %vm428, %v53, 0
  %v478 = vsel %vm428, %v54, 0
  %v481 = vsel %vm428, %v55, 0
  %v484 = vsel %vm428, %v56, 0
  %v487 = vsel %vm428, %v57, 0
  %v490 = vsel %vm428, %v58, 0
  %v493 = vsel %vm428, %v59, 0
  %v496 = vsel %vm428, %v60, 0
  %v499 = vsel %vm428, %v61, 0
  %v502 = vsel %vm428, %v62, 0
  %v505 = vsel %vm428, %v63, 0
  %v508 = vsel %vm428, %v64, 0
  %v511 = vsel %vm428, %v65, 0
  %v514 = vsel %vm428, %v66, 0
  %v517 = vsel %vm428, %v67, 0
  %v520 = vsel %vm428, %v68, 0
  %v523 = vsel %vm428, %v69, 0
  %525 = vmatprep.subr.mxu0 0.0
  %526 = vmatpush1.msra.mxu0 %v70
  %527 = vmatprep.subr.mxu0 0.0
  %528 = vmatpush1.msra.mxu0 %v71
  %529 = vmatprep.subr.mxu0 0.0
  %530 = vmatpush1.msra.mxu0 %v72
  %531 = vmatprep.subr.mxu0 0.0
  %532 = vmatpush1.msra.mxu0 0.0
  %533 = vmatprep.subr.mxu0 0.0
  %534 = vmatpush1.msra.mxu0 0.0
  %535 = vmatprep.subr.mxu0 0.0
  %536 = vmatpush1.msra.mxu0 0.0
  %537 = vmatprep.subr.mxu0 0.0
  %538 = vmatpush1.msra.mxu0 0.0
  %539 = vmatprep.subr.mxu0 0.0
  %540 = vmatpush1.msra.mxu0 0.0
  %541 = vmatprep.subr.mxu0 0.0
  %542 = vmatpush1.msra.mxu0 0.0
  %543 = vmatprep.subr.mxu0 0.0
  %544 = vmatpush1.msra.mxu0 0.0
  %545 = vmatprep.subr.mxu0 0.0
  %546 = vmatpush1.msra.mxu0 0.0
  %547 = vmatprep.subr.mxu0 0.0
  %548 = vmatpush1.msra.mxu0 0.0
  %549 = vmatprep.subr.mxu0 0.0
  %550 = vmatpush1.msra.mxu0 0.0
  %551 = vmatprep.subr.mxu0 0.0
  %552 = vmatpush1.msra.mxu0 0.0
  %553 = vmatprep.subr.mxu0 0.0
  %554 = vmatpush1.msra.mxu0 0.0
  %555 = vmatprep.subr.mxu0 0.0
  %556 = vmatpush1.msra.mxu0 0.0
  %557 = vmatprep.subr.mxu0 0.0
  %558 = vmatpush1.msra.mxu0 0.0
  %559 = vmatprep.subr.mxu0 0.0
  %560 = vmatpush1.msra.mxu0 0.0
  %561 = vmatprep.subr.mxu0 0.0
  %562 = vmatpush1.msra.mxu0 0.0
  %563 = vmatprep.subr.mxu0 0.0
  %564 = vmatpush1.msra.mxu0 0.0
  %565 = vmatprep.subr.mxu0 0.0
  %566 = vmatpush1.msra.mxu0 0.0
  %567 = vmatprep.subr.mxu0 0.0
  %568 = vmatpush1.msra.mxu0 0.0
  %569 = vmatprep.subr.mxu0 0.0
  %570 = vmatpush1.msra.mxu0 0.0
  %571 = vmatprep.subr.mxu0 0.0
  %572 = vmatpush1.msra.mxu0 0.0
  %573 = vmatprep.subr.mxu0 0.0
  %574 = vmatpush1.msra.mxu0 0.0
  %575 = vmatprep.subr.mxu0 0.0
  %576 = vmatpush1.msra.mxu0 0.0
  %577 = vmatprep.subr.mxu0 0.0
  %578 = vmatpush1.msra.mxu0 0.0
  %579 = vmatprep.subr.mxu0 0.0
  %580 = vmatpush1.msra.mxu0 0.0
  %581 = vmatprep.subr.mxu0 0.0
  %582 = vmatpush1.msra.mxu0 0.0
  %583 = vmatprep.subr.mxu0 0.0
  %584 = vmatpush1.msra.mxu0 0.0
  %585 = vmatprep.subr.mxu0 0.0
  %586 = vmatpush1.msra.mxu0 0.0
  %587 = vmatprep.subr.mxu0 0.0
  %588 = vmatpush1.msra.mxu0 0.0
  %589 = vmatprep.mubr.f32.mxu0 0.0
  %590 = vmatmul.mubr.f32.gmra.mrb[0].mxu0 %v430
  %v591 = vpop.f32.mrb[0].mxu0
  %v592 = vadd.f32 %v270, %v591
  %v593 = vpop.f32.mrb[0].mxu0
  %594 = vmatprep.mubr.f32.mxu0 0.0
  %595 = vmatmul.mubr.f32.gmra.mrb[0].mxu0 %v433
  %v596 = vpop.f32.mrb[0].mxu0
  %v597 = vadd.f32 %v275, %v596
  %v598 = vpop.f32.mrb[0].mxu0
  %599 = vmatprep.mubr.f32.mxu0 0.0
  %600 = vmatmul.mubr.f32.gmra.mrb[0].mxu0 %v436
  %v601 = vpop.f32.mrb[0].mxu0
  %v602 = vadd.f32 %v280, %v601
  %v603 = vpop.f32.mrb[0].mxu0
  %604 = vmatprep.mubr.f32.mxu0 0.0
  %605 = vmatmul.mubr.f32.gmra.mrb[0].mxu0 %v439
  %v606 = vpop.f32.mrb[0].mxu0
  %v607 = vadd.f32 %v285, %v606
  %v608 = vpop.f32.mrb[0].mxu0
  %609 = vmatprep.mubr.f32.mxu0 0.0
  %610 = vmatmul.mubr.f32.gmra.mrb[0].mxu0 %v442
  %v611 = vpop.f32.mrb[0].mxu0
  %v612 = vadd.f32 %v290, %v611
  %v613 = vpop.f32.mrb[0].mxu0
  %614 = vmatprep.mubr.f32.mxu0 0.0
  %615 = vmatmul.mubr.f32.gmra.mrb[0].mxu0 %v445
  %v616 = vpop.f32.mrb[0].mxu0
  %v617 = vadd.f32 %v295, %v616
  %v618 = vpop.f32.mrb[0].mxu0
  %619 = vmatprep.mubr.f32.mxu0 0.0
  %620 = vmatmul.mubr.f32.gmra.mrb[0].mxu0 %v448
  %v621 = vpop.f32.mrb[0].mxu0
  %v622 = vadd.f32 %v300, %v621
  %v623 = vpop.f32.mrb[0].mxu0
  %624 = vmatprep.mubr.f32.mxu0 0.0
  %625 = vmatmul.mubr.f32.gmra.mrb[0].mxu0 %v451
  %v626 = vpop.f32.mrb[0].mxu0
  %v627 = vadd.f32 %v305, %v626
  %v628 = vpop.f32.mrb[0].mxu0
  %629 = vmatprep.mubr.f32.mxu0 0.0
  %630 = vmatmul.mubr.f32.gmra.mrb[0].mxu0 %v454
  %v631 = vpop.f32.mrb[0].mxu0
  %v632 = vadd.f32 %v310, %v631
  %v633 = vpop.f32.mrb[0].mxu0
  %634 = vmatprep.mubr.f32.mxu0 0.0
  %635 = vmatmul.mubr.f32.gmra.mrb[0].mxu0 %v457
  %v636 = vpop.f32.mrb[0].mxu0
  %v637 = vadd.f32 %v315, %v636
  %v638 = vpop.f32.mrb[0].mxu0
  %639 = vmatprep.mubr.f32.mxu0 0.0
  %640 = vmatmul.mubr.f32.gmra.mrb[0].mxu0 %v460
  %v641 = vpop.f32.mrb[0].mxu0
  %v642 = vadd.f32 %v320, %v641
  %v643 = vpop.f32.mrb[0].mxu0
  %644 = vmatprep.mubr.f32.mxu0 0.0
  %645 = vmatmul.mubr.f32.gmra.mrb[0].mxu0 %v463
  %v646 = vpop.f32.mrb[0].mxu0
  %v647 = vadd.f32 %v325, %v646
  %v648 = vpop.f32.mrb[0].mxu0
  %649 = vmatprep.mubr.f32.mxu0 0.0
  %650 = vmatmul.mubr.f32.gmra.mrb[0].mxu0 %v466
  %v651 = vpop.f32.mrb[0].mxu0
  %v652 = vadd.f32 %v330, %v651
  %v653 = vpop.f32.mrb[0].mxu0
  %654 = vmatprep.mubr.f32.mxu0 0.0
  %655 = vmatmul.mubr.f32.gmra.mrb[0].mxu0 %v469
  %v656 = vpop.f32.mrb[0].mxu0
  %v657 = vadd.f32 %v335, %v656
  %v658 = vpop.f32.mrb[0].mxu0
  %659 = vmatprep.mubr.f32.mxu0 0.0
  %660 = vmatmul.mubr.f32.gmra.mrb[0].mxu0 %v472
  %v661 = vpop.f32.mrb[0].mxu0
  %v662 = vadd.f32 %v340, %v661
  %v663 = vpop.f32.mrb[0].mxu0
  %664 = vmatprep.mubr.f32.mxu0 0.0
  %665 = vmatmul.mubr.f32.gmra.mrb[0].mxu0 %v475
  %v666 = vpop.f32.mrb[0].mxu0
  %v667 = vadd.f32 %v345, %v666
  %v668 = vpop.f32.mrb[0].mxu0
  %669 = vmatprep.mubr.f32.mxu0 0.0
  %670 = vmatmul.mubr.f32.gmra.mrb[0].mxu0 %v478
  %v671 = vpop.f32.mrb[0].mxu0
  %v672 = vadd.f32 %v350, %v671
  %v673 = vpop.f32.mrb[0].mxu0
  %674 = vmatprep.mubr.f32.mxu0 0.0
  %675 = vmatmul.mubr.f32.gmra.mrb[0].mxu0 %v481
  %v676 = vpop.f32.mrb[0].mxu0
  %v677 = vadd.f32 %v355, %v676
  %v678 = vpop.f32.mrb[0].mxu0
  %679 = vmatprep.mubr.f32.mxu0 0.0
  %680 = vmatmul.mubr.f32.gmra.mrb[0].mxu0 %v484
  %v681 = vpop.f32.mrb[0].mxu0
  %v682 = vadd.f32 %v360, %v681
  %v683 = vpop.f32.mrb[0].mxu0
  %684 = vmatprep.mubr.f32.mxu0 0.0
  %685 = vmatmul.mubr.f32.gmra.mrb[0].mxu0 %v487
  %v686 = vpop.f32.mrb[0].mxu0
  %v687 = vadd.f32 %v365, %v686
  %v688 = vpop.f32.mrb[0].mxu0
  %689 = vmatprep.mubr.f32.mxu0 0.0
  %690 = vmatmul.mubr.f32.gmra.mrb[0].mxu0 %v490
  %v691 = vpop.f32.mrb[0].mxu0
  %v692 = vadd.f32 %v370, %v691
  %v693 = vpop.f32.mrb[0].mxu0
  %694 = vmatprep.mubr.f32.mxu0 0.0
  %695 = vmatmul.mubr.f32.gmra.mrb[0].mxu0 %v493
  %v696 = vpop.f32.mrb[0].mxu0
  %v697 = vadd.f32 %v375, %v696
  %v698 = vpop.f32.mrb[0].mxu0
  %699 = vmatprep.mubr.f32.mxu0 0.0
  %700 = vmatmul.mubr.f32.gmra.mrb[0].mxu0 %v496
  %v701 = vpop.f32.mrb[0].mxu0
  %v702 = vadd.f32 %v380, %v701
  %v703 = vpop.f32.mrb[0].mxu0
  %704 = vmatprep.mubr.f32.mxu0 0.0
  %705 = vmatmul.mubr.f32.gmra.mrb[0].mxu0 %v499
  %v706 = vpop.f32.mrb[0].mxu0
  %v707 = vadd.f32 %v385, %v706
  %v708 = vpop.f32.mrb[0].mxu0
  %709 = vmatprep.mubr.f32.mxu0 0.0
  %710 = vmatmul.mubr.f32.gmra.mrb[0].mxu0 %v502
  %v711 = vpop.f32.mrb[0].mxu0
  %v712 = vadd.f32 %v390, %v711
  %v713 = vpop.f32.mrb[0].mxu0
  %714 = vmatprep.mubr.f32.mxu0 0.0
  %715 = vmatmul.mubr.f32.gmra.mrb[0].mxu0 %v505
  %v716 = vpop.f32.mrb[0].mxu0
  %v717 = vadd.f32 %v395, %v716
  %v718 = vpop.f32.mrb[0].mxu0
  %719 = vmatprep.mubr.f32.mxu0 0.0
  %720 = vmatmul.mubr.f32.gmra.mrb[0].mxu0 %v508
  %v721 = vpop.f32.mrb[0].mxu0
  %v722 = vadd.f32 %v400, %v721
  %v723 = vpop.f32.mrb[0].mxu0
  %724 = vmatprep.mubr.f32.mxu0 0.0
  %725 = vmatmul.mubr.f32.gmra.mrb[0].mxu0 %v511
  %v726 = vpop.f32.mrb[0].mxu0
  %v727 = vadd.f32 %v405, %v726
  %v728 = vpop.f32.mrb[0].mxu0
  %729 = vmatprep.mubr.f32.mxu0 0.0
  %730 = vmatmul.mubr.f32.gmra.mrb[0].mxu0 %v514
  %v731 = vpop.f32.mrb[0].mxu0
  %v732 = vadd.f32 %v410, %v731
  %v733 = vpop.f32.mrb[0].mxu0
  %734 = vmatprep.mubr.f32.mxu0 0.0
  %735 = vmatmul.mubr.f32.gmra.mrb[0].mxu0 %v517
  %v736 = vpop.f32.mrb[0].mxu0
  %v737 = vadd.f32 %v415, %v736
  %v738 = vpop.f32.mrb[0].mxu0
  %739 = vmatprep.mubr.f32.mxu0 0.0
  %740 = vmatmul.mubr.f32.gmra.mrb[0].mxu0 %v520
  %v741 = vpop.f32.mrb[0].mxu0
  %v742 = vadd.f32 %v420, %v741
  %v743 = vpop.f32.mrb[0].mxu0
  %744 = vmatprep.mubr.f32.mxu0 0.0
  %745 = vmatmul.mubr.f32.gmra.mrb[0].mxu0 %v523
  %v746 = vpop.f32.mrb[0].mxu0
  %v747 = vadd.f32 %v425, %v746
  %v748 = vpop.f32.mrb[0].mxu0
  %749 = vdwg.mxu0
  %v750 = vld [vmem:[%s5] sm:$0x1]
  %v751 = vlaneseq
  %v752 = vshrl.u32 %v751, 7
  %v753 = vsub.s32 0, %v752
  %v754 = vrot.slane %v750, %v753
  %v755 = vadd.f32 %v592, %v754
  %v756 = vadd.f32 %v597, %v754
  %v757 = vadd.f32 %v602, %v754
  %v758 = vadd.f32 %v607, %v754
  %v759 = vadd.f32 %v612, %v754
  %v760 = vadd.f32 %v617, %v754
  %v761 = vadd.f32 %v622, %v754
  %v762 = vadd.f32 %v627, %v754
  %v763 = vadd.f32 %v632, %v754
  %v764 = vadd.f32 %v637, %v754
  %v765 = vadd.f32 %v642, %v754
  %v766 = vadd.f32 %v647, %v754
  %v767 = vadd.f32 %v652, %v754
  %v768 = vadd.f32 %v657, %v754
  %v769 = vadd.f32 %v662, %v754
  %v770 = vadd.f32 %v667, %v754
  %v771 = vadd.f32 %v672, %v754
  %v772 = vadd.f32 %v677, %v754
  %v773 = vadd.f32 %v682, %v754
  %v774 = vadd.f32 %v687, %v754
  %v775 = vadd.f32 %v692, %v754
  %v776 = vadd.f32 %v697, %v754
  %v777 = vadd.f32 %v702, %v754
  %v778 = vadd.f32 %v707, %v754
  %v779 = vadd.f32 %v712, %v754
  %v780 = vadd.f32 %v717, %v754
  %v781 = vadd.f32 %v722, %v754
  %v782 = vadd.f32 %v727, %v754
  %v783 = vadd.f32 %v732, %v754
  %v784 = vadd.f32 %v737, %v754
  %v785 = vadd.f32 %v742, %v754
  %v786 = vadd.f32 %v747, %v754
  %v787 = vld [vmem:[%s5 + $0x1] sm:$0x1]
  %v788 = vld [vmem:[%s5 + $0x2] sm:$0x1]
  %vm789 = vcmask 523264
  %v791 = vsel %vm789, %v755, 0
  %v794 = vsel %vm789, %v756, 0
  %v797 = vsel %vm789, %v757, 0
  %v800 = vsel %vm789, %v758, 0
  %v803 = vsel %vm789, %v759, 0
  %v806 = vsel %vm789, %v760, 0
  %v809 = vsel %vm789, %v761, 0
  %v812 = vsel %vm789, %v762, 0
  %v815 = vsel %vm789, %v763, 0
  %v818 = vsel %vm789, %v764, 0
  %v821 = vsel %vm789, %v765, 0
  %v824 = vsel %vm789, %v766, 0
  %v827 = vsel %vm789, %v767, 0
  %v830 = vsel %vm789, %v768, 0
  %v833 = vsel %vm789, %v769, 0
  %v836 = vsel %vm789, %v770, 0
  %v839 = vsel %vm789, %v771, 0
  %v842 = vsel %vm789, %v772, 0
  %v845 = vsel %vm789, %v773, 0
  %v848 = vsel %vm789, %v774, 0
  %v851 = vsel %vm789, %v775, 0
  %v854 = vsel %vm789, %v776, 0
  %v857 = vsel %vm789, %v777, 0
  %v860 = vsel %vm789, %v778, 0
  %v863 = vsel %vm789, %v779, 0
  %v866 = vsel %vm789, %v780, 0
  %v869 = vsel %vm789, %v781, 0
  %v872 = vsel %vm789, %v782, 0
  %v875 = vsel %vm789, %v783, 0
  %v878 = vsel %vm789, %v784, 0
  %v881 = vsel %vm789, %v785, 0
  %v884 = vsel %vm789, %v786, 0
  %886 = vmatprep.subr.mxu0 0.0
  %887 = vmatpush1.msra.mxu0 %v30
  %888 = vmatprep.subr.mxu0 0.0
  %889 = vmatpush1.msra.mxu0 %v31
  %890 = vmatprep.subr.mxu0 0.0
  %891 = vmatpush1.msra.mxu0 %v32
  %892 = vmatprep.subr.mxu0 0.0
  %893 = vmatpush1.msra.mxu0 %v33
  %894 = vmatprep.subr.mxu0 0.0
  %895 = vmatpush1.msra.mxu0 %v34
  %896 = vmatprep.subr.mxu0 0.0
  %897 = vmatpush1.msra.mxu0 %v35
  %898 = vmatprep.subr.mxu0 0.0
  %899 = vmatpush1.msra.mxu0 %v36
  %900 = vmatprep.subr.mxu0 0.0
  %901 = vmatpush1.msra.mxu0 %v37
  %902 = vmatprep.subr.mxu0 0.0
  %903 = vmatpush1.msra.mxu0 0.0
  %904 = vmatprep.subr.mxu0 0.0
  %905 = vmatpush1.msra.mxu0 0.0
  %906 = vmatprep.subr.mxu0 0.0
  %907 = vmatpush1.msra.mxu0 0.0
  %908 = vmatprep.subr.mxu0 0.0
  %909 = vmatpush1.msra.mxu0 0.0
  %910 = vmatprep.subr.mxu0 0.0
  %911 = vmatpush1.msra.mxu0 0.0
  %912 = vmatprep.subr.mxu0 0.0
  %913 = vmatpush1.msra.mxu0 0.0
  %914 = vmatprep.subr.mxu0 0.0
  %915 = vmatpush1.msra.mxu0 0.0
  %916 = vmatprep.subr.mxu0 0.0
  %917 = vmatpush1.msra.mxu0 0.0
  %918 = vmatprep.subr.mxu0 0.0
  %919 = vmatpush1.msra.mxu0 0.0
  %920 = vmatprep.subr.mxu0 0.0
  %921 = vmatpush1.msra.mxu0 0.0
  %922 = vmatprep.subr.mxu0 0.0
  %923 = vmatpush1.msra.mxu0 0.0
  %924 = vmatprep.subr.mxu0 0.0
  %925 = vmatpush1.msra.mxu0 0.0
  %926 = vmatprep.subr.mxu0 0.0
  %927 = vmatpush1.msra.mxu0 0.0
  %928 = vmatprep.subr.mxu0 0.0
  %929 = vmatpush1.msra.mxu0 0.0
  %930 = vmatprep.subr.mxu0 0.0
  %931 = vmatpush1.msra.mxu0 0.0
  %932 = vmatprep.subr.mxu0 0.0
  %933 = vmatpush1.msra.mxu0 0.0
  %934 = vmatprep.subr.mxu0 0.0
  %935 = vmatpush1.msra.mxu0 0.0
  %936 = vmatprep.subr.mxu0 0.0
  %937 = vmatpush1.msra.mxu0 0.0
  %938 = vmatprep.subr.mxu0 0.0
  %939 = vmatpush1.msra.mxu0 0.0
  %940 = vmatprep.subr.mxu0 0.0
  %941 = vmatpush1.msra.mxu0 0.0
  %942 = vmatprep.subr.mxu0 0.0
  %943 = vmatpush1.msra.mxu0 0.0
  %944 = vmatprep.subr.mxu0 0.0
  %945 = vmatpush1.msra.mxu0 0.0
  %946 = vmatprep.subr.mxu0 0.0
  %947 = vmatpush1.msra.mxu0 0.0
  %948 = vmatprep.subr.mxu0 0.0
  %949 = vmatpush1.msra.mxu0 0.0
  %950 = vmatprep.mubr.f32.mxu0 0.0
  %951 = vmatmul.mubr.f32.gmra.mrb[0].mxu0 %v791
  %v952 = vpop.f32.mrb[0].mxu0
  %v953 = vadd.f32 0.0, %v952
  %v954 = vpop.f32.mrb[0].mxu0
  %955 = vmatprep.mubr.f32.mxu0 0.0
  %956 = vmatmul.mubr.f32.gmra.mrb[0].mxu0 %v794
  %v957 = vpop.f32.mrb[0].mxu0
  %v958 = vadd.f32 0.0, %v957
  %v959 = vpop.f32.mrb[0].mxu0
  %960 = vmatprep.mubr.f32.mxu0 0.0
  %961 = vmatmul.mubr.f32.gmra.mrb[0].mxu0 %v797
  %v962 = vpop.f32.mrb[0].mxu0
  %v963 = vadd.f32 0.0, %v962
  %v964 = vpop.f32.mrb[0].mxu0
  %965 = vmatprep.mubr.f32.mxu0 0.0
  %966 = vmatmul.mubr.f32.gmra.mrb[0].mxu0 %v800
  %v967 = vpop.f32.mrb[0].mxu0
  %v968 = vadd.f32 0.0, %v967
  %v969 = vpop.f32.mrb[0].mxu0
  %970 = vmatprep.mubr.f32.mxu0 0.0
  %971 = vmatmul.mubr.f32.gmra.mrb[0].mxu0 %v803
  %v972 = vpop.f32.mrb[0].mxu0
  %v973 = vadd.f32 0.0, %v972
  %v974 = vpop.f32.mrb[0].mxu0
  %975 = vmatprep.mubr.f32.mxu0 0.0
  %976 = vmatmul.mubr.f32.gmra.mrb[0].mxu0 %v806
  %v977 = vpop.f32.mrb[0].mxu0
  %v978 = vadd.f32 0.0, %v977
  %v979 = vpop.f32.mrb[0].mxu0
  %980 = vmatprep.mubr.f32.mxu0 0.0
  %981 = vmatmul.mubr.f32.gmra.mrb[0].mxu0 %v809
  %v982 = vpop.f32.mrb[0].mxu0
  %v983 = vadd.f32 0.0, %v982
  %v984 = vpop.f32.mrb[0].mxu0
  %985 = vmatprep.mubr.f32.mxu0 0.0
  %986 = vmatmul.mubr.f32.gmra.mrb[0].mxu0 %v812
  %v987 = vpop.f32.mrb[0].mxu0
  %v988 = vadd.f32 0.0, %v987
  %v989 = vpop.f32.mrb[0].mxu0
  %990 = vmatprep.mubr.f32.mxu0 0.0
  %991 = vmatmul.mubr.f32.gmra.mrb[0].mxu0 %v815
  %v992 = vpop.f32.mrb[0].mxu0
  %v993 = vadd.f32 0.0, %v992
  %v994 = vpop.f32.mrb[0].mxu0
  %995 = vmatprep.mubr.f32.mxu0 0.0
  %996 = vmatmul.mubr.f32.gmra.mrb[0].mxu0 %v818
  %v997 = vpop.f32.mrb[0].mxu0
  %v998 = vadd.f32 0.0, %v997
  %v999 = vpop.f32.mrb[0].mxu0
  %1000 = vmatprep.mubr.f32.mxu0 0.0
  %1001 = vmatmul.mubr.f32.gmra.mrb[0].mxu0 %v821
  %v1002 = vpop.f32.mrb[0].mxu0
  %v1003 = vadd.f32 0.0, %v1002
  %v1004 = vpop.f32.mrb[0].mxu0
  %1005 = vmatprep.mubr.f32.mxu0 0.0
  %1006 = vmatmul.mubr.f32.gmra.mrb[0].mxu0 %v824
  %v1007 = vpop.f32.mrb[0].mxu0
  %v1008 = vadd.f32 0.0, %v1007
  %v1009 = vpop.f32.mrb[0].mxu0
  %1010 = vmatprep.mubr.f32.mxu0 0.0
  %1011 = vmatmul.mubr.f32.gmra.mrb[0].mxu0 %v827
  %v1012 = vpop.f32.mrb[0].mxu0
  %v1013 = vadd.f32 0.0, %v1012
  %v1014 = vpop.f32.mrb[0].mxu0
  %1015 = vmatprep.mubr.f32.mxu0 0.0
  %1016 = vmatmul.mubr.f32.gmra.mrb[0].mxu0 %v830
  %v1017 = vpop.f32.mrb[0].mxu0
  %v1018 = vadd.f32 0.0, %v1017
  %v1019 = vpop.f32.mrb[0].mxu0
  %1020 = vmatprep.mubr.f32.mxu0 0.0
  %1021 = vmatmul.mubr.f32.gmra.mrb[0].mxu0 %v833
  %v1022 = vpop.f32.mrb[0].mxu0
  %v1023 = vadd.f32 0.0, %v1022
  %v1024 = vpop.f32.mrb[0].mxu0
  %1025 = vmatprep.mubr.f32.mxu0 0.0
  %1026 = vmatmul.mubr.f32.gmra.mrb[0].mxu0 %v836
  %v1027 = vpop.f32.mrb[0].mxu0
  %v1028 = vadd.f32 0.0, %v1027
  %v1029 = vpop.f32.mrb[0].mxu0
  %1030 = vmatprep.mubr.f32.mxu0 0.0
  %1031 = vmatmul.mubr.f32.gmra.mrb[0].mxu0 %v839
  %v1032 = vpop.f32.mrb[0].mxu0
  %v1033 = vadd.f32 0.0, %v1032
  %v1034 = vpop.f32.mrb[0].mxu0
  %1035 = vmatprep.mubr.f32.mxu0 0.0
  %1036 = vmatmul.mubr.f32.gmra.mrb[0].mxu0 %v842
  %v1037 = vpop.f32.mrb[0].mxu0
  %v1038 = vadd.f32 0.0, %v1037
  %v1039 = vpop.f32.mrb[0].mxu0
  %1040 = vmatprep.mubr.f32.mxu0 0.0
  %1041 = vmatmul.mubr.f32.gmra.mrb[0].mxu0 %v845
  %v1042 = vpop.f32.mrb[0].mxu0
  %v1043 = vadd.f32 0.0, %v1042
  %v1044 = vpop.f32.mrb[0].mxu0
  %1045 = vmatprep.mubr.f32.mxu0 0.0
  %1046 = vmatmul.mubr.f32.gmra.mrb[0].mxu0 %v848
  %v1047 = vpop.f32.mrb[0].mxu0
  %v1048 = vadd.f32 0.0, %v1047
  %v1049 = vpop.f32.mrb[0].mxu0
  %1050 = vmatprep.mubr.f32.mxu0 0.0
  %1051 = vmatmul.mubr.f32.gmra.mrb[0].mxu0 %v851
  %v1052 = vpop.f32.mrb[0].mxu0
  %v1053 = vadd.f32 0.0, %v1052
  %v1054 = vpop.f32.mrb[0].mxu0
  %1055 = vmatprep.mubr.f32.mxu0 0.0
  %1056 = vmatmul.mubr.f32.gmra.mrb[0].mxu0 %v854
  %v1057 = vpop.f32.mrb[0].mxu0
  %v1058 = vadd.f32 0.0, %v1057
  %v1059 = vpop.f32.mrb[0].mxu0
  %1060 = vmatprep.mubr.f32.mxu0 0.0
  %1061 = vmatmul.mubr.f32.gmra.mrb[0].mxu0 %v857
  %v1062 = vpop.f32.mrb[0].mxu0
  %v1063 = vadd.f32 0.0, %v1062
  %v1064 = vpop.f32.mrb[0].mxu0
  %1065 = vmatprep.mubr.f32.mxu0 0.0
  %1066 = vmatmul.mubr.f32.gmra.mrb[0].mxu0 %v860
  %v1067 = vpop.f32.mrb[0].mxu0
  %v1068 = vadd.f32 0.0, %v1067
  %v1069 = vpop.f32.mrb[0].mxu0
  %1070 = vmatprep.mubr.f32.mxu0 0.0
  %1071 = vmatmul.mubr.f32.gmra.mrb[0].mxu0 %v863
  %v1072 = vpop.f32.mrb[0].mxu0
  %v1073 = vadd.f32 0.0, %v1072
  %v1074 = vpop.f32.mrb[0].mxu0
  %1075 = vmatprep.mubr.f32.mxu0 0.0
  %1076 = vmatmul.mubr.f32.gmra.mrb[0].mxu0 %v866
  %v1077 = vpop.f32.mrb[0].mxu0
  %v1078 = vadd.f32 0.0, %v1077
  %v1079 = vpop.f32.mrb[0].mxu0
  %1080 = vmatprep.mubr.f32.mxu0 0.0
  %1081 = vmatmul.mubr.f32.gmra.mrb[0].mxu0 %v869
  %v1082 = vpop.f32.mrb[0].mxu0
  %v1083 = vadd.f32 0.0, %v1082
  %v1084 = vpop.f32.mrb[0].mxu0
  %1085 = vmatprep.mubr.f32.mxu0 0.0
  %1086 = vmatmul.mubr.f32.gmra.mrb[0].mxu0 %v872
  %v1087 = vpop.f32.mrb[0].mxu0
  %v1088 = vadd.f32 0.0, %v1087
  %v1089 = vpop.f32.mrb[0].mxu0
  %1090 = vmatprep.mubr.f32.mxu0 0.0
  %1091 = vmatmul.mubr.f32.gmra.mrb[0].mxu0 %v875
  %v1092 = vpop.f32.mrb[0].mxu0
  %v1093 = vadd.f32 0.0, %v1092
  %v1094 = vpop.f32.mrb[0].mxu0
  %1095 = vmatprep.mubr.f32.mxu0 0.0
  %1096 = vmatmul.mubr.f32.gmra.mrb[0].mxu0 %v878
  %v1097 = vpop.f32.mrb[0].mxu0
  %v1098 = vadd.f32 0.0, %v1097
  %v1099 = vpop.f32.mrb[0].mxu0
  %1100 = vmatprep.mubr.f32.mxu0 0.0
  %1101 = vmatmul.mubr.f32.gmra.mrb[0].mxu0 %v881
  %v1102 = vpop.f32.mrb[0].mxu0
  %v1103 = vadd.f32 0.0, %v1102
  %v1104 = vpop.f32.mrb[0].mxu0
  %1105 = vmatprep.mubr.f32.mxu0 0.0
  %1106 = vmatmul.mubr.f32.gmra.mrb[0].mxu0 %v884
  %v1107 = vpop.f32.mrb[0].mxu0
  %v1108 = vadd.f32 0.0, %v1107
  %v1109 = vpop.f32.mrb[0].mxu0
  %1110 = vdwg.mxu0
  %v1111 = vmul.f32 %v755, %v755
  %v1112 = vmul.f32 %v756, %v756
  %v1113 = vmul.f32 %v757, %v757
  %v1114 = vmul.f32 %v758, %v758
  %v1115 = vmul.f32 %v759, %v759
  %v1116 = vmul.f32 %v760, %v760
  %v1117 = vmul.f32 %v761, %v761
  %v1118 = vmul.f32 %v762, %v762
  %v1119 = vmul.f32 %v763, %v763
  %v1120 = vmul.f32 %v764, %v764
  %v1121 = vmul.f32 %v765, %v765
  %v1122 = vmul.f32 %v766, %v766
  %v1123 = vmul.f32 %v767, %v767
  %v1124 = vmul.f32 %v768, %v768
  %v1125 = vmul.f32 %v769, %v769
  %v1126 = vmul.f32 %v770, %v770
  %v1127 = vmul.f32 %v771, %v771
  %v1128 = vmul.f32 %v772, %v772
  %v1129 = vmul.f32 %v773, %v773
  %v1130 = vmul.f32 %v774, %v774
  %v1131 = vmul.f32 %v775, %v775
  %v1132 = vmul.f32 %v776, %v776
  %v1133 = vmul.f32 %v777, %v777
  %v1134 = vmul.f32 %v778, %v778
  %v1135 = vmul.f32 %v779, %v779
  %v1136 = vmul.f32 %v780, %v780
  %v1137 = vmul.f32 %v781, %v781
  %v1138 = vmul.f32 %v782, %v782
  %v1139 = vmul.f32 %v783, %v783
  %v1140 = vmul.f32 %v784, %v784
  %v1141 = vmul.f32 %v785, %v785
  %v1142 = vmul.f32 %v786, %v786
  %v1144 = vsel %vm789, %v1111, 0
  %v1147 = vsel %vm789, %v1112, 0
  %v1150 = vsel %vm789, %v1113, 0
  %v1153 = vsel %vm789, %v1114, 0
  %v1156 = vsel %vm789, %v1115, 0
  %v1159 = vsel %vm789, %v1116, 0
  %v1162 = vsel %vm789, %v1117, 0
  %v1165 = vsel %vm789, %v1118, 0
  %v1168 = vsel %vm789, %v1119, 0
  %v1171 = vsel %vm789, %v1120, 0
  %v1174 = vsel %vm789, %v1121, 0
  %v1177 = vsel %vm789, %v1122, 0
  %v1180 = vsel %vm789, %v1123, 0
  %v1183 = vsel %vm789, %v1124, 0
  %v1186 = vsel %vm789, %v1125, 0
  %v1189 = vsel %vm789, %v1126, 0
  %v1192 = vsel %vm789, %v1127, 0
  %v1195 = vsel %vm789, %v1128, 0
  %v1198 = vsel %vm789, %v1129, 0
  %v1201 = vsel %vm789, %v1130, 0
  %v1204 = vsel %vm789, %v1131, 0
  %v1207 = vsel %vm789, %v1132, 0
  %v1210 = vsel %vm789, %v1133, 0
  %v1213 = vsel %vm789, %v1134, 0
  %v1216 = vsel %vm789, %v1135, 0
  %v1219 = vsel %vm789, %v1136, 0
  %v1222 = vsel %vm789, %v1137, 0
  %v1225 = vsel %vm789, %v1138, 0
  %v1228 = vsel %vm789, %v1139, 0
  %v1231 = vsel %vm789, %v1140, 0
  %v1234 = vsel %vm789, %v1141, 0
  %v1237 = vsel %vm789, %v1142, 0
  %1239 = vmatprep.subr.mxu0 0.0
  %1240 = vmatpush1.msra.mxu0 %v30
  %1241 = vmatprep.subr.mxu0 0.0
  %1242 = vmatpush1.msra.mxu0 %v31
  %1243 = vmatprep.subr.mxu0 0.0
  %1244 = vmatpush1.msra.mxu0 %v32
  %1245 = vmatprep.subr.mxu0 0.0
  %1246 = vmatpush1.msra.mxu0 %v33
  %1247 = vmatprep.subr.mxu0 0.0
  %1248 = vmatpush1.msra.mxu0 %v34
  %1249 = vmatprep.subr.mxu0 0.0
  %1250 = vmatpush1.msra.mxu0 %v35
  %1251 = vmatprep.subr.mxu0 0.0
  %1252 = vmatpush1.msra.mxu0 %v36
  %1253 = vmatprep.subr.mxu0 0.0
  %1254 = vmatpush1.msra.mxu0 %v37
  %1255 = vmatprep.subr.mxu0 0.0
  %1256 = vmatpush1.msra.mxu0 0.0
  %1257 = vmatprep.subr.mxu0 0.0
  %1258 = vmatpush1.msra.mxu0 0.0
  %1259 = vmatprep.subr.mxu0 0.0
  %1260 = vmatpush1.msra.mxu0 0.0
  %1261 = vmatprep.subr.mxu0 0.0
  %1262 = vmatpush1.msra.mxu0 0.0
  %1263 = vmatprep.subr.mxu0 0.0
  %1264 = vmatpush1.msra.mxu0 0.0
  %1265 = vmatprep.subr.mxu0 0.0
  %1266 = vmatpush1.msra.mxu0 0.0
  %1267 = vmatprep.subr.mxu0 0.0
  %1268 = vmatpush1.msra.mxu0 0.0
  %1269 = vmatprep.subr.mxu0 0.0
  %1270 = vmatpush1.msra.mxu0 0.0
  %1271 = vmatprep.subr.mxu0 0.0
  %1272 = vmatpush1.msra.mxu0 0.0
  %1273 = vmatprep.subr.mxu0 0.0
  %1274 = vmatpush1.msra.mxu0 0.0
  %1275 = vmatprep.subr.mxu0 0.0
  %1276 = vmatpush1.msra.mxu0 0.0
  %1277 = vmatprep.subr.mxu0 0.0
  %1278 = vmatpush1.msra.mxu0 0.0
  %1279 = vmatprep.subr.mxu0 0.0
  %1280 = vmatpush1.msra.mxu0 0.0
  %1281 = vmatprep.subr.mxu0 0.0
  %1282 = vmatpush1.msra.mxu0 0.0
  %1283 = vmatprep.subr.mxu0 0.0
  %1284 = vmatpush1.msra.mxu0 0.0
  %1285 = vmatprep.subr.mxu0 0.0
  %1286 = vmatpush1.msra.mxu0 0.0
  %1287 = vmatprep.subr.mxu0 0.0
  %1288 = vmatpush1.msra.mxu0 0.0
  %1289 = vmatprep.subr.mxu0 0.0
  %1290 = vmatpush1.msra.mxu0 0.0
  %1291 = vmatprep.subr.mxu0 0.0
  %1292 = vmatpush1.msra.mxu0 0.0
  %1293 = vmatprep.subr.mxu0 0.0
  %1294 = vmatpush1.msra.mxu0 0.0
  %1295 = vmatprep.subr.mxu0 0.0
  %1296 = vmatpush1.msra.mxu0 0.0
  %1297 = vmatprep.subr.mxu0 0.0
  %1298 = vmatpush1.msra.mxu0 0.0
  %1299 = vmatprep.subr.mxu0 0.0
  %1300 = vmatpush1.msra.mxu0 0.0
  %1301 = vmatprep.subr.mxu0 0.0
  %1302 = vmatpush1.msra.mxu0 0.0
  %1303 = vmatprep.mubr.f32.mxu0 0.0
  %1304 = vmatmul.mubr.f32.gmra.mrb[0].mxu0 %v1144
  %v1305 = vpop.f32.mrb[0].mxu0
  %v1306 = vadd.f32 0.0, %v1305
  %v1307 = vpop.f32.mrb[0].mxu0
  %1308 = vmatprep.mubr.f32.mxu0 0.0
  %1309 = vmatmul.mubr.f32.gmra.mrb[0].mxu0 %v1147
  %v1310 = vpop.f32.mrb[0].mxu0
  %v1311 = vadd.f32 0.0, %v1310
  %v1312 = vpop.f32.mrb[0].mxu0
  %1313 = vmatprep.mubr.f32.mxu0 0.0
  %1314 = vmatmul.mubr.f32.gmra.mrb[0].mxu0 %v1150
  %v1315 = vpop.f32.mrb[0].mxu0
  %v1316 = vadd.f32 0.0, %v1315
  %v1317 = vpop.f32.mrb[0].mxu0
  %1318 = vmatprep.mubr.f32.mxu0 0.0
  %1319 = vmatmul.mubr.f32.gmra.mrb[0].mxu0 %v1153
  %v1320 = vpop.f32.mrb[0].mxu0
  %v1321 = vadd.f32 0.0, %v1320
  %v1322 = vpop.f32.mrb[0].mxu0
  %1323 = vmatprep.mubr.f32.mxu0 0.0
  %1324 = vmatmul.mubr.f32.gmra.mrb[0].mxu0 %v1156
  %v1325 = vpop.f32.mrb[0].mxu0
  %v1326 = vadd.f32 0.0, %v1325
  %v1327 = vpop.f32.mrb[0].mxu0
  %1328 = vmatprep.mubr.f32.mxu0 0.0
  %1329 = vmatmul.mubr.f32.gmra.mrb[0].mxu0 %v1159
  %v1330 = vpop.f32.mrb[0].mxu0
  %v1331 = vadd.f32 0.0, %v1330
  %v1332 = vpop.f32.mrb[0].mxu0
  %1333 = vmatprep.mubr.f32.mxu0 0.0
  %1334 = vmatmul.mubr.f32.gmra.mrb[0].mxu0 %v1162
  %v1335 = vpop.f32.mrb[0].mxu0
  %v1336 = vadd.f32 0.0, %v1335
  %v1337 = vpop.f32.mrb[0].mxu0
  %1338 = vmatprep.mubr.f32.mxu0 0.0
  %1339 = vmatmul.mubr.f32.gmra.mrb[0].mxu0 %v1165
  %v1340 = vpop.f32.mrb[0].mxu0
  %v1341 = vadd.f32 0.0, %v1340
  %v1342 = vpop.f32.mrb[0].mxu0
  %1343 = vmatprep.mubr.f32.mxu0 0.0
  %1344 = vmatmul.mubr.f32.gmra.mrb[0].mxu0 %v1168
  %v1345 = vpop.f32.mrb[0].mxu0
  %v1346 = vadd.f32 0.0, %v1345
  %v1347 = vpop.f32.mrb[0].mxu0
  %1348 = vmatprep.mubr.f32.mxu0 0.0
  %1349 = vmatmul.mubr.f32.gmra.mrb[0].mxu0 %v1171
  %v1350 = vpop.f32.mrb[0].mxu0
  %v1351 = vadd.f32 0.0, %v1350
  %v1352 = vpop.f32.mrb[0].mxu0
  %1353 = vmatprep.mubr.f32.mxu0 0.0
  %1354 = vmatmul.mubr.f32.gmra.mrb[0].mxu0 %v1174
  %v1355 = vpop.f32.mrb[0].mxu0
  %v1356 = vadd.f32 0.0, %v1355
  %v1357 = vpop.f32.mrb[0].mxu0
  %1358 = vmatprep.mubr.f32.mxu0 0.0
  %1359 = vmatmul.mubr.f32.gmra.mrb[0].mxu0 %v1177
  %v1360 = vpop.f32.mrb[0].mxu0
  %v1361 = vadd.f32 0.0, %v1360
  %v1362 = vpop.f32.mrb[0].mxu0
  %1363 = vmatprep.mubr.f32.mxu0 0.0
  %1364 = vmatmul.mubr.f32.gmra.mrb[0].mxu0 %v1180
  %v1365 = vpop.f32.mrb[0].mxu0
  %v1366 = vadd.f32 0.0, %v1365
  %v1367 = vpop.f32.mrb[0].mxu0
  %1368 = vmatprep.mubr.f32.mxu0 0.0
  %1369 = vmatmul.mubr.f32.gmra.mrb[0].mxu0 %v1183
  %v1370 = vpop.f32.mrb[0].mxu0
  %v1371 = vadd.f32 0.0, %v1370
  %v1372 = vpop.f32.mrb[0].mxu0
  %1373 = vmatprep.mubr.f32.mxu0 0.0
  %1374 = vmatmul.mubr.f32.gmra.mrb[0].mxu0 %v1186
  %v1375 = vpop.f32.mrb[0].mxu0
  %v1376 = vadd.f32 0.0, %v1375
  %v1377 = vpop.f32.mrb[0].mxu0
  %1378 = vmatprep.mubr.f32.mxu0 0.0
  %1379 = vmatmul.mubr.f32.gmra.mrb[0].mxu0 %v1189
  %v1380 = vpop.f32.mrb[0].mxu0
  %v1381 = vadd.f32 0.0, %v1380
  %v1382 = vpop.f32.mrb[0].mxu0
  %1383 = vmatprep.mubr.f32.mxu0 0.0
  %1384 = vmatmul.mubr.f32.gmra.mrb[0].mxu0 %v1192
  %v1385 = vpop.f32.mrb[0].mxu0
  %v1386 = vadd.f32 0.0, %v1385
  %v1387 = vpop.f32.mrb[0].mxu0
  %1388 = vmatprep.mubr.f32.mxu0 0.0
  %1389 = vmatmul.mubr.f32.gmra.mrb[0].mxu0 %v1195
  %v1390 = vpop.f32.mrb[0].mxu0
  %v1391 = vadd.f32 0.0, %v1390
  %v1392 = vpop.f32.mrb[0].mxu0
  %1393 = vmatprep.mubr.f32.mxu0 0.0
  %1394 = vmatmul.mubr.f32.gmra.mrb[0].mxu0 %v1198
  %v1395 = vpop.f32.mrb[0].mxu0
  %v1396 = vadd.f32 0.0, %v1395
  %v1397 = vpop.f32.mrb[0].mxu0
  %1398 = vmatprep.mubr.f32.mxu0 0.0
  %1399 = vmatmul.mubr.f32.gmra.mrb[0].mxu0 %v1201
  %v1400 = vpop.f32.mrb[0].mxu0
  %v1401 = vadd.f32 0.0, %v1400
  %v1402 = vpop.f32.mrb[0].mxu0
  %1403 = vmatprep.mubr.f32.mxu0 0.0
  %1404 = vmatmul.mubr.f32.gmra.mrb[0].mxu0 %v1204
  %v1405 = vpop.f32.mrb[0].mxu0
  %v1406 = vadd.f32 0.0, %v1405
  %v1407 = vpop.f32.mrb[0].mxu0
  %1408 = vmatprep.mubr.f32.mxu0 0.0
  %1409 = vmatmul.mubr.f32.gmra.mrb[0].mxu0 %v1207
  %v1410 = vpop.f32.mrb[0].mxu0
  %v1411 = vadd.f32 0.0, %v1410
  %v1412 = vpop.f32.mrb[0].mxu0
  %1413 = vmatprep.mubr.f32.mxu0 0.0
  %1414 = vmatmul.mubr.f32.gmra.mrb[0].mxu0 %v1210
  %v1415 = vpop.f32.mrb[0].mxu0
  %v1416 = vadd.f32 0.0, %v1415
  %v1417 = vpop.f32.mrb[0].mxu0
  %1418 = vmatprep.mubr.f32.mxu0 0.0
  %1419 = vmatmul.mubr.f32.gmra.mrb[0].mxu0 %v1213
  %v1420 = vpop.f32.mrb[0].mxu0
  %v1421 = vadd.f32 0.0, %v1420
  %v1422 = vpop.f32.mrb[0].mxu0
  %1423 = vmatprep.mubr.f32.mxu0 0.0
  %1424 = vmatmul.mubr.f32.gmra.mrb[0].mxu0 %v1216
  %v1425 = vpop.f32.mrb[0].mxu0
  %v1426 = vadd.f32 0.0, %v1425
  %v1427 = vpop.f32.mrb[0].mxu0
  %1428 = vmatprep.mubr.f32.mxu0 0.0
  %1429 = vmatmul.mubr.f32.gmra.mrb[0].mxu0 %v1219
  %v1430 = vpop.f32.mrb[0].mxu0
  %v1431 = vadd.f32 0.0, %v1430
  %v1432 = vpop.f32.mrb[0].mxu0
  %1433 = vmatprep.mubr.f32.mxu0 0.0
  %1434 = vmatmul.mubr.f32.gmra.mrb[0].mxu0 %v1222
  %v1435 = vpop.f32.mrb[0].mxu0
  %v1436 = vadd.f32 0.0, %v1435
  %v1437 = vpop.f32.mrb[0].mxu0
  %1438 = vmatprep.mubr.f32.mxu0 0.0
  %1439 = vmatmul.mubr.f32.gmra.mrb[0].mxu0 %v1225
  %v1440 = vpop.f32.mrb[0].mxu0
  %v1441 = vadd.f32 0.0, %v1440
  %v1442 = vpop.f32.mrb[0].mxu0
  %1443 = vmatprep.mubr.f32.mxu0 0.0
  %1444 = vmatmul.mubr.f32.gmra.mrb[0].mxu0 %v1228
  %v1445 = vpop.f32.mrb[0].mxu0
  %v1446 = vadd.f32 0.0, %v1445
  %v1447 = vpop.f32.mrb[0].mxu0
  %1448 = vmatprep.mubr.f32.mxu0 0.0
  %1449 = vmatmul.mubr.f32.gmra.mrb[0].mxu0 %v1231
  %v1450 = vpop.f32.mrb[0].mxu0
  %v1451 = vadd.f32 0.0, %v1450
  %v1452 = vpop.f32.mrb[0].mxu0
  %1453 = vmatprep.mubr.f32.mxu0 0.0
  %1454 = vmatmul.mubr.f32.gmra.mrb[0].mxu0 %v1234
  %v1455 = vpop.f32.mrb[0].mxu0
  %v1456 = vadd.f32 0.0, %v1455
  %v1457 = vpop.f32.mrb[0].mxu0
  %1458 = vmatprep.mubr.f32.mxu0 0.0
  %1459 = vmatmul.mubr.f32.gmra.mrb[0].mxu0 %v1237
  %v1460 = vpop.f32.mrb[0].mxu0
  %v1461 = vadd.f32 0.0, %v1460
  %v1462 = vpop.f32.mrb[0].mxu0
  %1463 = vdwg.mxu0
  %v1464 = vmul.f32 %v953, %v953
  %v1465 = vmul.f32 %v958, %v958
  %v1466 = vmul.f32 %v963, %v963
  %v1467 = vmul.f32 %v968, %v968
  %v1468 = vmul.f32 %v973, %v973
  %v1469 = vmul.f32 %v978, %v978
  %v1470 = vmul.f32 %v983, %v983
  %v1471 = vmul.f32 %v988, %v988
  %v1472 = vmul.f32 %v993, %v993
  %v1473 = vmul.f32 %v998, %v998
  %v1474 = vmul.f32 %v1003, %v1003
  %v1475 = vmul.f32 %v1008, %v1008
  %v1476 = vmul.f32 %v1013, %v1013
  %v1477 = vmul.f32 %v1018, %v1018
  %v1478 = vmul.f32 %v1023, %v1023
  %v1479 = vmul.f32 %v1028, %v1028
  %v1480 = vmul.f32 %v1033, %v1033
  %v1481 = vmul.f32 %v1038, %v1038
  %v1482 = vmul.f32 %v1043, %v1043
  %v1483 = vmul.f32 %v1048, %v1048
  %v1484 = vmul.f32 %v1053, %v1053
  %v1485 = vmul.f32 %v1058, %v1058
  %v1486 = vmul.f32 %v1063, %v1063
  %v1487 = vmul.f32 %v1068, %v1068
  %v1488 = vmul.f32 %v1073, %v1073
  %v1489 = vmul.f32 %v1078, %v1078
  %v1490 = vmul.f32 %v1083, %v1083
  %v1491 = vmul.f32 %v1088, %v1088
  %v1492 = vmul.f32 %v1093, %v1093
  %v1493 = vmul.f32 %v1098, %v1098
  %v1494 = vmul.f32 %v1103, %v1103
  %v1495 = vmul.f32 %v1108, %v1108
  %v1496 = vsub.f32 %v1306, %v1464
  %v1497 = vsub.f32 %v1311, %v1465
  %v1498 = vsub.f32 %v1316, %v1466
  %v1499 = vsub.f32 %v1321, %v1467
  %v1500 = vsub.f32 %v1326, %v1468
  %v1501 = vsub.f32 %v1331, %v1469
  %v1502 = vsub.f32 %v1336, %v1470
  %v1503 = vsub.f32 %v1341, %v1471
  %v1504 = vsub.f32 %v1346, %v1472
  %v1505 = vsub.f32 %v1351, %v1473
  %v1506 = vsub.f32 %v1356, %v1474
  %v1507 = vsub.f32 %v1361, %v1475
  %v1508 = vsub.f32 %v1366, %v1476
  %v1509 = vsub.f32 %v1371, %v1477
  %v1510 = vsub.f32 %v1376, %v1478
  %v1511 = vsub.f32 %v1381, %v1479
  %v1512 = vsub.f32 %v1386, %v1480
  %v1513 = vsub.f32 %v1391, %v1481
  %v1514 = vsub.f32 %v1396, %v1482
  %v1515 = vsub.f32 %v1401, %v1483
  %v1516 = vsub.f32 %v1406, %v1484
  %v1517 = vsub.f32 %v1411, %v1485
  %v1518 = vsub.f32 %v1416, %v1486
  %v1519 = vsub.f32 %v1421, %v1487
  %v1520 = vsub.f32 %v1426, %v1488
  %v1521 = vsub.f32 %v1431, %v1489
  %v1522 = vsub.f32 %v1436, %v1490
  %v1523 = vsub.f32 %v1441, %v1491
  %v1524 = vsub.f32 %v1446, %v1492
  %v1525 = vsub.f32 %v1451, %v1493
  %v1526 = vsub.f32 %v1456, %v1494
  %v1527 = vsub.f32 %v1461, %v1495
  %v1528 = vmax.f32 %v1496, 0.0
  %v1529 = vmax.f32 %v1497, 0.0
  %v1530 = vmax.f32 %v1498, 0.0
  %v1531 = vmax.f32 %v1499, 0.0
  %v1532 = vmax.f32 %v1500, 0.0
  %v1533 = vmax.f32 %v1501, 0.0
  %v1534 = vmax.f32 %v1502, 0.0
  %v1535 = vmax.f32 %v1503, 0.0
  %v1536 = vmax.f32 %v1504, 0.0
  %v1537 = vmax.f32 %v1505, 0.0
  %v1538 = vmax.f32 %v1506, 0.0
  %v1539 = vmax.f32 %v1507, 0.0
  %v1540 = vmax.f32 %v1508, 0.0
  %v1541 = vmax.f32 %v1509, 0.0
  %v1542 = vmax.f32 %v1510, 0.0
  %v1543 = vmax.f32 %v1511, 0.0
  %v1544 = vmax.f32 %v1512, 0.0
  %v1545 = vmax.f32 %v1513, 0.0
  %v1546 = vmax.f32 %v1514, 0.0
  %v1547 = vmax.f32 %v1515, 0.0
  %v1548 = vmax.f32 %v1516, 0.0
  %v1549 = vmax.f32 %v1517, 0.0
  %v1550 = vmax.f32 %v1518, 0.0
  %v1551 = vmax.f32 %v1519, 0.0
  %v1552 = vmax.f32 %v1520, 0.0
  %v1553 = vmax.f32 %v1521, 0.0
  %v1554 = vmax.f32 %v1522, 0.0
  %v1555 = vmax.f32 %v1523, 0.0
  %v1556 = vmax.f32 %v1524, 0.0
  %v1557 = vmax.f32 %v1525, 0.0
  %v1558 = vmax.f32 %v1526, 0.0
  %v1559 = vmax.f32 %v1527, 0.0
  %v1560 = vsub.f32 %v755, %v953
  %v1561 = vsub.f32 %v756, %v958
  %v1562 = vsub.f32 %v757, %v963
  %v1563 = vsub.f32 %v758, %v968
  %v1564 = vsub.f32 %v759, %v973
  %v1565 = vsub.f32 %v760, %v978
  %v1566 = vsub.f32 %v761, %v983
  %v1567 = vsub.f32 %v762, %v988
  %v1568 = vsub.f32 %v763, %v993
  %v1569 = vsub.f32 %v764, %v998
  %v1570 = vsub.f32 %v765, %v1003
  %v1571 = vsub.f32 %v766, %v1008
  %v1572 = vsub.f32 %v767, %v1013
  %v1573 = vsub.f32 %v768, %v1018
  %v1574 = vsub.f32 %v769, %v1023
  %v1575 = vsub.f32 %v770, %v1028
  %v1576 = vsub.f32 %v771, %v1033
  %v1577 = vsub.f32 %v772, %v1038
  %v1578 = vsub.f32 %v773, %v1043
  %v1579 = vsub.f32 %v774, %v1048
  %v1580 = vsub.f32 %v775, %v1053
  %v1581 = vsub.f32 %v776, %v1058
  %v1582 = vsub.f32 %v777, %v1063
  %v1583 = vsub.f32 %v778, %v1068
  %v1584 = vsub.f32 %v779, %v1073
  %v1585 = vsub.f32 %v780, %v1078
  %v1586 = vsub.f32 %v781, %v1083
  %v1587 = vsub.f32 %v782, %v1088
  %v1588 = vsub.f32 %v783, %v1093
  %v1589 = vsub.f32 %v784, %v1098
  %v1590 = vsub.f32 %v785, %v1103
  %v1591 = vsub.f32 %v786, %v1108
  %v1592 = vadd.f32 %v1528, 1e-05
  %v1593 = vadd.f32 %v1529, 1e-05
  %v1594 = vadd.f32 %v1530, 1e-05
  %v1595 = vadd.f32 %v1531, 1e-05
  %v1596 = vadd.f32 %v1532, 1e-05
  %v1597 = vadd.f32 %v1533, 1e-05
  %v1598 = vadd.f32 %v1534, 1e-05
  %v1599 = vadd.f32 %v1535, 1e-05
  %v1600 = vadd.f32 %v1536, 1e-05
  %v1601 = vadd.f32 %v1537, 1e-05
  %v1602 = vadd.f32 %v1538, 1e-05
  %v1603 = vadd.f32 %v1539, 1e-05
  %v1604 = vadd.f32 %v1540, 1e-05
  %v1605 = vadd.f32 %v1541, 1e-05
  %v1606 = vadd.f32 %v1542, 1e-05
  %v1607 = vadd.f32 %v1543, 1e-05
  %v1608 = vadd.f32 %v1544, 1e-05
  %v1609 = vadd.f32 %v1545, 1e-05
  %v1610 = vadd.f32 %v1546, 1e-05
  %v1611 = vadd.f32 %v1547, 1e-05
  %v1612 = vadd.f32 %v1548, 1e-05
  %v1613 = vadd.f32 %v1549, 1e-05
  %v1614 = vadd.f32 %v1550, 1e-05
  %v1615 = vadd.f32 %v1551, 1e-05
  %v1616 = vadd.f32 %v1552, 1e-05
  %v1617 = vadd.f32 %v1553, 1e-05
  %v1618 = vadd.f32 %v1554, 1e-05
  %v1619 = vadd.f32 %v1555, 1e-05
  %v1620 = vadd.f32 %v1556, 1e-05
  %v1621 = vadd.f32 %v1557, 1e-05
  %v1622 = vadd.f32 %v1558, 1e-05
  %v1623 = vadd.f32 %v1559, 1e-05
  %v1624 = vrsqrt.pop %v1592
  %v1625 = vrsqrt.pop %v1593
  %v1626 = vrsqrt.pop %v1594
  %v1627 = vrsqrt.pop %v1595
  %v1628 = vrsqrt.pop %v1596
  %v1629 = vrsqrt.pop %v1597
  %v1630 = vrsqrt.pop %v1598
  %v1631 = vrsqrt.pop %v1599
  %v1632 = vrsqrt.pop %v1600
  %v1633 = vrsqrt.pop %v1601
  %v1634 = vrsqrt.pop %v1602
  %v1635 = vrsqrt.pop %v1603
  %v1636 = vrsqrt.pop %v1604
  %v1637 = vrsqrt.pop %v1605
  %v1638 = vrsqrt.pop %v1606
  %v1639 = vrsqrt.pop %v1607
  %v1640 = vrsqrt.pop %v1608
  %v1641 = vrsqrt.pop %v1609
  %v1642 = vrsqrt.pop %v1610
  %v1643 = vrsqrt.pop %v1611
  %v1644 = vrsqrt.pop %v1612
  %v1645 = vrsqrt.pop %v1613
  %v1646 = vrsqrt.pop %v1614
  %v1647 = vrsqrt.pop %v1615
  %v1648 = vrsqrt.pop %v1616
  %v1649 = vrsqrt.pop %v1617
  %v1650 = vrsqrt.pop %v1618
  %v1651 = vrsqrt.pop %v1619
  %v1652 = vrsqrt.pop %v1620
  %v1653 = vrsqrt.pop %v1621
  %v1654 = vrsqrt.pop %v1622
  %v1655 = vrsqrt.pop %v1623
  %v1656 = vmul.f32 %v1560, %v1624
  %v1657 = vmul.f32 %v1561, %v1625
  %v1658 = vmul.f32 %v1562, %v1626
  %v1659 = vmul.f32 %v1563, %v1627
  %v1660 = vmul.f32 %v1564, %v1628
  %v1661 = vmul.f32 %v1565, %v1629
  %v1662 = vmul.f32 %v1566, %v1630
  %v1663 = vmul.f32 %v1567, %v1631
  %v1664 = vmul.f32 %v1568, %v1632
  %v1665 = vmul.f32 %v1569, %v1633
  %v1666 = vmul.f32 %v1570, %v1634
  %v1667 = vmul.f32 %v1571, %v1635
  %v1668 = vmul.f32 %v1572, %v1636
  %v1669 = vmul.f32 %v1573, %v1637
  %v1670 = vmul.f32 %v1574, %v1638
  %v1671 = vmul.f32 %v1575, %v1639
  %v1672 = vmul.f32 %v1576, %v1640
  %v1673 = vmul.f32 %v1577, %v1641
  %v1674 = vmul.f32 %v1578, %v1642
  %v1675 = vmul.f32 %v1579, %v1643
  %v1676 = vmul.f32 %v1580, %v1644
  %v1677 = vmul.f32 %v1581, %v1645
  %v1678 = vmul.f32 %v1582, %v1646
  %v1679 = vmul.f32 %v1583, %v1647
  %v1680 = vmul.f32 %v1584, %v1648
  %v1681 = vmul.f32 %v1585, %v1649
  %v1682 = vmul.f32 %v1586, %v1650
  %v1683 = vmul.f32 %v1587, %v1651
  %v1684 = vmul.f32 %v1588, %v1652
  %v1685 = vmul.f32 %v1589, %v1653
  %v1686 = vmul.f32 %v1590, %v1654
  %v1687 = vmul.f32 %v1591, %v1655
  %v1688 = vlaneseq
  %v1689 = vshrl.u32 %v1688, 7
  %v1690 = vsub.s32 0, %v1689
  %v1691 = vrot.slane %v787, %v1690
  %v1692 = vmul.f32 %v1656, %v1691
  %v1693 = vmul.f32 %v1657, %v1691
  %v1694 = vmul.f32 %v1658, %v1691
  %v1695 = vmul.f32 %v1659, %v1691
  %v1696 = vmul.f32 %v1660, %v1691
  %v1697 = vmul.f32 %v1661, %v1691
  %v1698 = vmul.f32 %v1662, %v1691
  %v1699 = vmul.f32 %v1663, %v1691
  %v1700 = vmul.f32 %v1664, %v1691
  %v1701 = vmul.f32 %v1665, %v1691
  %v1702 = vmul.f32 %v1666, %v1691
  %v1703 = vmul.f32 %v1667, %v1691
  %v1704 = vmul.f32 %v1668, %v1691
  %v1705 = vmul.f32 %v1669, %v1691
  %v1706 = vmul.f32 %v1670, %v1691
  %v1707 = vmul.f32 %v1671, %v1691
  %v1708 = vmul.f32 %v1672, %v1691
  %v1709 = vmul.f32 %v1673, %v1691
  %v1710 = vmul.f32 %v1674, %v1691
  %v1711 = vmul.f32 %v1675, %v1691
  %v1712 = vmul.f32 %v1676, %v1691
  %v1713 = vmul.f32 %v1677, %v1691
  %v1714 = vmul.f32 %v1678, %v1691
  %v1715 = vmul.f32 %v1679, %v1691
  %v1716 = vmul.f32 %v1680, %v1691
  %v1717 = vmul.f32 %v1681, %v1691
  %v1718 = vmul.f32 %v1682, %v1691
  %v1719 = vmul.f32 %v1683, %v1691
  %v1720 = vmul.f32 %v1684, %v1691
  %v1721 = vmul.f32 %v1685, %v1691
  %v1722 = vmul.f32 %v1686, %v1691
  %v1723 = vmul.f32 %v1687, %v1691
  %v1724 = vlaneseq
  %v1725 = vshrl.u32 %v1724, 7
  %v1726 = vsub.s32 0, %v1725
  %v1727 = vrot.slane %v788, %v1726
  %v1728 = vadd.f32 %v1692, %v1727
  %v1729 = vadd.f32 %v1693, %v1727
  %v1730 = vadd.f32 %v1694, %v1727
  %v1731 = vadd.f32 %v1695, %v1727
  %v1732 = vadd.f32 %v1696, %v1727
  %v1733 = vadd.f32 %v1697, %v1727
  %v1734 = vadd.f32 %v1698, %v1727
  %v1735 = vadd.f32 %v1699, %v1727
  %v1736 = vadd.f32 %v1700, %v1727
  %v1737 = vadd.f32 %v1701, %v1727
  %v1738 = vadd.f32 %v1702, %v1727
  %v1739 = vadd.f32 %v1703, %v1727
  %v1740 = vadd.f32 %v1704, %v1727
  %v1741 = vadd.f32 %v1705, %v1727
  %v1742 = vadd.f32 %v1706, %v1727
  %v1743 = vadd.f32 %v1707, %v1727
  %v1744 = vadd.f32 %v1708, %v1727
  %v1745 = vadd.f32 %v1709, %v1727
  %v1746 = vadd.f32 %v1710, %v1727
  %v1747 = vadd.f32 %v1711, %v1727
  %v1748 = vadd.f32 %v1712, %v1727
  %v1749 = vadd.f32 %v1713, %v1727
  %v1750 = vadd.f32 %v1714, %v1727
  %v1751 = vadd.f32 %v1715, %v1727
  %v1752 = vadd.f32 %v1716, %v1727
  %v1753 = vadd.f32 %v1717, %v1727
  %v1754 = vadd.f32 %v1718, %v1727
  %v1755 = vadd.f32 %v1719, %v1727
  %v1756 = vadd.f32 %v1720, %v1727
  %v1757 = vadd.f32 %v1721, %v1727
  %v1758 = vadd.f32 %v1722, %v1727
  %v1759 = vadd.f32 %v1723, %v1727
  %v1760 = vtanh.pop %v1728
  %v1761 = vtanh.pop %v1729
  %v1762 = vtanh.pop %v1730
  %v1763 = vtanh.pop %v1731
  %v1764 = vtanh.pop %v1732
  %v1765 = vtanh.pop %v1733
  %v1766 = vtanh.pop %v1734
  %v1767 = vtanh.pop %v1735
  %v1768 = vtanh.pop %v1736
  %v1769 = vtanh.pop %v1737
  %v1770 = vtanh.pop %v1738
  %v1771 = vtanh.pop %v1739
  %v1772 = vtanh.pop %v1740
  %v1773 = vtanh.pop %v1741
  %v1774 = vtanh.pop %v1742
  %v1775 = vtanh.pop %v1743
  %v1776 = vtanh.pop %v1744
  %v1777 = vtanh.pop %v1745
  %v1778 = vtanh.pop %v1746
  %v1779 = vtanh.pop %v1747
  %v1780 = vtanh.pop %v1748
  %v1781 = vtanh.pop %v1749
  %v1782 = vtanh.pop %v1750
  %v1783 = vtanh.pop %v1751
  %v1784 = vtanh.pop %v1752
  %v1785 = vtanh.pop %v1753
  %v1786 = vtanh.pop %v1754
  %v1787 = vtanh.pop %v1755
  %v1788 = vtanh.pop %v1756
  %v1789 = vtanh.pop %v1757
  %v1790 = vtanh.pop %v1758
  %v1791 = vtanh.pop %v1759
  %v1792 = vld [vmem:[%s4] sm:$0xff]
  %v1793 = vld [vmem:[%s4 + $0x8] sm:$0xff]
  %v1794 = vld [vmem:[%s4 + $0x10] sm:$0xff]
  %v1795 = vld [vmem:[%s4 + $0x18] sm:$0xff]
  %v1796 = vld [vmem:[%s4 + $0x20] sm:$0xff]
  %v1797 = vld [vmem:[%s4 + $0x28] sm:$0xff]
  %v1798 = vld [vmem:[%s4 + $0x30] sm:$0xff]
  %v1799 = vld [vmem:[%s4 + $0x38] sm:$0xff]
  %v1800 = vld [vmem:[%s5 + $0x3] sm:$0x1]
  %v1801 = vlaneseq
  %v1802 = vshrl.u32 %v1801, 7
  %v1803 = vsub.s32 0, %v1802
  %v1804 = vrot.slane %v1800, %v1803
  %v1806 = vsel %vm789, %v1760, 0
  %v1809 = vsel %vm789, %v1761, 0
  %v1812 = vsel %vm789, %v1762, 0
  %v1815 = vsel %vm789, %v1763, 0
  %v1818 = vsel %vm789, %v1764, 0
  %v1821 = vsel %vm789, %v1765, 0
  %v1824 = vsel %vm789, %v1766, 0
  %v1827 = vsel %vm789, %v1767, 0
  %v1830 = vsel %vm789, %v1768, 0
  %v1833 = vsel %vm789, %v1769, 0
  %v1836 = vsel %vm789, %v1770, 0
  %v1839 = vsel %vm789, %v1771, 0
  %v1842 = vsel %vm789, %v1772, 0
  %v1845 = vsel %vm789, %v1773, 0
  %v1848 = vsel %vm789, %v1774, 0
  %v1851 = vsel %vm789, %v1775, 0
  %v1854 = vsel %vm789, %v1776, 0
  %v1857 = vsel %vm789, %v1777, 0
  %v1860 = vsel %vm789, %v1778, 0
  %v1863 = vsel %vm789, %v1779, 0
  %v1866 = vsel %vm789, %v1780, 0
  %v1869 = vsel %vm789, %v1781, 0
  %v1872 = vsel %vm789, %v1782, 0
  %v1875 = vsel %vm789, %v1783, 0
  %v1878 = vsel %vm789, %v1784, 0
  %v1881 = vsel %vm789, %v1785, 0
  %v1884 = vsel %vm789, %v1786, 0
  %v1887 = vsel %vm789, %v1787, 0
  %v1890 = vsel %vm789, %v1788, 0
  %v1893 = vsel %vm789, %v1789, 0
  %v1896 = vsel %vm789, %v1790, 0
  %v1899 = vsel %vm789, %v1791, 0
  %1901 = vmatprep.subr.mxu0 0.0
  %1902 = vmatpush1.msra.mxu0 %v1792
  %1903 = vmatprep.subr.mxu0 0.0
  %1904 = vmatpush1.msra.mxu0 %v1793
  %1905 = vmatprep.subr.mxu0 0.0
  %1906 = vmatpush1.msra.mxu0 %v1794
  %1907 = vmatprep.subr.mxu0 0.0
  %1908 = vmatpush1.msra.mxu0 %v1795
  %1909 = vmatprep.subr.mxu0 0.0
  %1910 = vmatpush1.msra.mxu0 %v1796
  %1911 = vmatprep.subr.mxu0 0.0
  %1912 = vmatpush1.msra.mxu0 %v1797
  %1913 = vmatprep.subr.mxu0 0.0
  %1914 = vmatpush1.msra.mxu0 %v1798
  %1915 = vmatprep.subr.mxu0 0.0
  %1916 = vmatpush1.msra.mxu0 %v1799
  %1917 = vmatprep.subr.mxu0 0.0
  %1918 = vmatpush1.msra.mxu0 0.0
  %1919 = vmatprep.subr.mxu0 0.0
  %1920 = vmatpush1.msra.mxu0 0.0
  %1921 = vmatprep.subr.mxu0 0.0
  %1922 = vmatpush1.msra.mxu0 0.0
  %1923 = vmatprep.subr.mxu0 0.0
  %1924 = vmatpush1.msra.mxu0 0.0
  %1925 = vmatprep.subr.mxu0 0.0
  %1926 = vmatpush1.msra.mxu0 0.0
  %1927 = vmatprep.subr.mxu0 0.0
  %1928 = vmatpush1.msra.mxu0 0.0
  %1929 = vmatprep.subr.mxu0 0.0
  %1930 = vmatpush1.msra.mxu0 0.0
  %1931 = vmatprep.subr.mxu0 0.0
  %1932 = vmatpush1.msra.mxu0 0.0
  %1933 = vmatprep.subr.mxu0 0.0
  %1934 = vmatpush1.msra.mxu0 0.0
  %1935 = vmatprep.subr.mxu0 0.0
  %1936 = vmatpush1.msra.mxu0 0.0
  %1937 = vmatprep.subr.mxu0 0.0
  %1938 = vmatpush1.msra.mxu0 0.0
  %1939 = vmatprep.subr.mxu0 0.0
  %1940 = vmatpush1.msra.mxu0 0.0
  %1941 = vmatprep.subr.mxu0 0.0
  %1942 = vmatpush1.msra.mxu0 0.0
  %1943 = vmatprep.subr.mxu0 0.0
  %1944 = vmatpush1.msra.mxu0 0.0
  %1945 = vmatprep.subr.mxu0 0.0
  %1946 = vmatpush1.msra.mxu0 0.0
  %1947 = vmatprep.subr.mxu0 0.0
  %1948 = vmatpush1.msra.mxu0 0.0
  %1949 = vmatprep.subr.mxu0 0.0
  %1950 = vmatpush1.msra.mxu0 0.0
  %1951 = vmatprep.subr.mxu0 0.0
  %1952 = vmatpush1.msra.mxu0 0.0
  %1953 = vmatprep.subr.mxu0 0.0
  %1954 = vmatpush1.msra.mxu0 0.0
  %1955 = vmatprep.subr.mxu0 0.0
  %1956 = vmatpush1.msra.mxu0 0.0
  %1957 = vmatprep.subr.mxu0 0.0
  %1958 = vmatpush1.msra.mxu0 0.0
  %1959 = vmatprep.subr.mxu0 0.0
  %1960 = vmatpush1.msra.mxu0 0.0
  %1961 = vmatprep.subr.mxu0 0.0
  %1962 = vmatpush1.msra.mxu0 0.0
  %1963 = vmatprep.subr.mxu0 0.0
  %1964 = vmatpush1.msra.mxu0 0.0
  %1965 = vmatprep.mubr.f32.mxu0 0.0
  %1966 = vmatmul.mubr.f32.gmra.mrb[0].mxu0 %v1806
  %v1967 = vpop.f32.mrb[0].mxu0
  %v1968 = vadd.f32 %v1804, %v1967
  %v1969 = vpop.f32.mrb[0].mxu0
  %1970 = vmatprep.mubr.f32.mxu0 0.0
  %1971 = vmatmul.mubr.f32.gmra.mrb[0].mxu0 %v1809
  %v1972 = vpop.f32.mrb[0].mxu0
  %v1973 = vadd.f32 %v1804, %v1972
  %v1974 = vpop.f32.mrb[0].mxu0
  %1975 = vmatprep.mubr.f32.mxu0 0.0
  %1976 = vmatmul.mubr.f32.gmra.mrb[0].mxu0 %v1812
  %v1977 = vpop.f32.mrb[0].mxu0
  %v1978 = vadd.f32 %v1804, %v1977
  %v1979 = vpop.f32.mrb[0].mxu0
  %1980 = vmatprep.mubr.f32.mxu0 0.0
  %1981 = vmatmul.mubr.f32.gmra.mrb[0].mxu0 %v1815
  %v1982 = vpop.f32.mrb[0].mxu0
  %v1983 = vadd.f32 %v1804, %v1982
  %v1984 = vpop.f32.mrb[0].mxu0
  %1985 = vmatprep.mubr.f32.mxu0 0.0
  %1986 = vmatmul.mubr.f32.gmra.mrb[0].mxu0 %v1818
  %v1987 = vpop.f32.mrb[0].mxu0
  %v1988 = vadd.f32 %v1804, %v1987
  %v1989 = vpop.f32.mrb[0].mxu0
  %1990 = vmatprep.mubr.f32.mxu0 0.0
  %1991 = vmatmul.mubr.f32.gmra.mrb[0].mxu0 %v1821
  %v1992 = vpop.f32.mrb[0].mxu0
  %v1993 = vadd.f32 %v1804, %v1992
  %v1994 = vpop.f32.mrb[0].mxu0
  %1995 = vmatprep.mubr.f32.mxu0 0.0
  %1996 = vmatmul.mubr.f32.gmra.mrb[0].mxu0 %v1824
  %v1997 = vpop.f32.mrb[0].mxu0
  %v1998 = vadd.f32 %v1804, %v1997
  %v1999 = vpop.f32.mrb[0].mxu0
  %2000 = vmatprep.mubr.f32.mxu0 0.0
  %2001 = vmatmul.mubr.f32.gmra.mrb[0].mxu0 %v1827
  %v2002 = vpop.f32.mrb[0].mxu0
  %v2003 = vadd.f32 %v1804, %v2002
  %v2004 = vpop.f32.mrb[0].mxu0
  %2005 = vmatprep.mubr.f32.mxu0 0.0
  %2006 = vmatmul.mubr.f32.gmra.mrb[0].mxu0 %v1830
  %v2007 = vpop.f32.mrb[0].mxu0
  %v2008 = vadd.f32 %v1804, %v2007
  %v2009 = vpop.f32.mrb[0].mxu0
  %2010 = vmatprep.mubr.f32.mxu0 0.0
  %2011 = vmatmul.mubr.f32.gmra.mrb[0].mxu0 %v1833
  %v2012 = vpop.f32.mrb[0].mxu0
  %v2013 = vadd.f32 %v1804, %v2012
  %v2014 = vpop.f32.mrb[0].mxu0
  %2015 = vmatprep.mubr.f32.mxu0 0.0
  %2016 = vmatmul.mubr.f32.gmra.mrb[0].mxu0 %v1836
  %v2017 = vpop.f32.mrb[0].mxu0
  %v2018 = vadd.f32 %v1804, %v2017
  %v2019 = vpop.f32.mrb[0].mxu0
  %2020 = vmatprep.mubr.f32.mxu0 0.0
  %2021 = vmatmul.mubr.f32.gmra.mrb[0].mxu0 %v1839
  %v2022 = vpop.f32.mrb[0].mxu0
  %v2023 = vadd.f32 %v1804, %v2022
  %v2024 = vpop.f32.mrb[0].mxu0
  %2025 = vmatprep.mubr.f32.mxu0 0.0
  %2026 = vmatmul.mubr.f32.gmra.mrb[0].mxu0 %v1842
  %v2027 = vpop.f32.mrb[0].mxu0
  %v2028 = vadd.f32 %v1804, %v2027
  %v2029 = vpop.f32.mrb[0].mxu0
  %2030 = vmatprep.mubr.f32.mxu0 0.0
  %2031 = vmatmul.mubr.f32.gmra.mrb[0].mxu0 %v1845
  %v2032 = vpop.f32.mrb[0].mxu0
  %v2033 = vadd.f32 %v1804, %v2032
  %v2034 = vpop.f32.mrb[0].mxu0
  %2035 = vmatprep.mubr.f32.mxu0 0.0
  %2036 = vmatmul.mubr.f32.gmra.mrb[0].mxu0 %v1848
  %v2037 = vpop.f32.mrb[0].mxu0
  %v2038 = vadd.f32 %v1804, %v2037
  %v2039 = vpop.f32.mrb[0].mxu0
  %2040 = vmatprep.mubr.f32.mxu0 0.0
  %2041 = vmatmul.mubr.f32.gmra.mrb[0].mxu0 %v1851
  %v2042 = vpop.f32.mrb[0].mxu0
  %v2043 = vadd.f32 %v1804, %v2042
  %v2044 = vpop.f32.mrb[0].mxu0
  %2045 = vmatprep.mubr.f32.mxu0 0.0
  %2046 = vmatmul.mubr.f32.gmra.mrb[0].mxu0 %v1854
  %v2047 = vpop.f32.mrb[0].mxu0
  %v2048 = vadd.f32 %v1804, %v2047
  %v2049 = vpop.f32.mrb[0].mxu0
  %2050 = vmatprep.mubr.f32.mxu0 0.0
  %2051 = vmatmul.mubr.f32.gmra.mrb[0].mxu0 %v1857
  %v2052 = vpop.f32.mrb[0].mxu0
  %v2053 = vadd.f32 %v1804, %v2052
  %v2054 = vpop.f32.mrb[0].mxu0
  %2055 = vmatprep.mubr.f32.mxu0 0.0
  %2056 = vmatmul.mubr.f32.gmra.mrb[0].mxu0 %v1860
  %v2057 = vpop.f32.mrb[0].mxu0
  %v2058 = vadd.f32 %v1804, %v2057
  %v2059 = vpop.f32.mrb[0].mxu0
  %2060 = vmatprep.mubr.f32.mxu0 0.0
  %2061 = vmatmul.mubr.f32.gmra.mrb[0].mxu0 %v1863
  %v2062 = vpop.f32.mrb[0].mxu0
  %v2063 = vadd.f32 %v1804, %v2062
  %v2064 = vpop.f32.mrb[0].mxu0
  %2065 = vmatprep.mubr.f32.mxu0 0.0
  %2066 = vmatmul.mubr.f32.gmra.mrb[0].mxu0 %v1866
  %v2067 = vpop.f32.mrb[0].mxu0
  %v2068 = vadd.f32 %v1804, %v2067
  %v2069 = vpop.f32.mrb[0].mxu0
  %2070 = vmatprep.mubr.f32.mxu0 0.0
  %2071 = vmatmul.mubr.f32.gmra.mrb[0].mxu0 %v1869
  %v2072 = vpop.f32.mrb[0].mxu0
  %v2073 = vadd.f32 %v1804, %v2072
  %v2074 = vpop.f32.mrb[0].mxu0
  %2075 = vmatprep.mubr.f32.mxu0 0.0
  %2076 = vmatmul.mubr.f32.gmra.mrb[0].mxu0 %v1872
  %v2077 = vpop.f32.mrb[0].mxu0
  %v2078 = vadd.f32 %v1804, %v2077
  %v2079 = vpop.f32.mrb[0].mxu0
  %2080 = vmatprep.mubr.f32.mxu0 0.0
  %2081 = vmatmul.mubr.f32.gmra.mrb[0].mxu0 %v1875
  %v2082 = vpop.f32.mrb[0].mxu0
  %v2083 = vadd.f32 %v1804, %v2082
  %v2084 = vpop.f32.mrb[0].mxu0
  %2085 = vmatprep.mubr.f32.mxu0 0.0
  %2086 = vmatmul.mubr.f32.gmra.mrb[0].mxu0 %v1878
  %v2087 = vpop.f32.mrb[0].mxu0
  %v2088 = vadd.f32 %v1804, %v2087
  %v2089 = vpop.f32.mrb[0].mxu0
  %2090 = vmatprep.mubr.f32.mxu0 0.0
  %2091 = vmatmul.mubr.f32.gmra.mrb[0].mxu0 %v1881
  %v2092 = vpop.f32.mrb[0].mxu0
  %v2093 = vadd.f32 %v1804, %v2092
  %v2094 = vpop.f32.mrb[0].mxu0
  %2095 = vmatprep.mubr.f32.mxu0 0.0
  %2096 = vmatmul.mubr.f32.gmra.mrb[0].mxu0 %v1884
  %v2097 = vpop.f32.mrb[0].mxu0
  %v2098 = vadd.f32 %v1804, %v2097
  %v2099 = vpop.f32.mrb[0].mxu0
  %2100 = vmatprep.mubr.f32.mxu0 0.0
  %2101 = vmatmul.mubr.f32.gmra.mrb[0].mxu0 %v1887
  %v2102 = vpop.f32.mrb[0].mxu0
  %v2103 = vadd.f32 %v1804, %v2102
  %v2104 = vpop.f32.mrb[0].mxu0
  %2105 = vmatprep.mubr.f32.mxu0 0.0
  %2106 = vmatmul.mubr.f32.gmra.mrb[0].mxu0 %v1890
  %v2107 = vpop.f32.mrb[0].mxu0
  %v2108 = vadd.f32 %v1804, %v2107
  %v2109 = vpop.f32.mrb[0].mxu0
  %2110 = vmatprep.mubr.f32.mxu0 0.0
  %2111 = vmatmul.mubr.f32.gmra.mrb[0].mxu0 %v1893
  %v2112 = vpop.f32.mrb[0].mxu0
  %v2113 = vadd.f32 %v1804, %v2112
  %v2114 = vpop.f32.mrb[0].mxu0
  %2115 = vmatprep.mubr.f32.mxu0 0.0
  %2116 = vmatmul.mubr.f32.gmra.mrb[0].mxu0 %v1896
  %v2117 = vpop.f32.mrb[0].mxu0
  %v2118 = vadd.f32 %v1804, %v2117
  %v2119 = vpop.f32.mrb[0].mxu0
  %2120 = vmatprep.mubr.f32.mxu0 0.0
  %2121 = vmatmul.mubr.f32.gmra.mrb[0].mxu0 %v1899
  %v2122 = vpop.f32.mrb[0].mxu0
  %v2123 = vadd.f32 %v1804, %v2122
  %v2124 = vpop.f32.mrb[0].mxu0
  %2125 = vdwg.mxu0
  %v2126 = vld [vmem:[%s5 + $0x4] sm:$0x1]
  %v2127 = vld [vmem:[%s5 + $0x5] sm:$0x1]
  %v2129 = vsel %vm789, %v1968, 0
  %v2132 = vsel %vm789, %v1973, 0
  %v2135 = vsel %vm789, %v1978, 0
  %v2138 = vsel %vm789, %v1983, 0
  %v2141 = vsel %vm789, %v1988, 0
  %v2144 = vsel %vm789, %v1993, 0
  %v2147 = vsel %vm789, %v1998, 0
  %v2150 = vsel %vm789, %v2003, 0
  %v2153 = vsel %vm789, %v2008, 0
  %v2156 = vsel %vm789, %v2013, 0
  %v2159 = vsel %vm789, %v2018, 0
  %v2162 = vsel %vm789, %v2023, 0
  %v2165 = vsel %vm789, %v2028, 0
  %v2168 = vsel %vm789, %v2033, 0
  %v2171 = vsel %vm789, %v2038, 0
  %v2174 = vsel %vm789, %v2043, 0
  %v2177 = vsel %vm789, %v2048, 0
  %v2180 = vsel %vm789, %v2053, 0
  %v2183 = vsel %vm789, %v2058, 0
  %v2186 = vsel %vm789, %v2063, 0
  %v2189 = vsel %vm789, %v2068, 0
  %v2192 = vsel %vm789, %v2073, 0
  %v2195 = vsel %vm789, %v2078, 0
  %v2198 = vsel %vm789, %v2083, 0
  %v2201 = vsel %vm789, %v2088, 0
  %v2204 = vsel %vm789, %v2093, 0
  %v2207 = vsel %vm789, %v2098, 0
  %v2210 = vsel %vm789, %v2103, 0
  %v2213 = vsel %vm789, %v2108, 0
  %v2216 = vsel %vm789, %v2113, 0
  %v2219 = vsel %vm789, %v2118, 0
  %v2222 = vsel %vm789, %v2123, 0
  %2224 = vmatprep.subr.mxu0 0.0
  %2225 = vmatpush1.msra.mxu0 %v30
  %2226 = vmatprep.subr.mxu0 0.0
  %2227 = vmatpush1.msra.mxu0 %v31
  %2228 = vmatprep.subr.mxu0 0.0
  %2229 = vmatpush1.msra.mxu0 %v32
  %2230 = vmatprep.subr.mxu0 0.0
  %2231 = vmatpush1.msra.mxu0 %v33
  %2232 = vmatprep.subr.mxu0 0.0
  %2233 = vmatpush1.msra.mxu0 %v34
  %2234 = vmatprep.subr.mxu0 0.0
  %2235 = vmatpush1.msra.mxu0 %v35
  %2236 = vmatprep.subr.mxu0 0.0
  %2237 = vmatpush1.msra.mxu0 %v36
  %2238 = vmatprep.subr.mxu0 0.0
  %2239 = vmatpush1.msra.mxu0 %v37
  %2240 = vmatprep.subr.mxu0 0.0
  %2241 = vmatpush1.msra.mxu0 0.0
  %2242 = vmatprep.subr.mxu0 0.0
  %2243 = vmatpush1.msra.mxu0 0.0
  %2244 = vmatprep.subr.mxu0 0.0
  %2245 = vmatpush1.msra.mxu0 0.0
  %2246 = vmatprep.subr.mxu0 0.0
  %2247 = vmatpush1.msra.mxu0 0.0
  %2248 = vmatprep.subr.mxu0 0.0
  %2249 = vmatpush1.msra.mxu0 0.0
  %2250 = vmatprep.subr.mxu0 0.0
  %2251 = vmatpush1.msra.mxu0 0.0
  %2252 = vmatprep.subr.mxu0 0.0
  %2253 = vmatpush1.msra.mxu0 0.0
  %2254 = vmatprep.subr.mxu0 0.0
  %2255 = vmatpush1.msra.mxu0 0.0
  %2256 = vmatprep.subr.mxu0 0.0
  %2257 = vmatpush1.msra.mxu0 0.0
  %2258 = vmatprep.subr.mxu0 0.0
  %2259 = vmatpush1.msra.mxu0 0.0
  %2260 = vmatprep.subr.mxu0 0.0
  %2261 = vmatpush1.msra.mxu0 0.0
  %2262 = vmatprep.subr.mxu0 0.0
  %2263 = vmatpush1.msra.mxu0 0.0
  %2264 = vmatprep.subr.mxu0 0.0
  %2265 = vmatpush1.msra.mxu0 0.0
  %2266 = vmatprep.subr.mxu0 0.0
  %2267 = vmatpush1.msra.mxu0 0.0
  %2268 = vmatprep.subr.mxu0 0.0
  %2269 = vmatpush1.msra.mxu0 0.0
  %2270 = vmatprep.subr.mxu0 0.0
  %2271 = vmatpush1.msra.mxu0 0.0
  %2272 = vmatprep.subr.mxu0 0.0
  %2273 = vmatpush1.msra.mxu0 0.0
  %2274 = vmatprep.subr.mxu0 0.0
  %2275 = vmatpush1.msra.mxu0 0.0
  %2276 = vmatprep.subr.mxu0 0.0
  %2277 = vmatpush1.msra.mxu0 0.0
  %2278 = vmatprep.subr.mxu0 0.0
  %2279 = vmatpush1.msra.mxu0 0.0
  %2280 = vmatprep.subr.mxu0 0.0
  %2281 = vmatpush1.msra.mxu0 0.0
  %2282 = vmatprep.subr.mxu0 0.0
  %2283 = vmatpush1.msra.mxu0 0.0
  %2284 = vmatprep.subr.mxu0 0.0
  %2285 = vmatpush1.msra.mxu0 0.0
  %2286 = vmatprep.subr.mxu0 0.0
  %2287 = vmatpush1.msra.mxu0 0.0
  %2288 = vmatprep.mubr.f32.mxu0 0.0
  %2289 = vmatmul.mubr.f32.gmra.mrb[0].mxu0 %v2129
  %v2290 = vpop.f32.mrb[0].mxu0
  %v2291 = vadd.f32 0.0, %v2290
  %v2292 = vpop.f32.mrb[0].mxu0
  %2293 = vmatprep.mubr.f32.mxu0 0.0
  %2294 = vmatmul.mubr.f32.gmra.mrb[0].mxu0 %v2132
  %v2295 = vpop.f32.mrb[0].mxu0
  %v2296 = vadd.f32 0.0, %v2295
  %v2297 = vpop.f32.mrb[0].mxu0
  %2298 = vmatprep.mubr.f32.mxu0 0.0
  %2299 = vmatmul.mubr.f32.gmra.mrb[0].mxu0 %v2135
  %v2300 = vpop.f32.mrb[0].mxu0
  %v2301 = vadd.f32 0.0, %v2300
  %v2302 = vpop.f32.mrb[0].mxu0
  %2303 = vmatprep.mubr.f32.mxu0 0.0
  %2304 = vmatmul.mubr.f32.gmra.mrb[0].mxu0 %v2138
  %v2305 = vpop.f32.mrb[0].mxu0
  %v2306 = vadd.f32 0.0, %v2305
  %v2307 = vpop.f32.mrb[0].mxu0
  %2308 = vmatprep.mubr.f32.mxu0 0.0
  %2309 = vmatmul.mubr.f32.gmra.mrb[0].mxu0 %v2141
  %v2310 = vpop.f32.mrb[0].mxu0
  %v2311 = vadd.f32 0.0, %v2310
  %v2312 = vpop.f32.mrb[0].mxu0
  %2313 = vmatprep.mubr.f32.mxu0 0.0
  %2314 = vmatmul.mubr.f32.gmra.mrb[0].mxu0 %v2144
  %v2315 = vpop.f32.mrb[0].mxu0
  %v2316 = vadd.f32 0.0, %v2315
  %v2317 = vpop.f32.mrb[0].mxu0
  %2318 = vmatprep.mubr.f32.mxu0 0.0
  %2319 = vmatmul.mubr.f32.gmra.mrb[0].mxu0 %v2147
  %v2320 = vpop.f32.mrb[0].mxu0
  %v2321 = vadd.f32 0.0, %v2320
  %v2322 = vpop.f32.mrb[0].mxu0
  %2323 = vmatprep.mubr.f32.mxu0 0.0
  %2324 = vmatmul.mubr.f32.gmra.mrb[0].mxu0 %v2150
  %v2325 = vpop.f32.mrb[0].mxu0
  %v2326 = vadd.f32 0.0, %v2325
  %v2327 = vpop.f32.mrb[0].mxu0
  %2328 = vmatprep.mubr.f32.mxu0 0.0
  %2329 = vmatmul.mubr.f32.gmra.mrb[0].mxu0 %v2153
  %v2330 = vpop.f32.mrb[0].mxu0
  %v2331 = vadd.f32 0.0, %v2330
  %v2332 = vpop.f32.mrb[0].mxu0
  %2333 = vmatprep.mubr.f32.mxu0 0.0
  %2334 = vmatmul.mubr.f32.gmra.mrb[0].mxu0 %v2156
  %v2335 = vpop.f32.mrb[0].mxu0
  %v2336 = vadd.f32 0.0, %v2335
  %v2337 = vpop.f32.mrb[0].mxu0
  %2338 = vmatprep.mubr.f32.mxu0 0.0
  %2339 = vmatmul.mubr.f32.gmra.mrb[0].mxu0 %v2159
  %v2340 = vpop.f32.mrb[0].mxu0
  %v2341 = vadd.f32 0.0, %v2340
  %v2342 = vpop.f32.mrb[0].mxu0
  %2343 = vmatprep.mubr.f32.mxu0 0.0
  %2344 = vmatmul.mubr.f32.gmra.mrb[0].mxu0 %v2162
  %v2345 = vpop.f32.mrb[0].mxu0
  %v2346 = vadd.f32 0.0, %v2345
  %v2347 = vpop.f32.mrb[0].mxu0
  %2348 = vmatprep.mubr.f32.mxu0 0.0
  %2349 = vmatmul.mubr.f32.gmra.mrb[0].mxu0 %v2165
  %v2350 = vpop.f32.mrb[0].mxu0
  %v2351 = vadd.f32 0.0, %v2350
  %v2352 = vpop.f32.mrb[0].mxu0
  %2353 = vmatprep.mubr.f32.mxu0 0.0
  %2354 = vmatmul.mubr.f32.gmra.mrb[0].mxu0 %v2168
  %v2355 = vpop.f32.mrb[0].mxu0
  %v2356 = vadd.f32 0.0, %v2355
  %v2357 = vpop.f32.mrb[0].mxu0
  %2358 = vmatprep.mubr.f32.mxu0 0.0
  %2359 = vmatmul.mubr.f32.gmra.mrb[0].mxu0 %v2171
  %v2360 = vpop.f32.mrb[0].mxu0
  %v2361 = vadd.f32 0.0, %v2360
  %v2362 = vpop.f32.mrb[0].mxu0
  %2363 = vmatprep.mubr.f32.mxu0 0.0
  %2364 = vmatmul.mubr.f32.gmra.mrb[0].mxu0 %v2174
  %v2365 = vpop.f32.mrb[0].mxu0
  %v2366 = vadd.f32 0.0, %v2365
  %v2367 = vpop.f32.mrb[0].mxu0
  %2368 = vmatprep.mubr.f32.mxu0 0.0
  %2369 = vmatmul.mubr.f32.gmra.mrb[0].mxu0 %v2177
  %v2370 = vpop.f32.mrb[0].mxu0
  %v2371 = vadd.f32 0.0, %v2370
  %v2372 = vpop.f32.mrb[0].mxu0
  %2373 = vmatprep.mubr.f32.mxu0 0.0
  %2374 = vmatmul.mubr.f32.gmra.mrb[0].mxu0 %v2180
  %v2375 = vpop.f32.mrb[0].mxu0
  %v2376 = vadd.f32 0.0, %v2375
  %v2377 = vpop.f32.mrb[0].mxu0
  %2378 = vmatprep.mubr.f32.mxu0 0.0
  %2379 = vmatmul.mubr.f32.gmra.mrb[0].mxu0 %v2183
  %v2380 = vpop.f32.mrb[0].mxu0
  %v2381 = vadd.f32 0.0, %v2380
  %v2382 = vpop.f32.mrb[0].mxu0
  %2383 = vmatprep.mubr.f32.mxu0 0.0
  %2384 = vmatmul.mubr.f32.gmra.mrb[0].mxu0 %v2186
  %v2385 = vpop.f32.mrb[0].mxu0
  %v2386 = vadd.f32 0.0, %v2385
  %v2387 = vpop.f32.mrb[0].mxu0
  %2388 = vmatprep.mubr.f32.mxu0 0.0
  %2389 = vmatmul.mubr.f32.gmra.mrb[0].mxu0 %v2189
  %v2390 = vpop.f32.mrb[0].mxu0
  %v2391 = vadd.f32 0.0, %v2390
  %v2392 = vpop.f32.mrb[0].mxu0
  %2393 = vmatprep.mubr.f32.mxu0 0.0
  %2394 = vmatmul.mubr.f32.gmra.mrb[0].mxu0 %v2192
  %v2395 = vpop.f32.mrb[0].mxu0
  %v2396 = vadd.f32 0.0, %v2395
  %v2397 = vpop.f32.mrb[0].mxu0
  %2398 = vmatprep.mubr.f32.mxu0 0.0
  %2399 = vmatmul.mubr.f32.gmra.mrb[0].mxu0 %v2195
  %v2400 = vpop.f32.mrb[0].mxu0
  %v2401 = vadd.f32 0.0, %v2400
  %v2402 = vpop.f32.mrb[0].mxu0
  %2403 = vmatprep.mubr.f32.mxu0 0.0
  %2404 = vmatmul.mubr.f32.gmra.mrb[0].mxu0 %v2198
  %v2405 = vpop.f32.mrb[0].mxu0
  %v2406 = vadd.f32 0.0, %v2405
  %v2407 = vpop.f32.mrb[0].mxu0
  %2408 = vmatprep.mubr.f32.mxu0 0.0
  %2409 = vmatmul.mubr.f32.gmra.mrb[0].mxu0 %v2201
  %v2410 = vpop.f32.mrb[0].mxu0
  %v2411 = vadd.f32 0.0, %v2410
  %v2412 = vpop.f32.mrb[0].mxu0
  %2413 = vmatprep.mubr.f32.mxu0 0.0
  %2414 = vmatmul.mubr.f32.gmra.mrb[0].mxu0 %v2204
  %v2415 = vpop.f32.mrb[0].mxu0
  %v2416 = vadd.f32 0.0, %v2415
  %v2417 = vpop.f32.mrb[0].mxu0
  %2418 = vmatprep.mubr.f32.mxu0 0.0
  %2419 = vmatmul.mubr.f32.gmra.mrb[0].mxu0 %v2207
  %v2420 = vpop.f32.mrb[0].mxu0
  %v2421 = vadd.f32 0.0, %v2420
  %v2422 = vpop.f32.mrb[0].mxu0
  %2423 = vmatprep.mubr.f32.mxu0 0.0
  %2424 = vmatmul.mubr.f32.gmra.mrb[0].mxu0 %v2210
  %v2425 = vpop.f32.mrb[0].mxu0
  %v2426 = vadd.f32 0.0, %v2425
  %v2427 = vpop.f32.mrb[0].mxu0
  %2428 = vmatprep.mubr.f32.mxu0 0.0
  %2429 = vmatmul.mubr.f32.gmra.mrb[0].mxu0 %v2213
  %v2430 = vpop.f32.mrb[0].mxu0
  %v2431 = vadd.f32 0.0, %v2430
  %v2432 = vpop.f32.mrb[0].mxu0
  %2433 = vmatprep.mubr.f32.mxu0 0.0
  %2434 = vmatmul.mubr.f32.gmra.mrb[0].mxu0 %v2216
  %v2435 = vpop.f32.mrb[0].mxu0
  %v2436 = vadd.f32 0.0, %v2435
  %v2437 = vpop.f32.mrb[0].mxu0
  %2438 = vmatprep.mubr.f32.mxu0 0.0
  %2439 = vmatmul.mubr.f32.gmra.mrb[0].mxu0 %v2219
  %v2440 = vpop.f32.mrb[0].mxu0
  %v2441 = vadd.f32 0.0, %v2440
  %v2442 = vpop.f32.mrb[0].mxu0
  %2443 = vmatprep.mubr.f32.mxu0 0.0
  %2444 = vmatmul.mubr.f32.gmra.mrb[0].mxu0 %v2222
  %v2445 = vpop.f32.mrb[0].mxu0
  %v2446 = vadd.f32 0.0, %v2445
  %v2447 = vpop.f32.mrb[0].mxu0
  %2448 = vdwg.mxu0
  %v2449 = vmul.f32 %v1968, %v1968
  %v2450 = vmul.f32 %v1973, %v1973
  %v2451 = vmul.f32 %v1978, %v1978
  %v2452 = vmul.f32 %v1983, %v1983
  %v2453 = vmul.f32 %v1988, %v1988
  %v2454 = vmul.f32 %v1993, %v1993
  %v2455 = vmul.f32 %v1998, %v1998
  %v2456 = vmul.f32 %v2003, %v2003
  %v2457 = vmul.f32 %v2008, %v2008
  %v2458 = vmul.f32 %v2013, %v2013
  %v2459 = vmul.f32 %v2018, %v2018
  %v2460 = vmul.f32 %v2023, %v2023
  %v2461 = vmul.f32 %v2028, %v2028
  %v2462 = vmul.f32 %v2033, %v2033
  %v2463 = vmul.f32 %v2038, %v2038
  %v2464 = vmul.f32 %v2043, %v2043
  %v2465 = vmul.f32 %v2048, %v2048
  %v2466 = vmul.f32 %v2053, %v2053
  %v2467 = vmul.f32 %v2058, %v2058
  %v2468 = vmul.f32 %v2063, %v2063
  %v2469 = vmul.f32 %v2068, %v2068
  %v2470 = vmul.f32 %v2073, %v2073
  %v2471 = vmul.f32 %v2078, %v2078
  %v2472 = vmul.f32 %v2083, %v2083
  %v2473 = vmul.f32 %v2088, %v2088
  %v2474 = vmul.f32 %v2093, %v2093
  %v2475 = vmul.f32 %v2098, %v2098
  %v2476 = vmul.f32 %v2103, %v2103
  %v2477 = vmul.f32 %v2108, %v2108
  %v2478 = vmul.f32 %v2113, %v2113
  %v2479 = vmul.f32 %v2118, %v2118
  %v2480 = vmul.f32 %v2123, %v2123
  %v2482 = vsel %vm789, %v2449, 0
  %v2485 = vsel %vm789, %v2450, 0
  %v2488 = vsel %vm789, %v2451, 0
  %v2491 = vsel %vm789, %v2452, 0
  %v2494 = vsel %vm789, %v2453, 0
  %v2497 = vsel %vm789, %v2454, 0
  %v2500 = vsel %vm789, %v2455, 0
  %v2503 = vsel %vm789, %v2456, 0
  %v2506 = vsel %vm789, %v2457, 0
  %v2509 = vsel %vm789, %v2458, 0
  %v2512 = vsel %vm789, %v2459, 0
  %v2515 = vsel %vm789, %v2460, 0
  %v2518 = vsel %vm789, %v2461, 0
  %v2521 = vsel %vm789, %v2462, 0
  %v2524 = vsel %vm789, %v2463, 0
  %v2527 = vsel %vm789, %v2464, 0
  %v2530 = vsel %vm789, %v2465, 0
  %v2533 = vsel %vm789, %v2466, 0
  %v2536 = vsel %vm789, %v2467, 0
  %v2539 = vsel %vm789, %v2468, 0
  %v2542 = vsel %vm789, %v2469, 0
  %v2545 = vsel %vm789, %v2470, 0
  %v2548 = vsel %vm789, %v2471, 0
  %v2551 = vsel %vm789, %v2472, 0
  %v2554 = vsel %vm789, %v2473, 0
  %v2557 = vsel %vm789, %v2474, 0
  %v2560 = vsel %vm789, %v2475, 0
  %v2563 = vsel %vm789, %v2476, 0
  %v2566 = vsel %vm789, %v2477, 0
  %v2569 = vsel %vm789, %v2478, 0
  %v2572 = vsel %vm789, %v2479, 0
  %v2575 = vsel %vm789, %v2480, 0
  %2577 = vmatprep.subr.mxu0 0.0
  %2578 = vmatpush1.msra.mxu0 %v30
  %2579 = vmatprep.subr.mxu0 0.0
  %2580 = vmatpush1.msra.mxu0 %v31
  %2581 = vmatprep.subr.mxu0 0.0
  %2582 = vmatpush1.msra.mxu0 %v32
  %2583 = vmatprep.subr.mxu0 0.0
  %2584 = vmatpush1.msra.mxu0 %v33
  %2585 = vmatprep.subr.mxu0 0.0
  %2586 = vmatpush1.msra.mxu0 %v34
  %2587 = vmatprep.subr.mxu0 0.0
  %2588 = vmatpush1.msra.mxu0 %v35
  %2589 = vmatprep.subr.mxu0 0.0
  %2590 = vmatpush1.msra.mxu0 %v36
  %2591 = vmatprep.subr.mxu0 0.0
  %2592 = vmatpush1.msra.mxu0 %v37
  %2593 = vmatprep.subr.mxu0 0.0
  %2594 = vmatpush1.msra.mxu0 0.0
  %2595 = vmatprep.subr.mxu0 0.0
  %2596 = vmatpush1.msra.mxu0 0.0
  %2597 = vmatprep.subr.mxu0 0.0
  %2598 = vmatpush1.msra.mxu0 0.0
  %2599 = vmatprep.subr.mxu0 0.0
  %2600 = vmatpush1.msra.mxu0 0.0
  %2601 = vmatprep.subr.mxu0 0.0
  %2602 = vmatpush1.msra.mxu0 0.0
  %2603 = vmatprep.subr.mxu0 0.0
  %2604 = vmatpush1.msra.mxu0 0.0
  %2605 = vmatprep.subr.mxu0 0.0
  %2606 = vmatpush1.msra.mxu0 0.0
  %2607 = vmatprep.subr.mxu0 0.0
  %2608 = vmatpush1.msra.mxu0 0.0
  %2609 = vmatprep.subr.mxu0 0.0
  %2610 = vmatpush1.msra.mxu0 0.0
  %2611 = vmatprep.subr.mxu0 0.0
  %2612 = vmatpush1.msra.mxu0 0.0
  %2613 = vmatprep.subr.mxu0 0.0
  %2614 = vmatpush1.msra.mxu0 0.0
  %2615 = vmatprep.subr.mxu0 0.0
  %2616 = vmatpush1.msra.mxu0 0.0
  %2617 = vmatprep.subr.mxu0 0.0
  %2618 = vmatpush1.msra.mxu0 0.0
  %2619 = vmatprep.subr.mxu0 0.0
  %2620 = vmatpush1.msra.mxu0 0.0
  %2621 = vmatprep.subr.mxu0 0.0
  %2622 = vmatpush1.msra.mxu0 0.0
  %2623 = vmatprep.subr.mxu0 0.0
  %2624 = vmatpush1.msra.mxu0 0.0
  %2625 = vmatprep.subr.mxu0 0.0
  %2626 = vmatpush1.msra.mxu0 0.0
  %2627 = vmatprep.subr.mxu0 0.0
  %2628 = vmatpush1.msra.mxu0 0.0
  %2629 = vmatprep.subr.mxu0 0.0
  %2630 = vmatpush1.msra.mxu0 0.0
  %2631 = vmatprep.subr.mxu0 0.0
  %2632 = vmatpush1.msra.mxu0 0.0
  %2633 = vmatprep.subr.mxu0 0.0
  %2634 = vmatpush1.msra.mxu0 0.0
  %2635 = vmatprep.subr.mxu0 0.0
  %2636 = vmatpush1.msra.mxu0 0.0
  %2637 = vmatprep.subr.mxu0 0.0
  %2638 = vmatpush1.msra.mxu0 0.0
  %2639 = vmatprep.subr.mxu0 0.0
  %2640 = vmatpush1.msra.mxu0 0.0
  %2641 = vmatprep.mubr.f32.mxu0 0.0
  %2642 = vmatmul.mubr.f32.gmra.mrb[0].mxu0 %v2482
  %v2643 = vpop.f32.mrb[0].mxu0
  %v2644 = vadd.f32 0.0, %v2643
  %v2645 = vpop.f32.mrb[0].mxu0
  %2646 = vmatprep.mubr.f32.mxu0 0.0
  %2647 = vmatmul.mubr.f32.gmra.mrb[0].mxu0 %v2485
  %v2648 = vpop.f32.mrb[0].mxu0
  %v2649 = vadd.f32 0.0, %v2648
  %v2650 = vpop.f32.mrb[0].mxu0
  %2651 = vmatprep.mubr.f32.mxu0 0.0
  %2652 = vmatmul.mubr.f32.gmra.mrb[0].mxu0 %v2488
  %v2653 = vpop.f32.mrb[0].mxu0
  %v2654 = vadd.f32 0.0, %v2653
  %v2655 = vpop.f32.mrb[0].mxu0
  %2656 = vmatprep.mubr.f32.mxu0 0.0
  %2657 = vmatmul.mubr.f32.gmra.mrb[0].mxu0 %v2491
  %v2658 = vpop.f32.mrb[0].mxu0
  %v2659 = vadd.f32 0.0, %v2658
  %v2660 = vpop.f32.mrb[0].mxu0
  %2661 = vmatprep.mubr.f32.mxu0 0.0
  %2662 = vmatmul.mubr.f32.gmra.mrb[0].mxu0 %v2494
  %v2663 = vpop.f32.mrb[0].mxu0
  %v2664 = vadd.f32 0.0, %v2663
  %v2665 = vpop.f32.mrb[0].mxu0
  %2666 = vmatprep.mubr.f32.mxu0 0.0
  %2667 = vmatmul.mubr.f32.gmra.mrb[0].mxu0 %v2497
  %v2668 = vpop.f32.mrb[0].mxu0
  %v2669 = vadd.f32 0.0, %v2668
  %v2670 = vpop.f32.mrb[0].mxu0
  %2671 = vmatprep.mubr.f32.mxu0 0.0
  %2672 = vmatmul.mubr.f32.gmra.mrb[0].mxu0 %v2500
  %v2673 = vpop.f32.mrb[0].mxu0
  %v2674 = vadd.f32 0.0, %v2673
  %v2675 = vpop.f32.mrb[0].mxu0
  %2676 = vmatprep.mubr.f32.mxu0 0.0
  %2677 = vmatmul.mubr.f32.gmra.mrb[0].mxu0 %v2503
  %v2678 = vpop.f32.mrb[0].mxu0
  %v2679 = vadd.f32 0.0, %v2678
  %v2680 = vpop.f32.mrb[0].mxu0
  %2681 = vmatprep.mubr.f32.mxu0 0.0
  %2682 = vmatmul.mubr.f32.gmra.mrb[0].mxu0 %v2506
  %v2683 = vpop.f32.mrb[0].mxu0
  %v2684 = vadd.f32 0.0, %v2683
  %v2685 = vpop.f32.mrb[0].mxu0
  %2686 = vmatprep.mubr.f32.mxu0 0.0
  %2687 = vmatmul.mubr.f32.gmra.mrb[0].mxu0 %v2509
  %v2688 = vpop.f32.mrb[0].mxu0
  %v2689 = vadd.f32 0.0, %v2688
  %v2690 = vpop.f32.mrb[0].mxu0
  %2691 = vmatprep.mubr.f32.mxu0 0.0
  %2692 = vmatmul.mubr.f32.gmra.mrb[0].mxu0 %v2512
  %v2693 = vpop.f32.mrb[0].mxu0
  %v2694 = vadd.f32 0.0, %v2693
  %v2695 = vpop.f32.mrb[0].mxu0
  %2696 = vmatprep.mubr.f32.mxu0 0.0
  %2697 = vmatmul.mubr.f32.gmra.mrb[0].mxu0 %v2515
  %v2698 = vpop.f32.mrb[0].mxu0
  %v2699 = vadd.f32 0.0, %v2698
  %v2700 = vpop.f32.mrb[0].mxu0
  %2701 = vmatprep.mubr.f32.mxu0 0.0
  %2702 = vmatmul.mubr.f32.gmra.mrb[0].mxu0 %v2518
  %v2703 = vpop.f32.mrb[0].mxu0
  %v2704 = vadd.f32 0.0, %v2703
  %v2705 = vpop.f32.mrb[0].mxu0
  %2706 = vmatprep.mubr.f32.mxu0 0.0
  %2707 = vmatmul.mubr.f32.gmra.mrb[0].mxu0 %v2521
  %v2708 = vpop.f32.mrb[0].mxu0
  %v2709 = vadd.f32 0.0, %v2708
  %v2710 = vpop.f32.mrb[0].mxu0
  %2711 = vmatprep.mubr.f32.mxu0 0.0
  %2712 = vmatmul.mubr.f32.gmra.mrb[0].mxu0 %v2524
  %v2713 = vpop.f32.mrb[0].mxu0
  %v2714 = vadd.f32 0.0, %v2713
  %v2715 = vpop.f32.mrb[0].mxu0
  %2716 = vmatprep.mubr.f32.mxu0 0.0
  %2717 = vmatmul.mubr.f32.gmra.mrb[0].mxu0 %v2527
  %v2718 = vpop.f32.mrb[0].mxu0
  %v2719 = vadd.f32 0.0, %v2718
  %v2720 = vpop.f32.mrb[0].mxu0
  %2721 = vmatprep.mubr.f32.mxu0 0.0
  %2722 = vmatmul.mubr.f32.gmra.mrb[0].mxu0 %v2530
  %v2723 = vpop.f32.mrb[0].mxu0
  %v2724 = vadd.f32 0.0, %v2723
  %v2725 = vpop.f32.mrb[0].mxu0
  %2726 = vmatprep.mubr.f32.mxu0 0.0
  %2727 = vmatmul.mubr.f32.gmra.mrb[0].mxu0 %v2533
  %v2728 = vpop.f32.mrb[0].mxu0
  %v2729 = vadd.f32 0.0, %v2728
  %v2730 = vpop.f32.mrb[0].mxu0
  %2731 = vmatprep.mubr.f32.mxu0 0.0
  %2732 = vmatmul.mubr.f32.gmra.mrb[0].mxu0 %v2536
  %v2733 = vpop.f32.mrb[0].mxu0
  %v2734 = vadd.f32 0.0, %v2733
  %v2735 = vpop.f32.mrb[0].mxu0
  %2736 = vmatprep.mubr.f32.mxu0 0.0
  %2737 = vmatmul.mubr.f32.gmra.mrb[0].mxu0 %v2539
  %v2738 = vpop.f32.mrb[0].mxu0
  %v2739 = vadd.f32 0.0, %v2738
  %v2740 = vpop.f32.mrb[0].mxu0
  %2741 = vmatprep.mubr.f32.mxu0 0.0
  %2742 = vmatmul.mubr.f32.gmra.mrb[0].mxu0 %v2542
  %v2743 = vpop.f32.mrb[0].mxu0
  %v2744 = vadd.f32 0.0, %v2743
  %v2745 = vpop.f32.mrb[0].mxu0
  %2746 = vmatprep.mubr.f32.mxu0 0.0
  %2747 = vmatmul.mubr.f32.gmra.mrb[0].mxu0 %v2545
  %v2748 = vpop.f32.mrb[0].mxu0
  %v2749 = vadd.f32 0.0, %v2748
  %v2750 = vpop.f32.mrb[0].mxu0
  %2751 = vmatprep.mubr.f32.mxu0 0.0
  %2752 = vmatmul.mubr.f32.gmra.mrb[0].mxu0 %v2548
  %v2753 = vpop.f32.mrb[0].mxu0
  %v2754 = vadd.f32 0.0, %v2753
  %v2755 = vpop.f32.mrb[0].mxu0
  %2756 = vmatprep.mubr.f32.mxu0 0.0
  %2757 = vmatmul.mubr.f32.gmra.mrb[0].mxu0 %v2551
  %v2758 = vpop.f32.mrb[0].mxu0
  %v2759 = vadd.f32 0.0, %v2758
  %v2760 = vpop.f32.mrb[0].mxu0
  %2761 = vmatprep.mubr.f32.mxu0 0.0
  %2762 = vmatmul.mubr.f32.gmra.mrb[0].mxu0 %v2554
  %v2763 = vpop.f32.mrb[0].mxu0
  %v2764 = vadd.f32 0.0, %v2763
  %v2765 = vpop.f32.mrb[0].mxu0
  %2766 = vmatprep.mubr.f32.mxu0 0.0
  %2767 = vmatmul.mubr.f32.gmra.mrb[0].mxu0 %v2557
  %v2768 = vpop.f32.mrb[0].mxu0
  %v2769 = vadd.f32 0.0, %v2768
  %v2770 = vpop.f32.mrb[0].mxu0
  %2771 = vmatprep.mubr.f32.mxu0 0.0
  %2772 = vmatmul.mubr.f32.gmra.mrb[0].mxu0 %v2560
  %v2773 = vpop.f32.mrb[0].mxu0
  %v2774 = vadd.f32 0.0, %v2773
  %v2775 = vpop.f32.mrb[0].mxu0
  %2776 = vmatprep.mubr.f32.mxu0 0.0
  %2777 = vmatmul.mubr.f32.gmra.mrb[0].mxu0 %v2563
  %v2778 = vpop.f32.mrb[0].mxu0
  %v2779 = vadd.f32 0.0, %v2778
  %v2780 = vpop.f32.mrb[0].mxu0
  %2781 = vmatprep.mubr.f32.mxu0 0.0
  %2782 = vmatmul.mubr.f32.gmra.mrb[0].mxu0 %v2566
  %v2783 = vpop.f32.mrb[0].mxu0
  %v2784 = vadd.f32 0.0, %v2783
  %v2785 = vpop.f32.mrb[0].mxu0
  %2786 = vmatprep.mubr.f32.mxu0 0.0
  %2787 = vmatmul.mubr.f32.gmra.mrb[0].mxu0 %v2569
  %v2788 = vpop.f32.mrb[0].mxu0
  %v2789 = vadd.f32 0.0, %v2788
  %v2790 = vpop.f32.mrb[0].mxu0
  %2791 = vmatprep.mubr.f32.mxu0 0.0
  %2792 = vmatmul.mubr.f32.gmra.mrb[0].mxu0 %v2572
  %v2793 = vpop.f32.mrb[0].mxu0
  %v2794 = vadd.f32 0.0, %v2793
  %v2795 = vpop.f32.mrb[0].mxu0
  %2796 = vmatprep.mubr.f32.mxu0 0.0
  %2797 = vmatmul.mubr.f32.gmra.mrb[0].mxu0 %v2575
  %v2798 = vpop.f32.mrb[0].mxu0
  %v2799 = vadd.f32 0.0, %v2798
  %v2800 = vpop.f32.mrb[0].mxu0
  %2801 = vdwg.mxu0
  %v2802 = vmul.f32 %v2291, %v2291
  %v2803 = vmul.f32 %v2296, %v2296
  %v2804 = vmul.f32 %v2301, %v2301
  %v2805 = vmul.f32 %v2306, %v2306
  %v2806 = vmul.f32 %v2311, %v2311
  %v2807 = vmul.f32 %v2316, %v2316
  %v2808 = vmul.f32 %v2321, %v2321
  %v2809 = vmul.f32 %v2326, %v2326
  %v2810 = vmul.f32 %v2331, %v2331
  %v2811 = vmul.f32 %v2336, %v2336
  %v2812 = vmul.f32 %v2341, %v2341
  %v2813 = vmul.f32 %v2346, %v2346
  %v2814 = vmul.f32 %v2351, %v2351
  %v2815 = vmul.f32 %v2356, %v2356
  %v2816 = vmul.f32 %v2361, %v2361
  %v2817 = vmul.f32 %v2366, %v2366
  %v2818 = vmul.f32 %v2371, %v2371
  %v2819 = vmul.f32 %v2376, %v2376
  %v2820 = vmul.f32 %v2381, %v2381
  %v2821 = vmul.f32 %v2386, %v2386
  %v2822 = vmul.f32 %v2391, %v2391
  %v2823 = vmul.f32 %v2396, %v2396
  %v2824 = vmul.f32 %v2401, %v2401
  %v2825 = vmul.f32 %v2406, %v2406
  %v2826 = vmul.f32 %v2411, %v2411
  %v2827 = vmul.f32 %v2416, %v2416
  %v2828 = vmul.f32 %v2421, %v2421
  %v2829 = vmul.f32 %v2426, %v2426
  %v2830 = vmul.f32 %v2431, %v2431
  %v2831 = vmul.f32 %v2436, %v2436
  %v2832 = vmul.f32 %v2441, %v2441
  %v2833 = vmul.f32 %v2446, %v2446
  %v2834 = vsub.f32 %v2644, %v2802
  %v2835 = vsub.f32 %v2649, %v2803
  %v2836 = vsub.f32 %v2654, %v2804
  %v2837 = vsub.f32 %v2659, %v2805
  %v2838 = vsub.f32 %v2664, %v2806
  %v2839 = vsub.f32 %v2669, %v2807
  %v2840 = vsub.f32 %v2674, %v2808
  %v2841 = vsub.f32 %v2679, %v2809
  %v2842 = vsub.f32 %v2684, %v2810
  %v2843 = vsub.f32 %v2689, %v2811
  %v2844 = vsub.f32 %v2694, %v2812
  %v2845 = vsub.f32 %v2699, %v2813
  %v2846 = vsub.f32 %v2704, %v2814
  %v2847 = vsub.f32 %v2709, %v2815
  %v2848 = vsub.f32 %v2714, %v2816
  %v2849 = vsub.f32 %v2719, %v2817
  %v2850 = vsub.f32 %v2724, %v2818
  %v2851 = vsub.f32 %v2729, %v2819
  %v2852 = vsub.f32 %v2734, %v2820
  %v2853 = vsub.f32 %v2739, %v2821
  %v2854 = vsub.f32 %v2744, %v2822
  %v2855 = vsub.f32 %v2749, %v2823
  %v2856 = vsub.f32 %v2754, %v2824
  %v2857 = vsub.f32 %v2759, %v2825
  %v2858 = vsub.f32 %v2764, %v2826
  %v2859 = vsub.f32 %v2769, %v2827
  %v2860 = vsub.f32 %v2774, %v2828
  %v2861 = vsub.f32 %v2779, %v2829
  %v2862 = vsub.f32 %v2784, %v2830
  %v2863 = vsub.f32 %v2789, %v2831
  %v2864 = vsub.f32 %v2794, %v2832
  %v2865 = vsub.f32 %v2799, %v2833
  %v2866 = vmax.f32 %v2834, 0.0
  %v2867 = vmax.f32 %v2835, 0.0
  %v2868 = vmax.f32 %v2836, 0.0
  %v2869 = vmax.f32 %v2837, 0.0
  %v2870 = vmax.f32 %v2838, 0.0
  %v2871 = vmax.f32 %v2839, 0.0
  %v2872 = vmax.f32 %v2840, 0.0
  %v2873 = vmax.f32 %v2841, 0.0
  %v2874 = vmax.f32 %v2842, 0.0
  %v2875 = vmax.f32 %v2843, 0.0
  %v2876 = vmax.f32 %v2844, 0.0
  %v2877 = vmax.f32 %v2845, 0.0
  %v2878 = vmax.f32 %v2846, 0.0
  %v2879 = vmax.f32 %v2847, 0.0
  %v2880 = vmax.f32 %v2848, 0.0
  %v2881 = vmax.f32 %v2849, 0.0
  %v2882 = vmax.f32 %v2850, 0.0
  %v2883 = vmax.f32 %v2851, 0.0
  %v2884 = vmax.f32 %v2852, 0.0
  %v2885 = vmax.f32 %v2853, 0.0
  %v2886 = vmax.f32 %v2854, 0.0
  %v2887 = vmax.f32 %v2855, 0.0
  %v2888 = vmax.f32 %v2856, 0.0
  %v2889 = vmax.f32 %v2857, 0.0
  %v2890 = vmax.f32 %v2858, 0.0
  %v2891 = vmax.f32 %v2859, 0.0
  %v2892 = vmax.f32 %v2860, 0.0
  %v2893 = vmax.f32 %v2861, 0.0
  %v2894 = vmax.f32 %v2862, 0.0
  %v2895 = vmax.f32 %v2863, 0.0
  %v2896 = vmax.f32 %v2864, 0.0
  %v2897 = vmax.f32 %v2865, 0.0
  %v2898 = vsub.f32 %v1968, %v2291
  %v2899 = vsub.f32 %v1973, %v2296
  %v2900 = vsub.f32 %v1978, %v2301
  %v2901 = vsub.f32 %v1983, %v2306
  %v2902 = vsub.f32 %v1988, %v2311
  %v2903 = vsub.f32 %v1993, %v2316
  %v2904 = vsub.f32 %v1998, %v2321
  %v2905 = vsub.f32 %v2003, %v2326
  %v2906 = vsub.f32 %v2008, %v2331
  %v2907 = vsub.f32 %v2013, %v2336
  %v2908 = vsub.f32 %v2018, %v2341
  %v2909 = vsub.f32 %v2023, %v2346
  %v2910 = vsub.f32 %v2028, %v2351
  %v2911 = vsub.f32 %v2033, %v2356
  %v2912 = vsub.f32 %v2038, %v2361
  %v2913 = vsub.f32 %v2043, %v2366
  %v2914 = vsub.f32 %v2048, %v2371
  %v2915 = vsub.f32 %v2053, %v2376
  %v2916 = vsub.f32 %v2058, %v2381
  %v2917 = vsub.f32 %v2063, %v2386
  %v2918 = vsub.f32 %v2068, %v2391
  %v2919 = vsub.f32 %v2073, %v2396
  %v2920 = vsub.f32 %v2078, %v2401
  %v2921 = vsub.f32 %v2083, %v2406
  %v2922 = vsub.f32 %v2088, %v2411
  %v2923 = vsub.f32 %v2093, %v2416
  %v2924 = vsub.f32 %v2098, %v2421
  %v2925 = vsub.f32 %v2103, %v2426
  %v2926 = vsub.f32 %v2108, %v2431
  %v2927 = vsub.f32 %v2113, %v2436
  %v2928 = vsub.f32 %v2118, %v2441
  %v2929 = vsub.f32 %v2123, %v2446
  %v2930 = vadd.f32 %v2866, 1e-05
  %v2931 = vadd.f32 %v2867, 1e-05
  %v2932 = vadd.f32 %v2868, 1e-05
  %v2933 = vadd.f32 %v2869, 1e-05
  %v2934 = vadd.f32 %v2870, 1e-05
  %v2935 = vadd.f32 %v2871, 1e-05
  %v2936 = vadd.f32 %v2872, 1e-05
  %v2937 = vadd.f32 %v2873, 1e-05
  %v2938 = vadd.f32 %v2874, 1e-05
  %v2939 = vadd.f32 %v2875, 1e-05
  %v2940 = vadd.f32 %v2876, 1e-05
  %v2941 = vadd.f32 %v2877, 1e-05
  %v2942 = vadd.f32 %v2878, 1e-05
  %v2943 = vadd.f32 %v2879, 1e-05
  %v2944 = vadd.f32 %v2880, 1e-05
  %v2945 = vadd.f32 %v2881, 1e-05
  %v2946 = vadd.f32 %v2882, 1e-05
  %v2947 = vadd.f32 %v2883, 1e-05
  %v2948 = vadd.f32 %v2884, 1e-05
  %v2949 = vadd.f32 %v2885, 1e-05
  %v2950 = vadd.f32 %v2886, 1e-05
  %v2951 = vadd.f32 %v2887, 1e-05
  %v2952 = vadd.f32 %v2888, 1e-05
  %v2953 = vadd.f32 %v2889, 1e-05
  %v2954 = vadd.f32 %v2890, 1e-05
  %v2955 = vadd.f32 %v2891, 1e-05
  %v2956 = vadd.f32 %v2892, 1e-05
  %v2957 = vadd.f32 %v2893, 1e-05
  %v2958 = vadd.f32 %v2894, 1e-05
  %v2959 = vadd.f32 %v2895, 1e-05
  %v2960 = vadd.f32 %v2896, 1e-05
  %v2961 = vadd.f32 %v2897, 1e-05
  %v2962 = vrsqrt.pop %v2930
  %v2963 = vrsqrt.pop %v2931
  %v2964 = vrsqrt.pop %v2932
  %v2965 = vrsqrt.pop %v2933
  %v2966 = vrsqrt.pop %v2934
  %v2967 = vrsqrt.pop %v2935
  %v2968 = vrsqrt.pop %v2936
  %v2969 = vrsqrt.pop %v2937
  %v2970 = vrsqrt.pop %v2938
  %v2971 = vrsqrt.pop %v2939
  %v2972 = vrsqrt.pop %v2940
  %v2973 = vrsqrt.pop %v2941
  %v2974 = vrsqrt.pop %v2942
  %v2975 = vrsqrt.pop %v2943
  %v2976 = vrsqrt.pop %v2944
  %v2977 = vrsqrt.pop %v2945
  %v2978 = vrsqrt.pop %v2946
  %v2979 = vrsqrt.pop %v2947
  %v2980 = vrsqrt.pop %v2948
  %v2981 = vrsqrt.pop %v2949
  %v2982 = vrsqrt.pop %v2950
  %v2983 = vrsqrt.pop %v2951
  %v2984 = vrsqrt.pop %v2952
  %v2985 = vrsqrt.pop %v2953
  %v2986 = vrsqrt.pop %v2954
  %v2987 = vrsqrt.pop %v2955
  %v2988 = vrsqrt.pop %v2956
  %v2989 = vrsqrt.pop %v2957
  %v2990 = vrsqrt.pop %v2958
  %v2991 = vrsqrt.pop %v2959
  %v2992 = vrsqrt.pop %v2960
  %v2993 = vrsqrt.pop %v2961
  %v2994 = vmul.f32 %v2898, %v2962
  %v2995 = vmul.f32 %v2899, %v2963
  %v2996 = vmul.f32 %v2900, %v2964
  %v2997 = vmul.f32 %v2901, %v2965
  %v2998 = vmul.f32 %v2902, %v2966
  %v2999 = vmul.f32 %v2903, %v2967
  %v3000 = vmul.f32 %v2904, %v2968
  %v3001 = vmul.f32 %v2905, %v2969
  %v3002 = vmul.f32 %v2906, %v2970
  %v3003 = vmul.f32 %v2907, %v2971
  %v3004 = vmul.f32 %v2908, %v2972
  %v3005 = vmul.f32 %v2909, %v2973
  %v3006 = vmul.f32 %v2910, %v2974
  %v3007 = vmul.f32 %v2911, %v2975
  %v3008 = vmul.f32 %v2912, %v2976
  %v3009 = vmul.f32 %v2913, %v2977
  %v3010 = vmul.f32 %v2914, %v2978
  %v3011 = vmul.f32 %v2915, %v2979
  %v3012 = vmul.f32 %v2916, %v2980
  %v3013 = vmul.f32 %v2917, %v2981
  %v3014 = vmul.f32 %v2918, %v2982
  %v3015 = vmul.f32 %v2919, %v2983
  %v3016 = vmul.f32 %v2920, %v2984
  %v3017 = vmul.f32 %v2921, %v2985
  %v3018 = vmul.f32 %v2922, %v2986
  %v3019 = vmul.f32 %v2923, %v2987
  %v3020 = vmul.f32 %v2924, %v2988
  %v3021 = vmul.f32 %v2925, %v2989
  %v3022 = vmul.f32 %v2926, %v2990
  %v3023 = vmul.f32 %v2927, %v2991
  %v3024 = vmul.f32 %v2928, %v2992
  %v3025 = vmul.f32 %v2929, %v2993
  %v3026 = vlaneseq
  %v3027 = vshrl.u32 %v3026, 7
  %v3028 = vsub.s32 0, %v3027
  %v3029 = vrot.slane %v2126, %v3028
  %v3030 = vmul.f32 %v2994, %v3029
  %v3031 = vmul.f32 %v2995, %v3029
  %v3032 = vmul.f32 %v2996, %v3029
  %v3033 = vmul.f32 %v2997, %v3029
  %v3034 = vmul.f32 %v2998, %v3029
  %v3035 = vmul.f32 %v2999, %v3029
  %v3036 = vmul.f32 %v3000, %v3029
  %v3037 = vmul.f32 %v3001, %v3029
  %v3038 = vmul.f32 %v3002, %v3029
  %v3039 = vmul.f32 %v3003, %v3029
  %v3040 = vmul.f32 %v3004, %v3029
  %v3041 = vmul.f32 %v3005, %v3029
  %v3042 = vmul.f32 %v3006, %v3029
  %v3043 = vmul.f32 %v3007, %v3029
  %v3044 = vmul.f32 %v3008, %v3029
  %v3045 = vmul.f32 %v3009, %v3029
  %v3046 = vmul.f32 %v3010, %v3029
  %v3047 = vmul.f32 %v3011, %v3029
  %v3048 = vmul.f32 %v3012, %v3029
  %v3049 = vmul.f32 %v3013, %v3029
  %v3050 = vmul.f32 %v3014, %v3029
  %v3051 = vmul.f32 %v3015, %v3029
  %v3052 = vmul.f32 %v3016, %v3029
  %v3053 = vmul.f32 %v3017, %v3029
  %v3054 = vmul.f32 %v3018, %v3029
  %v3055 = vmul.f32 %v3019, %v3029
  %v3056 = vmul.f32 %v3020, %v3029
  %v3057 = vmul.f32 %v3021, %v3029
  %v3058 = vmul.f32 %v3022, %v3029
  %v3059 = vmul.f32 %v3023, %v3029
  %v3060 = vmul.f32 %v3024, %v3029
  %v3061 = vmul.f32 %v3025, %v3029
  %v3062 = vlaneseq
  %v3063 = vshrl.u32 %v3062, 7
  %v3064 = vsub.s32 0, %v3063
  %v3065 = vrot.slane %v2127, %v3064
  %v3066 = vadd.f32 %v3030, %v3065
  %v3067 = vadd.f32 %v3031, %v3065
  %v3068 = vadd.f32 %v3032, %v3065
  %v3069 = vadd.f32 %v3033, %v3065
  %v3070 = vadd.f32 %v3034, %v3065
  %v3071 = vadd.f32 %v3035, %v3065
  %v3072 = vadd.f32 %v3036, %v3065
  %v3073 = vadd.f32 %v3037, %v3065
  %v3074 = vadd.f32 %v3038, %v3065
  %v3075 = vadd.f32 %v3039, %v3065
  %v3076 = vadd.f32 %v3040, %v3065
  %v3077 = vadd.f32 %v3041, %v3065
  %v3078 = vadd.f32 %v3042, %v3065
  %v3079 = vadd.f32 %v3043, %v3065
  %v3080 = vadd.f32 %v3044, %v3065
  %v3081 = vadd.f32 %v3045, %v3065
  %v3082 = vadd.f32 %v3046, %v3065
  %v3083 = vadd.f32 %v3047, %v3065
  %v3084 = vadd.f32 %v3048, %v3065
  %v3085 = vadd.f32 %v3049, %v3065
  %v3086 = vadd.f32 %v3050, %v3065
  %v3087 = vadd.f32 %v3051, %v3065
  %v3088 = vadd.f32 %v3052, %v3065
  %v3089 = vadd.f32 %v3053, %v3065
  %v3090 = vadd.f32 %v3054, %v3065
  %v3091 = vadd.f32 %v3055, %v3065
  %v3092 = vadd.f32 %v3056, %v3065
  %v3093 = vadd.f32 %v3057, %v3065
  %v3094 = vadd.f32 %v3058, %v3065
  %v3095 = vadd.f32 %v3059, %v3065
  %v3096 = vadd.f32 %v3060, %v3065
  %v3097 = vadd.f32 %v3061, %v3065
  %v3098 = vmin.f32 %v3066, 20.0
  %v3099 = vmin.f32 %v3067, 20.0
  %v3100 = vmin.f32 %v3068, 20.0
  %v3101 = vmin.f32 %v3069, 20.0
  %v3102 = vmin.f32 %v3070, 20.0
  %v3103 = vmin.f32 %v3071, 20.0
  %v3104 = vmin.f32 %v3072, 20.0
  %v3105 = vmin.f32 %v3073, 20.0
  %v3106 = vmin.f32 %v3074, 20.0
  %v3107 = vmin.f32 %v3075, 20.0
  %v3108 = vmin.f32 %v3076, 20.0
  %v3109 = vmin.f32 %v3077, 20.0
  %v3110 = vmin.f32 %v3078, 20.0
  %v3111 = vmin.f32 %v3079, 20.0
  %v3112 = vmin.f32 %v3080, 20.0
  %v3113 = vmin.f32 %v3081, 20.0
  %v3114 = vmin.f32 %v3082, 20.0
  %v3115 = vmin.f32 %v3083, 20.0
  %v3116 = vmin.f32 %v3084, 20.0
  %v3117 = vmin.f32 %v3085, 20.0
  %v3118 = vmin.f32 %v3086, 20.0
  %v3119 = vmin.f32 %v3087, 20.0
  %v3120 = vmin.f32 %v3088, 20.0
  %v3121 = vmin.f32 %v3089, 20.0
  %v3122 = vmin.f32 %v3090, 20.0
  %v3123 = vmin.f32 %v3091, 20.0
  %v3124 = vmin.f32 %v3092, 20.0
  %v3125 = vmin.f32 %v3093, 20.0
  %v3126 = vmin.f32 %v3094, 20.0
  %v3127 = vmin.f32 %v3095, 20.0
  %v3128 = vmin.f32 %v3096, 20.0
  %v3129 = vmin.f32 %v3097, 20.0
  %v3130 = vmul.f32 %v3098, 1.442695
  %v3131 = vpow.pop %v3130
  %v3132 = vmul.f32 %v3099, 1.442695
  %v3133 = vpow.pop %v3132
  %v3134 = vmul.f32 %v3100, 1.442695
  %v3135 = vpow.pop %v3134
  %v3136 = vmul.f32 %v3101, 1.442695
  %v3137 = vpow.pop %v3136
  %v3138 = vmul.f32 %v3102, 1.442695
  %v3139 = vpow.pop %v3138
  %v3140 = vmul.f32 %v3103, 1.442695
  %v3141 = vpow.pop %v3140
  %v3142 = vmul.f32 %v3104, 1.442695
  %v3143 = vpow.pop %v3142
  %v3144 = vmul.f32 %v3105, 1.442695
  %v3145 = vpow.pop %v3144
  %v3146 = vmul.f32 %v3106, 1.442695
  %v3147 = vpow.pop %v3146
  %v3148 = vmul.f32 %v3107, 1.442695
  %v3149 = vpow.pop %v3148
  %v3150 = vmul.f32 %v3108, 1.442695
  %v3151 = vpow.pop %v3150
  %v3152 = vmul.f32 %v3109, 1.442695
  %v3153 = vpow.pop %v3152
  %v3154 = vmul.f32 %v3110, 1.442695
  %v3155 = vpow.pop %v3154
  %v3156 = vmul.f32 %v3111, 1.442695
  %v3157 = vpow.pop %v3156
  %v3158 = vmul.f32 %v3112, 1.442695
  %v3159 = vpow.pop %v3158
  %v3160 = vmul.f32 %v3113, 1.442695
  %v3161 = vpow.pop %v3160
  %v3162 = vmul.f32 %v3114, 1.442695
  %v3163 = vpow.pop %v3162
  %v3164 = vmul.f32 %v3115, 1.442695
  %v3165 = vpow.pop %v3164
  %v3166 = vmul.f32 %v3116, 1.442695
  %v3167 = vpow.pop %v3166
  %v3168 = vmul.f32 %v3117, 1.442695
  %v3169 = vpow.pop %v3168
  %v3170 = vmul.f32 %v3118, 1.442695
  %v3171 = vpow.pop %v3170
  %v3172 = vmul.f32 %v3119, 1.442695
  %v3173 = vpow.pop %v3172
  %v3174 = vmul.f32 %v3120, 1.442695
  %v3175 = vpow.pop %v3174
  %v3176 = vmul.f32 %v3121, 1.442695
  %v3177 = vpow.pop %v3176
  %v3178 = vmul.f32 %v3122, 1.442695
  %v3179 = vpow.pop %v3178
  %v3180 = vmul.f32 %v3123, 1.442695
  %v3181 = vpow.pop %v3180
  %v3182 = vmul.f32 %v3124, 1.442695
  %v3183 = vpow.pop %v3182
  %v3184 = vmul.f32 %v3125, 1.442695
  %v3185 = vpow.pop %v3184
  %v3186 = vmul.f32 %v3126, 1.442695
  %v3187 = vpow.pop %v3186
  %v3188 = vmul.f32 %v3127, 1.442695
  %v3189 = vpow.pop %v3188
  %v3190 = vmul.f32 %v3128, 1.442695
  %v3191 = vpow.pop %v3190
  %v3192 = vmul.f32 %v3129, 1.442695
  %v3193 = vpow.pop %v3192
  %v3194 = vadd.f32 %v3131, 2.0
  %v3195 = vadd.f32 %v3133, 2.0
  %v3196 = vadd.f32 %v3135, 2.0
  %v3197 = vadd.f32 %v3137, 2.0
  %v3198 = vadd.f32 %v3139, 2.0
  %v3199 = vadd.f32 %v3141, 2.0
  %v3200 = vadd.f32 %v3143, 2.0
  %v3201 = vadd.f32 %v3145, 2.0
  %v3202 = vadd.f32 %v3147, 2.0
  %v3203 = vadd.f32 %v3149, 2.0
  %v3204 = vadd.f32 %v3151, 2.0
  %v3205 = vadd.f32 %v3153, 2.0
  %v3206 = vadd.f32 %v3155, 2.0
  %v3207 = vadd.f32 %v3157, 2.0
  %v3208 = vadd.f32 %v3159, 2.0
  %v3209 = vadd.f32 %v3161, 2.0
  %v3210 = vadd.f32 %v3163, 2.0
  %v3211 = vadd.f32 %v3165, 2.0
  %v3212 = vadd.f32 %v3167, 2.0
  %v3213 = vadd.f32 %v3169, 2.0
  %v3214 = vadd.f32 %v3171, 2.0
  %v3215 = vadd.f32 %v3173, 2.0
  %v3216 = vadd.f32 %v3175, 2.0
  %v3217 = vadd.f32 %v3177, 2.0
  %v3218 = vadd.f32 %v3179, 2.0
  %v3219 = vadd.f32 %v3181, 2.0
  %v3220 = vadd.f32 %v3183, 2.0
  %v3221 = vadd.f32 %v3185, 2.0
  %v3222 = vadd.f32 %v3187, 2.0
  %v3223 = vadd.f32 %v3189, 2.0
  %v3224 = vadd.f32 %v3191, 2.0
  %v3225 = vadd.f32 %v3193, 2.0
  %v3226 = vmul.f32 %v3131, %v3194
  %v3227 = vmul.f32 %v3133, %v3195
  %v3228 = vmul.f32 %v3135, %v3196
  %v3229 = vmul.f32 %v3137, %v3197
  %v3230 = vmul.f32 %v3139, %v3198
  %v3231 = vmul.f32 %v3141, %v3199
  %v3232 = vmul.f32 %v3143, %v3200
  %v3233 = vmul.f32 %v3145, %v3201
  %v3234 = vmul.f32 %v3147, %v3202
  %v3235 = vmul.f32 %v3149, %v3203
  %v3236 = vmul.f32 %v3151, %v3204
  %v3237 = vmul.f32 %v3153, %v3205
  %v3238 = vmul.f32 %v3155, %v3206
  %v3239 = vmul.f32 %v3157, %v3207
  %v3240 = vmul.f32 %v3159, %v3208
  %v3241 = vmul.f32 %v3161, %v3209
  %v3242 = vmul.f32 %v3163, %v3210
  %v3243 = vmul.f32 %v3165, %v3211
  %v3244 = vmul.f32 %v3167, %v3212
  %v3245 = vmul.f32 %v3169, %v3213
  %v3246 = vmul.f32 %v3171, %v3214
  %v3247 = vmul.f32 %v3173, %v3215
  %v3248 = vmul.f32 %v3175, %v3216
  %v3249 = vmul.f32 %v3177, %v3217
  %v3250 = vmul.f32 %v3179, %v3218
  %v3251 = vmul.f32 %v3181, %v3219
  %v3252 = vmul.f32 %v3183, %v3220
  %v3253 = vmul.f32 %v3185, %v3221
  %v3254 = vmul.f32 %v3187, %v3222
  %v3255 = vmul.f32 %v3189, %v3223
  %v3256 = vmul.f32 %v3191, %v3224
  %v3257 = vmul.f32 %v3193, %v3225
  %v3258 = vmul.f32 %v3066, %v3226
  %v3259 = vmul.f32 %v3067, %v3227
  %v3260 = vmul.f32 %v3068, %v3228
  %v3261 = vmul.f32 %v3069, %v3229
  %v3262 = vmul.f32 %v3070, %v3230
  %v3263 = vmul.f32 %v3071, %v3231
  %v3264 = vmul.f32 %v3072, %v3232
  %v3265 = vmul.f32 %v3073, %v3233
  %v3266 = vmul.f32 %v3074, %v3234
  %v3267 = vmul.f32 %v3075, %v3235
  %v3268 = vmul.f32 %v3076, %v3236
  %v3269 = vmul.f32 %v3077, %v3237
  %v3270 = vmul.f32 %v3078, %v3238
  %v3271 = vmul.f32 %v3079, %v3239
  %v3272 = vmul.f32 %v3080, %v3240
  %v3273 = vmul.f32 %v3081, %v3241
  %v3274 = vmul.f32 %v3082, %v3242
  %v3275 = vmul.f32 %v3083, %v3243
  %v3276 = vmul.f32 %v3084, %v3244
  %v3277 = vmul.f32 %v3085, %v3245
  %v3278 = vmul.f32 %v3086, %v3246
  %v3279 = vmul.f32 %v3087, %v3247
  %v3280 = vmul.f32 %v3088, %v3248
  %v3281 = vmul.f32 %v3089, %v3249
  %v3282 = vmul.f32 %v3090, %v3250
  %v3283 = vmul.f32 %v3091, %v3251
  %v3284 = vmul.f32 %v3092, %v3252
  %v3285 = vmul.f32 %v3093, %v3253
  %v3286 = vmul.f32 %v3094, %v3254
  %v3287 = vmul.f32 %v3095, %v3255
  %v3288 = vmul.f32 %v3096, %v3256
  %v3289 = vmul.f32 %v3097, %v3257
  %v3290 = vadd.f32 %v3226, 2.0
  %v3291 = vadd.f32 %v3227, 2.0
  %v3292 = vadd.f32 %v3228, 2.0
  %v3293 = vadd.f32 %v3229, 2.0
  %v3294 = vadd.f32 %v3230, 2.0
  %v3295 = vadd.f32 %v3231, 2.0
  %v3296 = vadd.f32 %v3232, 2.0
  %v3297 = vadd.f32 %v3233, 2.0
  %v3298 = vadd.f32 %v3234, 2.0
  %v3299 = vadd.f32 %v3235, 2.0
  %v3300 = vadd.f32 %v3236, 2.0
  %v3301 = vadd.f32 %v3237, 2.0
  %v3302 = vadd.f32 %v3238, 2.0
  %v3303 = vadd.f32 %v3239, 2.0
  %v3304 = vadd.f32 %v3240, 2.0
  %v3305 = vadd.f32 %v3241, 2.0
  %v3306 = vadd.f32 %v3242, 2.0
  %v3307 = vadd.f32 %v3243, 2.0
  %v3308 = vadd.f32 %v3244, 2.0
  %v3309 = vadd.f32 %v3245, 2.0
  %v3310 = vadd.f32 %v3246, 2.0
  %v3311 = vadd.f32 %v3247, 2.0
  %v3312 = vadd.f32 %v3248, 2.0
  %v3313 = vadd.f32 %v3249, 2.0
  %v3314 = vadd.f32 %v3250, 2.0
  %v3315 = vadd.f32 %v3251, 2.0
  %v3316 = vadd.f32 %v3252, 2.0
  %v3317 = vadd.f32 %v3253, 2.0
  %v3318 = vadd.f32 %v3254, 2.0
  %v3319 = vadd.f32 %v3255, 2.0
  %v3320 = vadd.f32 %v3256, 2.0
  %v3321 = vadd.f32 %v3257, 2.0
  %v3322 = vrcp.pop %v3290
  %v3323 = vrcp.pop %v3291
  %v3324 = vrcp.pop %v3292
  %v3325 = vrcp.pop %v3293
  %v3326 = vrcp.pop %v3294
  %v3327 = vrcp.pop %v3295
  %v3328 = vrcp.pop %v3296
  %v3329 = vrcp.pop %v3297
  %v3330 = vrcp.pop %v3298
  %v3331 = vrcp.pop %v3299
  %v3332 = vrcp.pop %v3300
  %v3333 = vrcp.pop %v3301
  %v3334 = vrcp.pop %v3302
  %v3335 = vrcp.pop %v3303
  %v3336 = vrcp.pop %v3304
  %v3337 = vrcp.pop %v3305
  %v3338 = vrcp.pop %v3306
  %v3339 = vrcp.pop %v3307
  %v3340 = vrcp.pop %v3308
  %v3341 = vrcp.pop %v3309
  %v3342 = vrcp.pop %v3310
  %v3343 = vrcp.pop %v3311
  %v3344 = vrcp.pop %v3312
  %v3345 = vrcp.pop %v3313
  %v3346 = vrcp.pop %v3314
  %v3347 = vrcp.pop %v3315
  %v3348 = vrcp.pop %v3316
  %v3349 = vrcp.pop %v3317
  %v3350 = vrcp.pop %v3318
  %v3351 = vrcp.pop %v3319
  %v3352 = vrcp.pop %v3320
  %v3353 = vrcp.pop %v3321
  %v3354 = vmul.f32 %v3258, %v3322
  %v3355 = vmul.f32 %v3259, %v3323
  %v3356 = vmul.f32 %v3260, %v3324
  %v3357 = vmul.f32 %v3261, %v3325
  %v3358 = vmul.f32 %v3262, %v3326
  %v3359 = vmul.f32 %v3263, %v3327
  %v3360 = vmul.f32 %v3264, %v3328
  %v3361 = vmul.f32 %v3265, %v3329
  %v3362 = vmul.f32 %v3266, %v3330
  %v3363 = vmul.f32 %v3267, %v3331
  %v3364 = vmul.f32 %v3268, %v3332
  %v3365 = vmul.f32 %v3269, %v3333
  %v3366 = vmul.f32 %v3270, %v3334
  %v3367 = vmul.f32 %v3271, %v3335
  %v3368 = vmul.f32 %v3272, %v3336
  %v3369 = vmul.f32 %v3273, %v3337
  %v3370 = vmul.f32 %v3274, %v3338
  %v3371 = vmul.f32 %v3275, %v3339
  %v3372 = vmul.f32 %v3276, %v3340
  %v3373 = vmul.f32 %v3277, %v3341
  %v3374 = vmul.f32 %v3278, %v3342
  %v3375 = vmul.f32 %v3279, %v3343
  %v3376 = vmul.f32 %v3280, %v3344
  %v3377 = vmul.f32 %v3281, %v3345
  %v3378 = vmul.f32 %v3282, %v3346
  %v3379 = vmul.f32 %v3283, %v3347
  %v3380 = vmul.f32 %v3284, %v3348
  %v3381 = vmul.f32 %v3285, %v3349
  %v3382 = vmul.f32 %v3286, %v3350
  %v3383 = vmul.f32 %v3287, %v3351
  %v3384 = vmul.f32 %v3288, %v3352
  %v3385 = vmul.f32 %v3289, %v3353
  %vm3386 = vcmp.gt.f32.partialorder %v3066, 20.0
  %vm3387 = vcmp.gt.f32.partialorder %v3067, 20.0
  %vm3388 = vcmp.gt.f32.partialorder %v3068, 20.0
  %vm3389 = vcmp.gt.f32.partialorder %v3069, 20.0
  %vm3390 = vcmp.gt.f32.partialorder %v3070, 20.0
  %vm3391 = vcmp.gt.f32.partialorder %v3071, 20.0
  %vm3392 = vcmp.gt.f32.partialorder %v3072, 20.0
  %vm3393 = vcmp.gt.f32.partialorder %v3073, 20.0
  %vm3394 = vcmp.gt.f32.partialorder %v3074, 20.0
  %vm3395 = vcmp.gt.f32.partialorder %v3075, 20.0
  %vm3396 = vcmp.gt.f32.partialorder %v3076, 20.0
  %vm3397 = vcmp.gt.f32.partialorder %v3077, 20.0
  %vm3398 = vcmp.gt.f32.partialorder %v3078, 20.0
  %vm3399 = vcmp.gt.f32.partialorder %v3079, 20.0
  %vm3400 = vcmp.gt.f32.partialorder %v3080, 20.0
  %vm3401 = vcmp.gt.f32.partialorder %v3081, 20.0
  %vm3402 = vcmp.gt.f32.partialorder %v3082, 20.0
  %vm3403 = vcmp.gt.f32.partialorder %v3083, 20.0
  %vm3404 = vcmp.gt.f32.partialorder %v3084, 20.0
  %vm3405 = vcmp.gt.f32.partialorder %v3085, 20.0
  %vm3406 = vcmp.gt.f32.partialorder %v3086, 20.0
  %vm3407 = vcmp.gt.f32.partialorder %v3087, 20.0
  %vm3408 = vcmp.gt.f32.partialorder %v3088, 20.0
  %vm3409 = vcmp.gt.f32.partialorder %v3089, 20.0
  %vm3410 = vcmp.gt.f32.partialorder %v3090, 20.0
  %vm3411 = vcmp.gt.f32.partialorder %v3091, 20.0
  %vm3412 = vcmp.gt.f32.partialorder %v3092, 20.0
  %vm3413 = vcmp.gt.f32.partialorder %v3093, 20.0
  %vm3414 = vcmp.gt.f32.partialorder %v3094, 20.0
  %vm3415 = vcmp.gt.f32.partialorder %v3095, 20.0
  %vm3416 = vcmp.gt.f32.partialorder %v3096, 20.0
  %vm3417 = vcmp.gt.f32.partialorder %v3097, 20.0
  %v3418 = vsel %vm3386, %v3066, %v3354
  %v3419 = vsel %vm3387, %v3067, %v3355
  %v3420 = vsel %vm3388, %v3068, %v3356
  %v3421 = vsel %vm3389, %v3069, %v3357
  %v3422 = vsel %vm3390, %v3070, %v3358
  %v3423 = vsel %vm3391, %v3071, %v3359
  %v3424 = vsel %vm3392, %v3072, %v3360
  %v3425 = vsel %vm3393, %v3073, %v3361
  %v3426 = vsel %vm3394, %v3074, %v3362
  %v3427 = vsel %vm3395, %v3075, %v3363
  %v3428 = vsel %vm3396, %v3076, %v3364
  %v3429 = vsel %vm3397, %v3077, %v3365
  %v3430 = vsel %vm3398, %v3078, %v3366
  %v3431 = vsel %vm3399, %v3079, %v3367
  %v3432 = vsel %vm3400, %v3080, %v3368
  %v3433 = vsel %vm3401, %v3081, %v3369
  %v3434 = vsel %vm3402, %v3082, %v3370
  %v3435 = vsel %vm3403, %v3083, %v3371
  %v3436 = vsel %vm3404, %v3084, %v3372
  %v3437 = vsel %vm3405, %v3085, %v3373
  %v3438 = vsel %vm3406, %v3086, %v3374
  %v3439 = vsel %vm3407, %v3087, %v3375
  %v3440 = vsel %vm3408, %v3088, %v3376
  %v3441 = vsel %vm3409, %v3089, %v3377
  %v3442 = vsel %vm3410, %v3090, %v3378
  %v3443 = vsel %vm3411, %v3091, %v3379
  %v3444 = vsel %vm3412, %v3092, %v3380
  %v3445 = vsel %vm3413, %v3093, %v3381
  %v3446 = vsel %vm3414, %v3094, %v3382
  %v3447 = vsel %vm3415, %v3095, %v3383
  %v3448 = vsel %vm3416, %v3096, %v3384
  %v3449 = vsel %vm3417, %v3097, %v3385
  %s3450 = scalar_lea.vmem %s4, 64
  %v3451 = vld [vmem:[%s3450] sm:$0xff]
  %v3452 = vld [vmem:[%s3450 + $0x8] sm:$0xff]
  %v3453 = vld [vmem:[%s3450 + $0x10] sm:$0xff]
  %v3454 = vld [vmem:[%s3450 + $0x18] sm:$0xff]
  %v3455 = vld [vmem:[%s3450 + $0x20] sm:$0xff]
  %v3456 = vld [vmem:[%s3450 + $0x28] sm:$0xff]
  %v3457 = vld [vmem:[%s3450 + $0x30] sm:$0xff]
  %v3458 = vld [vmem:[%s3450 + $0x38] sm:$0xff]
  %v3459 = vld [vmem:[%s5 + $0x6] sm:$0x1]
  %v3460 = vlaneseq
  %v3461 = vshrl.u32 %v3460, 7
  %v3462 = vsub.s32 0, %v3461
  %v3463 = vrot.slane %v3459, %v3462
  %v3465 = vsel %vm789, %v3418, 0
  %v3468 = vsel %vm789, %v3419, 0
  %v3471 = vsel %vm789, %v3420, 0
  %v3474 = vsel %vm789, %v3421, 0
  %v3477 = vsel %vm789, %v3422, 0
  %v3480 = vsel %vm789, %v3423, 0
  %v3483 = vsel %vm789, %v3424, 0
  %v3486 = vsel %vm789, %v3425, 0
  %v3489 = vsel %vm789, %v3426, 0
  %v3492 = vsel %vm789, %v3427, 0
  %v3495 = vsel %vm789, %v3428, 0
  %v3498 = vsel %vm789, %v3429, 0
  %v3501 = vsel %vm789, %v3430, 0
  %v3504 = vsel %vm789, %v3431, 0
  %v3507 = vsel %vm789, %v3432, 0
  %v3510 = vsel %vm789, %v3433, 0
  %v3513 = vsel %vm789, %v3434, 0
  %v3516 = vsel %vm789, %v3435, 0
  %v3519 = vsel %vm789, %v3436, 0
  %v3522 = vsel %vm789, %v3437, 0
  %v3525 = vsel %vm789, %v3438, 0
  %v3528 = vsel %vm789, %v3439, 0
  %v3531 = vsel %vm789, %v3440, 0
  %v3534 = vsel %vm789, %v3441, 0
  %v3537 = vsel %vm789, %v3442, 0
  %v3540 = vsel %vm789, %v3443, 0
  %v3543 = vsel %vm789, %v3444, 0
  %v3546 = vsel %vm789, %v3445, 0
  %v3549 = vsel %vm789, %v3446, 0
  %v3552 = vsel %vm789, %v3447, 0
  %v3555 = vsel %vm789, %v3448, 0
  %v3558 = vsel %vm789, %v3449, 0
  %3560 = vmatprep.subr.mxu0 0.0
  %3561 = vmatpush1.msra.mxu0 %v3451
  %3562 = vmatprep.subr.mxu0 0.0
  %3563 = vmatpush1.msra.mxu0 %v3452
  %3564 = vmatprep.subr.mxu0 0.0
  %3565 = vmatpush1.msra.mxu0 %v3453
  %3566 = vmatprep.subr.mxu0 0.0
  %3567 = vmatpush1.msra.mxu0 %v3454
  %3568 = vmatprep.subr.mxu0 0.0
  %3569 = vmatpush1.msra.mxu0 %v3455
  %3570 = vmatprep.subr.mxu0 0.0
  %3571 = vmatpush1.msra.mxu0 %v3456
  %3572 = vmatprep.subr.mxu0 0.0
  %3573 = vmatpush1.msra.mxu0 %v3457
  %3574 = vmatprep.subr.mxu0 0.0
  %3575 = vmatpush1.msra.mxu0 %v3458
  %3576 = vmatprep.subr.mxu0 0.0
  %3577 = vmatpush1.msra.mxu0 0.0
  %3578 = vmatprep.subr.mxu0 0.0
  %3579 = vmatpush1.msra.mxu0 0.0
  %3580 = vmatprep.subr.mxu0 0.0
  %3581 = vmatpush1.msra.mxu0 0.0
  %3582 = vmatprep.subr.mxu0 0.0
  %3583 = vmatpush1.msra.mxu0 0.0
  %3584 = vmatprep.subr.mxu0 0.0
  %3585 = vmatpush1.msra.mxu0 0.0
  %3586 = vmatprep.subr.mxu0 0.0
  %3587 = vmatpush1.msra.mxu0 0.0
  %3588 = vmatprep.subr.mxu0 0.0
  %3589 = vmatpush1.msra.mxu0 0.0
  %3590 = vmatprep.subr.mxu0 0.0
  %3591 = vmatpush1.msra.mxu0 0.0
  %3592 = vmatprep.subr.mxu0 0.0
  %3593 = vmatpush1.msra.mxu0 0.0
  %3594 = vmatprep.subr.mxu0 0.0
  %3595 = vmatpush1.msra.mxu0 0.0
  %3596 = vmatprep.subr.mxu0 0.0
  %3597 = vmatpush1.msra.mxu0 0.0
  %3598 = vmatprep.subr.mxu0 0.0
  %3599 = vmatpush1.msra.mxu0 0.0
  %3600 = vmatprep.subr.mxu0 0.0
  %3601 = vmatpush1.msra.mxu0 0.0
  %3602 = vmatprep.subr.mxu0 0.0
  %3603 = vmatpush1.msra.mxu0 0.0
  %3604 = vmatprep.subr.mxu0 0.0
  %3605 = vmatpush1.msra.mxu0 0.0
  %3606 = vmatprep.subr.mxu0 0.0
  %3607 = vmatpush1.msra.mxu0 0.0
  %3608 = vmatprep.subr.mxu0 0.0
  %3609 = vmatpush1.msra.mxu0 0.0
  %3610 = vmatprep.subr.mxu0 0.0
  %3611 = vmatpush1.msra.mxu0 0.0
  %3612 = vmatprep.subr.mxu0 0.0
  %3613 = vmatpush1.msra.mxu0 0.0
  %3614 = vmatprep.subr.mxu0 0.0
  %3615 = vmatpush1.msra.mxu0 0.0
  %3616 = vmatprep.subr.mxu0 0.0
  %3617 = vmatpush1.msra.mxu0 0.0
  %3618 = vmatprep.subr.mxu0 0.0
  %3619 = vmatpush1.msra.mxu0 0.0
  %3620 = vmatprep.subr.mxu0 0.0
  %3621 = vmatpush1.msra.mxu0 0.0
  %3622 = vmatprep.subr.mxu0 0.0
  %3623 = vmatpush1.msra.mxu0 0.0
  %3624 = vmatprep.mubr.f32.mxu0 0.0
  %3625 = vmatmul.mubr.f32.gmra.mrb[0].mxu0 %v3465
  %v3626 = vpop.f32.mrb[0].mxu0
  %v3627 = vadd.f32 %v3463, %v3626
  %v3628 = vpop.f32.mrb[0].mxu0
  %3629 = vmatprep.mubr.f32.mxu0 0.0
  %3630 = vmatmul.mubr.f32.gmra.mrb[0].mxu0 %v3468
  %v3631 = vpop.f32.mrb[0].mxu0
  %v3632 = vadd.f32 %v3463, %v3631
  %v3633 = vpop.f32.mrb[0].mxu0
  %3634 = vmatprep.mubr.f32.mxu0 0.0
  %3635 = vmatmul.mubr.f32.gmra.mrb[0].mxu0 %v3471
  %v3636 = vpop.f32.mrb[0].mxu0
  %v3637 = vadd.f32 %v3463, %v3636
  %v3638 = vpop.f32.mrb[0].mxu0
  %3639 = vmatprep.mubr.f32.mxu0 0.0
  %3640 = vmatmul.mubr.f32.gmra.mrb[0].mxu0 %v3474
  %v3641 = vpop.f32.mrb[0].mxu0
  %v3642 = vadd.f32 %v3463, %v3641
  %v3643 = vpop.f32.mrb[0].mxu0
  %3644 = vmatprep.mubr.f32.mxu0 0.0
  %3645 = vmatmul.mubr.f32.gmra.mrb[0].mxu0 %v3477
  %v3646 = vpop.f32.mrb[0].mxu0
  %v3647 = vadd.f32 %v3463, %v3646
  %v3648 = vpop.f32.mrb[0].mxu0
  %3649 = vmatprep.mubr.f32.mxu0 0.0
  %3650 = vmatmul.mubr.f32.gmra.mrb[0].mxu0 %v3480
  %v3651 = vpop.f32.mrb[0].mxu0
  %v3652 = vadd.f32 %v3463, %v3651
  %v3653 = vpop.f32.mrb[0].mxu0
  %3654 = vmatprep.mubr.f32.mxu0 0.0
  %3655 = vmatmul.mubr.f32.gmra.mrb[0].mxu0 %v3483
  %v3656 = vpop.f32.mrb[0].mxu0
  %v3657 = vadd.f32 %v3463, %v3656
  %v3658 = vpop.f32.mrb[0].mxu0
  %3659 = vmatprep.mubr.f32.mxu0 0.0
  %3660 = vmatmul.mubr.f32.gmra.mrb[0].mxu0 %v3486
  %v3661 = vpop.f32.mrb[0].mxu0
  %v3662 = vadd.f32 %v3463, %v3661
  %v3663 = vpop.f32.mrb[0].mxu0
  %3664 = vmatprep.mubr.f32.mxu0 0.0
  %3665 = vmatmul.mubr.f32.gmra.mrb[0].mxu0 %v3489
  %v3666 = vpop.f32.mrb[0].mxu0
  %v3667 = vadd.f32 %v3463, %v3666
  %v3668 = vpop.f32.mrb[0].mxu0
  %3669 = vmatprep.mubr.f32.mxu0 0.0
  %3670 = vmatmul.mubr.f32.gmra.mrb[0].mxu0 %v3492
  %v3671 = vpop.f32.mrb[0].mxu0
  %v3672 = vadd.f32 %v3463, %v3671
  %v3673 = vpop.f32.mrb[0].mxu0
  %3674 = vmatprep.mubr.f32.mxu0 0.0
  %3675 = vmatmul.mubr.f32.gmra.mrb[0].mxu0 %v3495
  %v3676 = vpop.f32.mrb[0].mxu0
  %v3677 = vadd.f32 %v3463, %v3676
  %v3678 = vpop.f32.mrb[0].mxu0
  %3679 = vmatprep.mubr.f32.mxu0 0.0
  %3680 = vmatmul.mubr.f32.gmra.mrb[0].mxu0 %v3498
  %v3681 = vpop.f32.mrb[0].mxu0
  %v3682 = vadd.f32 %v3463, %v3681
  %v3683 = vpop.f32.mrb[0].mxu0
  %3684 = vmatprep.mubr.f32.mxu0 0.0
  %3685 = vmatmul.mubr.f32.gmra.mrb[0].mxu0 %v3501
  %v3686 = vpop.f32.mrb[0].mxu0
  %v3687 = vadd.f32 %v3463, %v3686
  %v3688 = vpop.f32.mrb[0].mxu0
  %3689 = vmatprep.mubr.f32.mxu0 0.0
  %3690 = vmatmul.mubr.f32.gmra.mrb[0].mxu0 %v3504
  %v3691 = vpop.f32.mrb[0].mxu0
  %v3692 = vadd.f32 %v3463, %v3691
  %v3693 = vpop.f32.mrb[0].mxu0
  %3694 = vmatprep.mubr.f32.mxu0 0.0
  %3695 = vmatmul.mubr.f32.gmra.mrb[0].mxu0 %v3507
  %v3696 = vpop.f32.mrb[0].mxu0
  %v3697 = vadd.f32 %v3463, %v3696
  %v3698 = vpop.f32.mrb[0].mxu0
  %3699 = vmatprep.mubr.f32.mxu0 0.0
  %3700 = vmatmul.mubr.f32.gmra.mrb[0].mxu0 %v3510
  %v3701 = vpop.f32.mrb[0].mxu0
  %v3702 = vadd.f32 %v3463, %v3701
  %v3703 = vpop.f32.mrb[0].mxu0
  %3704 = vmatprep.mubr.f32.mxu0 0.0
  %3705 = vmatmul.mubr.f32.gmra.mrb[0].mxu0 %v3513
  %v3706 = vpop.f32.mrb[0].mxu0
  %v3707 = vadd.f32 %v3463, %v3706
  %v3708 = vpop.f32.mrb[0].mxu0
  %3709 = vmatprep.mubr.f32.mxu0 0.0
  %3710 = vmatmul.mubr.f32.gmra.mrb[0].mxu0 %v3516
  %v3711 = vpop.f32.mrb[0].mxu0
  %v3712 = vadd.f32 %v3463, %v3711
  %v3713 = vpop.f32.mrb[0].mxu0
  %3714 = vmatprep.mubr.f32.mxu0 0.0
  %3715 = vmatmul.mubr.f32.gmra.mrb[0].mxu0 %v3519
  %v3716 = vpop.f32.mrb[0].mxu0
  %v3717 = vadd.f32 %v3463, %v3716
  %v3718 = vpop.f32.mrb[0].mxu0
  %3719 = vmatprep.mubr.f32.mxu0 0.0
  %3720 = vmatmul.mubr.f32.gmra.mrb[0].mxu0 %v3522
  %v3721 = vpop.f32.mrb[0].mxu0
  %v3722 = vadd.f32 %v3463, %v3721
  %v3723 = vpop.f32.mrb[0].mxu0
  %3724 = vmatprep.mubr.f32.mxu0 0.0
  %3725 = vmatmul.mubr.f32.gmra.mrb[0].mxu0 %v3525
  %v3726 = vpop.f32.mrb[0].mxu0
  %v3727 = vadd.f32 %v3463, %v3726
  %v3728 = vpop.f32.mrb[0].mxu0
  %3729 = vmatprep.mubr.f32.mxu0 0.0
  %3730 = vmatmul.mubr.f32.gmra.mrb[0].mxu0 %v3528
  %v3731 = vpop.f32.mrb[0].mxu0
  %v3732 = vadd.f32 %v3463, %v3731
  %v3733 = vpop.f32.mrb[0].mxu0
  %3734 = vmatprep.mubr.f32.mxu0 0.0
  %3735 = vmatmul.mubr.f32.gmra.mrb[0].mxu0 %v3531
  %v3736 = vpop.f32.mrb[0].mxu0
  %v3737 = vadd.f32 %v3463, %v3736
  %v3738 = vpop.f32.mrb[0].mxu0
  %3739 = vmatprep.mubr.f32.mxu0 0.0
  %3740 = vmatmul.mubr.f32.gmra.mrb[0].mxu0 %v3534
  %v3741 = vpop.f32.mrb[0].mxu0
  %v3742 = vadd.f32 %v3463, %v3741
  %v3743 = vpop.f32.mrb[0].mxu0
  %3744 = vmatprep.mubr.f32.mxu0 0.0
  %3745 = vmatmul.mubr.f32.gmra.mrb[0].mxu0 %v3537
  %v3746 = vpop.f32.mrb[0].mxu0
  %v3747 = vadd.f32 %v3463, %v3746
  %v3748 = vpop.f32.mrb[0].mxu0
  %3749 = vmatprep.mubr.f32.mxu0 0.0
  %3750 = vmatmul.mubr.f32.gmra.mrb[0].mxu0 %v3540
  %v3751 = vpop.f32.mrb[0].mxu0
  %v3752 = vadd.f32 %v3463, %v3751
  %v3753 = vpop.f32.mrb[0].mxu0
  %3754 = vmatprep.mubr.f32.mxu0 0.0
  %3755 = vmatmul.mubr.f32.gmra.mrb[0].mxu0 %v3543
  %v3756 = vpop.f32.mrb[0].mxu0
  %v3757 = vadd.f32 %v3463, %v3756
  %v3758 = vpop.f32.mrb[0].mxu0
  %3759 = vmatprep.mubr.f32.mxu0 0.0
  %3760 = vmatmul.mubr.f32.gmra.mrb[0].mxu0 %v3546
  %v3761 = vpop.f32.mrb[0].mxu0
  %v3762 = vadd.f32 %v3463, %v3761
  %v3763 = vpop.f32.mrb[0].mxu0
  %3764 = vmatprep.mubr.f32.mxu0 0.0
  %3765 = vmatmul.mubr.f32.gmra.mrb[0].mxu0 %v3549
  %v3766 = vpop.f32.mrb[0].mxu0
  %v3767 = vadd.f32 %v3463, %v3766
  %v3768 = vpop.f32.mrb[0].mxu0
  %3769 = vmatprep.mubr.f32.mxu0 0.0
  %3770 = vmatmul.mubr.f32.gmra.mrb[0].mxu0 %v3552
  %v3771 = vpop.f32.mrb[0].mxu0
  %v3772 = vadd.f32 %v3463, %v3771
  %v3773 = vpop.f32.mrb[0].mxu0
  %3774 = vmatprep.mubr.f32.mxu0 0.0
  %3775 = vmatmul.mubr.f32.gmra.mrb[0].mxu0 %v3555
  %v3776 = vpop.f32.mrb[0].mxu0
  %v3777 = vadd.f32 %v3463, %v3776
  %v3778 = vpop.f32.mrb[0].mxu0
  %3779 = vmatprep.mubr.f32.mxu0 0.0
  %3780 = vmatmul.mubr.f32.gmra.mrb[0].mxu0 %v3558
  %v3781 = vpop.f32.mrb[0].mxu0
  %v3782 = vadd.f32 %v3463, %v3781
  %v3783 = vpop.f32.mrb[0].mxu0
  %3784 = vdwg.mxu0
  %v3785 = vld [vmem:[%s5 + $0x7] sm:$0x1]
  %v3786 = vld [vmem:[%s5 + $0x8] sm:$0x1]
  %v3788 = vsel %vm789, %v3627, 0
  %v3791 = vsel %vm789, %v3632, 0
  %v3794 = vsel %vm789, %v3637, 0
  %v3797 = vsel %vm789, %v3642, 0
  %v3800 = vsel %vm789, %v3647, 0
  %v3803 = vsel %vm789, %v3652, 0
  %v3806 = vsel %vm789, %v3657, 0
  %v3809 = vsel %vm789, %v3662, 0
  %v3812 = vsel %vm789, %v3667, 0
  %v3815 = vsel %vm789, %v3672, 0
  %v3818 = vsel %vm789, %v3677, 0
  %v3821 = vsel %vm789, %v3682, 0
  %v3824 = vsel %vm789, %v3687, 0
  %v3827 = vsel %vm789, %v3692, 0
  %v3830 = vsel %vm789, %v3697, 0
  %v3833 = vsel %vm789, %v3702, 0
  %v3836 = vsel %vm789, %v3707, 0
  %v3839 = vsel %vm789, %v3712, 0
  %v3842 = vsel %vm789, %v3717, 0
  %v3845 = vsel %vm789, %v3722, 0
  %v3848 = vsel %vm789, %v3727, 0
  %v3851 = vsel %vm789, %v3732, 0
  %v3854 = vsel %vm789, %v3737, 0
  %v3857 = vsel %vm789, %v3742, 0
  %v3860 = vsel %vm789, %v3747, 0
  %v3863 = vsel %vm789, %v3752, 0
  %v3866 = vsel %vm789, %v3757, 0
  %v3869 = vsel %vm789, %v3762, 0
  %v3872 = vsel %vm789, %v3767, 0
  %v3875 = vsel %vm789, %v3772, 0
  %v3878 = vsel %vm789, %v3777, 0
  %v3881 = vsel %vm789, %v3782, 0
  %3883 = vmatprep.subr.mxu0 0.0
  %3884 = vmatpush1.msra.mxu0 %v30
  %3885 = vmatprep.subr.mxu0 0.0
  %3886 = vmatpush1.msra.mxu0 %v31
  %3887 = vmatprep.subr.mxu0 0.0
  %3888 = vmatpush1.msra.mxu0 %v32
  %3889 = vmatprep.subr.mxu0 0.0
  %3890 = vmatpush1.msra.mxu0 %v33
  %3891 = vmatprep.subr.mxu0 0.0
  %3892 = vmatpush1.msra.mxu0 %v34
  %3893 = vmatprep.subr.mxu0 0.0
  %3894 = vmatpush1.msra.mxu0 %v35
  %3895 = vmatprep.subr.mxu0 0.0
  %3896 = vmatpush1.msra.mxu0 %v36
  %3897 = vmatprep.subr.mxu0 0.0
  %3898 = vmatpush1.msra.mxu0 %v37
  %3899 = vmatprep.subr.mxu0 0.0
  %3900 = vmatpush1.msra.mxu0 0.0
  %3901 = vmatprep.subr.mxu0 0.0
  %3902 = vmatpush1.msra.mxu0 0.0
  %3903 = vmatprep.subr.mxu0 0.0
  %3904 = vmatpush1.msra.mxu0 0.0
  %3905 = vmatprep.subr.mxu0 0.0
  %3906 = vmatpush1.msra.mxu0 0.0
  %3907 = vmatprep.subr.mxu0 0.0
  %3908 = vmatpush1.msra.mxu0 0.0
  %3909 = vmatprep.subr.mxu0 0.0
  %3910 = vmatpush1.msra.mxu0 0.0
  %3911 = vmatprep.subr.mxu0 0.0
  %3912 = vmatpush1.msra.mxu0 0.0
  %3913 = vmatprep.subr.mxu0 0.0
  %3914 = vmatpush1.msra.mxu0 0.0
  %3915 = vmatprep.subr.mxu0 0.0
  %3916 = vmatpush1.msra.mxu0 0.0
  %3917 = vmatprep.subr.mxu0 0.0
  %3918 = vmatpush1.msra.mxu0 0.0
  %3919 = vmatprep.subr.mxu0 0.0
  %3920 = vmatpush1.msra.mxu0 0.0
  %3921 = vmatprep.subr.mxu0 0.0
  %3922 = vmatpush1.msra.mxu0 0.0
  %3923 = vmatprep.subr.mxu0 0.0
  %3924 = vmatpush1.msra.mxu0 0.0
  %3925 = vmatprep.subr.mxu0 0.0
  %3926 = vmatpush1.msra.mxu0 0.0
  %3927 = vmatprep.subr.mxu0 0.0
  %3928 = vmatpush1.msra.mxu0 0.0
  %3929 = vmatprep.subr.mxu0 0.0
  %3930 = vmatpush1.msra.mxu0 0.0
  %3931 = vmatprep.subr.mxu0 0.0
  %3932 = vmatpush1.msra.mxu0 0.0
  %3933 = vmatprep.subr.mxu0 0.0
  %3934 = vmatpush1.msra.mxu0 0.0
  %3935 = vmatprep.subr.mxu0 0.0
  %3936 = vmatpush1.msra.mxu0 0.0
  %3937 = vmatprep.subr.mxu0 0.0
  %3938 = vmatpush1.msra.mxu0 0.0
  %3939 = vmatprep.subr.mxu0 0.0
  %3940 = vmatpush1.msra.mxu0 0.0
  %3941 = vmatprep.subr.mxu0 0.0
  %3942 = vmatpush1.msra.mxu0 0.0
  %3943 = vmatprep.subr.mxu0 0.0
  %3944 = vmatpush1.msra.mxu0 0.0
  %3945 = vmatprep.subr.mxu0 0.0
  %3946 = vmatpush1.msra.mxu0 0.0
  %3947 = vmatprep.mubr.f32.mxu0 0.0
  %3948 = vmatmul.mubr.f32.gmra.mrb[0].mxu0 %v3788
  %v3949 = vpop.f32.mrb[0].mxu0
  %v3950 = vadd.f32 0.0, %v3949
  %v3951 = vpop.f32.mrb[0].mxu0
  %3952 = vmatprep.mubr.f32.mxu0 0.0
  %3953 = vmatmul.mubr.f32.gmra.mrb[0].mxu0 %v3791
  %v3954 = vpop.f32.mrb[0].mxu0
  %v3955 = vadd.f32 0.0, %v3954
  %v3956 = vpop.f32.mrb[0].mxu0
  %3957 = vmatprep.mubr.f32.mxu0 0.0
  %3958 = vmatmul.mubr.f32.gmra.mrb[0].mxu0 %v3794
  %v3959 = vpop.f32.mrb[0].mxu0
  %v3960 = vadd.f32 0.0, %v3959
  %v3961 = vpop.f32.mrb[0].mxu0
  %3962 = vmatprep.mubr.f32.mxu0 0.0
  %3963 = vmatmul.mubr.f32.gmra.mrb[0].mxu0 %v3797
  %v3964 = vpop.f32.mrb[0].mxu0
  %v3965 = vadd.f32 0.0, %v3964
  %v3966 = vpop.f32.mrb[0].mxu0
  %3967 = vmatprep.mubr.f32.mxu0 0.0
  %3968 = vmatmul.mubr.f32.gmra.mrb[0].mxu0 %v3800
  %v3969 = vpop.f32.mrb[0].mxu0
  %v3970 = vadd.f32 0.0, %v3969
  %v3971 = vpop.f32.mrb[0].mxu0
  %3972 = vmatprep.mubr.f32.mxu0 0.0
  %3973 = vmatmul.mubr.f32.gmra.mrb[0].mxu0 %v3803
  %v3974 = vpop.f32.mrb[0].mxu0
  %v3975 = vadd.f32 0.0, %v3974
  %v3976 = vpop.f32.mrb[0].mxu0
  %3977 = vmatprep.mubr.f32.mxu0 0.0
  %3978 = vmatmul.mubr.f32.gmra.mrb[0].mxu0 %v3806
  %v3979 = vpop.f32.mrb[0].mxu0
  %v3980 = vadd.f32 0.0, %v3979
  %v3981 = vpop.f32.mrb[0].mxu0
  %3982 = vmatprep.mubr.f32.mxu0 0.0
  %3983 = vmatmul.mubr.f32.gmra.mrb[0].mxu0 %v3809
  %v3984 = vpop.f32.mrb[0].mxu0
  %v3985 = vadd.f32 0.0, %v3984
  %v3986 = vpop.f32.mrb[0].mxu0
  %3987 = vmatprep.mubr.f32.mxu0 0.0
  %3988 = vmatmul.mubr.f32.gmra.mrb[0].mxu0 %v3812
  %v3989 = vpop.f32.mrb[0].mxu0
  %v3990 = vadd.f32 0.0, %v3989
  %v3991 = vpop.f32.mrb[0].mxu0
  %3992 = vmatprep.mubr.f32.mxu0 0.0
  %3993 = vmatmul.mubr.f32.gmra.mrb[0].mxu0 %v3815
  %v3994 = vpop.f32.mrb[0].mxu0
  %v3995 = vadd.f32 0.0, %v3994
  %v3996 = vpop.f32.mrb[0].mxu0
  %3997 = vmatprep.mubr.f32.mxu0 0.0
  %3998 = vmatmul.mubr.f32.gmra.mrb[0].mxu0 %v3818
  %v3999 = vpop.f32.mrb[0].mxu0
  %v4000 = vadd.f32 0.0, %v3999
  %v4001 = vpop.f32.mrb[0].mxu0
  %4002 = vmatprep.mubr.f32.mxu0 0.0
  %4003 = vmatmul.mubr.f32.gmra.mrb[0].mxu0 %v3821
  %v4004 = vpop.f32.mrb[0].mxu0
  %v4005 = vadd.f32 0.0, %v4004
  %v4006 = vpop.f32.mrb[0].mxu0
  %4007 = vmatprep.mubr.f32.mxu0 0.0
  %4008 = vmatmul.mubr.f32.gmra.mrb[0].mxu0 %v3824
  %v4009 = vpop.f32.mrb[0].mxu0
  %v4010 = vadd.f32 0.0, %v4009
  %v4011 = vpop.f32.mrb[0].mxu0
  %4012 = vmatprep.mubr.f32.mxu0 0.0
  %4013 = vmatmul.mubr.f32.gmra.mrb[0].mxu0 %v3827
  %v4014 = vpop.f32.mrb[0].mxu0
  %v4015 = vadd.f32 0.0, %v4014
  %v4016 = vpop.f32.mrb[0].mxu0
  %4017 = vmatprep.mubr.f32.mxu0 0.0
  %4018 = vmatmul.mubr.f32.gmra.mrb[0].mxu0 %v3830
  %v4019 = vpop.f32.mrb[0].mxu0
  %v4020 = vadd.f32 0.0, %v4019
  %v4021 = vpop.f32.mrb[0].mxu0
  %4022 = vmatprep.mubr.f32.mxu0 0.0
  %4023 = vmatmul.mubr.f32.gmra.mrb[0].mxu0 %v3833
  %v4024 = vpop.f32.mrb[0].mxu0
  %v4025 = vadd.f32 0.0, %v4024
  %v4026 = vpop.f32.mrb[0].mxu0
  %4027 = vmatprep.mubr.f32.mxu0 0.0
  %4028 = vmatmul.mubr.f32.gmra.mrb[0].mxu0 %v3836
  %v4029 = vpop.f32.mrb[0].mxu0
  %v4030 = vadd.f32 0.0, %v4029
  %v4031 = vpop.f32.mrb[0].mxu0
  %4032 = vmatprep.mubr.f32.mxu0 0.0
  %4033 = vmatmul.mubr.f32.gmra.mrb[0].mxu0 %v3839
  %v4034 = vpop.f32.mrb[0].mxu0
  %v4035 = vadd.f32 0.0, %v4034
  %v4036 = vpop.f32.mrb[0].mxu0
  %4037 = vmatprep.mubr.f32.mxu0 0.0
  %4038 = vmatmul.mubr.f32.gmra.mrb[0].mxu0 %v3842
  %v4039 = vpop.f32.mrb[0].mxu0
  %v4040 = vadd.f32 0.0, %v4039
  %v4041 = vpop.f32.mrb[0].mxu0
  %4042 = vmatprep.mubr.f32.mxu0 0.0
  %4043 = vmatmul.mubr.f32.gmra.mrb[0].mxu0 %v3845
  %v4044 = vpop.f32.mrb[0].mxu0
  %v4045 = vadd.f32 0.0, %v4044
  %v4046 = vpop.f32.mrb[0].mxu0
  %4047 = vmatprep.mubr.f32.mxu0 0.0
  %4048 = vmatmul.mubr.f32.gmra.mrb[0].mxu0 %v3848
  %v4049 = vpop.f32.mrb[0].mxu0
  %v4050 = vadd.f32 0.0, %v4049
  %v4051 = vpop.f32.mrb[0].mxu0
  %4052 = vmatprep.mubr.f32.mxu0 0.0
  %4053 = vmatmul.mubr.f32.gmra.mrb[0].mxu0 %v3851
  %v4054 = vpop.f32.mrb[0].mxu0
  %v4055 = vadd.f32 0.0, %v4054
  %v4056 = vpop.f32.mrb[0].mxu0
  %4057 = vmatprep.mubr.f32.mxu0 0.0
  %4058 = vmatmul.mubr.f32.gmra.mrb[0].mxu0 %v3854
  %v4059 = vpop.f32.mrb[0].mxu0
  %v4060 = vadd.f32 0.0, %v4059
  %v4061 = vpop.f32.mrb[0].mxu0
  %4062 = vmatprep.mubr.f32.mxu0 0.0
  %4063 = vmatmul.mubr.f32.gmra.mrb[0].mxu0 %v3857
  %v4064 = vpop.f32.mrb[0].mxu0
  %v4065 = vadd.f32 0.0, %v4064
  %v4066 = vpop.f32.mrb[0].mxu0
  %4067 = vmatprep.mubr.f32.mxu0 0.0
  %4068 = vmatmul.mubr.f32.gmra.mrb[0].mxu0 %v3860
  %v4069 = vpop.f32.mrb[0].mxu0
  %v4070 = vadd.f32 0.0, %v4069
  %v4071 = vpop.f32.mrb[0].mxu0
  %4072 = vmatprep.mubr.f32.mxu0 0.0
  %4073 = vmatmul.mubr.f32.gmra.mrb[0].mxu0 %v3863
  %v4074 = vpop.f32.mrb[0].mxu0
  %v4075 = vadd.f32 0.0, %v4074
  %v4076 = vpop.f32.mrb[0].mxu0
  %4077 = vmatprep.mubr.f32.mxu0 0.0
  %4078 = vmatmul.mubr.f32.gmra.mrb[0].mxu0 %v3866
  %v4079 = vpop.f32.mrb[0].mxu0
  %v4080 = vadd.f32 0.0, %v4079
  %v4081 = vpop.f32.mrb[0].mxu0
  %4082 = vmatprep.mubr.f32.mxu0 0.0
  %4083 = vmatmul.mubr.f32.gmra.mrb[0].mxu0 %v3869
  %v4084 = vpop.f32.mrb[0].mxu0
  %v4085 = vadd.f32 0.0, %v4084
  %v4086 = vpop.f32.mrb[0].mxu0
  %4087 = vmatprep.mubr.f32.mxu0 0.0
  %4088 = vmatmul.mubr.f32.gmra.mrb[0].mxu0 %v3872
  %v4089 = vpop.f32.mrb[0].mxu0
  %v4090 = vadd.f32 0.0, %v4089
  %v4091 = vpop.f32.mrb[0].mxu0
  %4092 = vmatprep.mubr.f32.mxu0 0.0
  %4093 = vmatmul.mubr.f32.gmra.mrb[0].mxu0 %v3875
  %v4094 = vpop.f32.mrb[0].mxu0
  %v4095 = vadd.f32 0.0, %v4094
  %v4096 = vpop.f32.mrb[0].mxu0
  %4097 = vmatprep.mubr.f32.mxu0 0.0
  %4098 = vmatmul.mubr.f32.gmra.mrb[0].mxu0 %v3878
  %v4099 = vpop.f32.mrb[0].mxu0
  %v4100 = vadd.f32 0.0, %v4099
  %v4101 = vpop.f32.mrb[0].mxu0
  %4102 = vmatprep.mubr.f32.mxu0 0.0
  %4103 = vmatmul.mubr.f32.gmra.mrb[0].mxu0 %v3881
  %v4104 = vpop.f32.mrb[0].mxu0
  %v4105 = vadd.f32 0.0, %v4104
  %v4106 = vpop.f32.mrb[0].mxu0
  %4107 = vdwg.mxu0
  %v4108 = vmul.f32 %v3627, %v3627
  %v4109 = vmul.f32 %v3632, %v3632
  %v4110 = vmul.f32 %v3637, %v3637
  %v4111 = vmul.f32 %v3642, %v3642
  %v4112 = vmul.f32 %v3647, %v3647
  %v4113 = vmul.f32 %v3652, %v3652
  %v4114 = vmul.f32 %v3657, %v3657
  %v4115 = vmul.f32 %v3662, %v3662
  %v4116 = vmul.f32 %v3667, %v3667
  %v4117 = vmul.f32 %v3672, %v3672
  %v4118 = vmul.f32 %v3677, %v3677
  %v4119 = vmul.f32 %v3682, %v3682
  %v4120 = vmul.f32 %v3687, %v3687
  %v4121 = vmul.f32 %v3692, %v3692
  %v4122 = vmul.f32 %v3697, %v3697
  %v4123 = vmul.f32 %v3702, %v3702
  %v4124 = vmul.f32 %v3707, %v3707
  %v4125 = vmul.f32 %v3712, %v3712
  %v4126 = vmul.f32 %v3717, %v3717
  %v4127 = vmul.f32 %v3722, %v3722
  %v4128 = vmul.f32 %v3727, %v3727
  %v4129 = vmul.f32 %v3732, %v3732
  %v4130 = vmul.f32 %v3737, %v3737
  %v4131 = vmul.f32 %v3742, %v3742
  %v4132 = vmul.f32 %v3747, %v3747
  %v4133 = vmul.f32 %v3752, %v3752
  %v4134 = vmul.f32 %v3757, %v3757
  %v4135 = vmul.f32 %v3762, %v3762
  %v4136 = vmul.f32 %v3767, %v3767
  %v4137 = vmul.f32 %v3772, %v3772
  %v4138 = vmul.f32 %v3777, %v3777
  %v4139 = vmul.f32 %v3782, %v3782
  %v4141 = vsel %vm789, %v4108, 0
  %v4144 = vsel %vm789, %v4109, 0
  %v4147 = vsel %vm789, %v4110, 0
  %v4150 = vsel %vm789, %v4111, 0
  %v4153 = vsel %vm789, %v4112, 0
  %v4156 = vsel %vm789, %v4113, 0
  %v4159 = vsel %vm789, %v4114, 0
  %v4162 = vsel %vm789, %v4115, 0
  %v4165 = vsel %vm789, %v4116, 0
  %v4168 = vsel %vm789, %v4117, 0
  %v4171 = vsel %vm789, %v4118, 0
  %v4174 = vsel %vm789, %v4119, 0
  %v4177 = vsel %vm789, %v4120, 0
  %v4180 = vsel %vm789, %v4121, 0
  %v4183 = vsel %vm789, %v4122, 0
  %v4186 = vsel %vm789, %v4123, 0
  %v4189 = vsel %vm789, %v4124, 0
  %v4192 = vsel %vm789, %v4125, 0
  %v4195 = vsel %vm789, %v4126, 0
  %v4198 = vsel %vm789, %v4127, 0
  %v4201 = vsel %vm789, %v4128, 0
  %v4204 = vsel %vm789, %v4129, 0
  %v4207 = vsel %vm789, %v4130, 0
  %v4210 = vsel %vm789, %v4131, 0
  %v4213 = vsel %vm789, %v4132, 0
  %v4216 = vsel %vm789, %v4133, 0
  %v4219 = vsel %vm789, %v4134, 0
  %v4222 = vsel %vm789, %v4135, 0
  %v4225 = vsel %vm789, %v4136, 0
  %v4228 = vsel %vm789, %v4137, 0
  %v4231 = vsel %vm789, %v4138, 0
  %v4234 = vsel %vm789, %v4139, 0
  %4236 = vmatprep.subr.mxu0 0.0
  %4237 = vmatpush1.msra.mxu0 %v30
  %4238 = vmatprep.subr.mxu0 0.0
  %4239 = vmatpush1.msra.mxu0 %v31
  %4240 = vmatprep.subr.mxu0 0.0
  %4241 = vmatpush1.msra.mxu0 %v32
  %4242 = vmatprep.subr.mxu0 0.0
  %4243 = vmatpush1.msra.mxu0 %v33
  %4244 = vmatprep.subr.mxu0 0.0
  %4245 = vmatpush1.msra.mxu0 %v34
  %4246 = vmatprep.subr.mxu0 0.0
  %4247 = vmatpush1.msra.mxu0 %v35
  %4248 = vmatprep.subr.mxu0 0.0
  %4249 = vmatpush1.msra.mxu0 %v36
  %4250 = vmatprep.subr.mxu0 0.0
  %4251 = vmatpush1.msra.mxu0 %v37
  %4252 = vmatprep.subr.mxu0 0.0
  %4253 = vmatpush1.msra.mxu0 0.0
  %4254 = vmatprep.subr.mxu0 0.0
  %4255 = vmatpush1.msra.mxu0 0.0
  %4256 = vmatprep.subr.mxu0 0.0
  %4257 = vmatpush1.msra.mxu0 0.0
  %4258 = vmatprep.subr.mxu0 0.0
  %4259 = vmatpush1.msra.mxu0 0.0
  %4260 = vmatprep.subr.mxu0 0.0
  %4261 = vmatpush1.msra.mxu0 0.0
  %4262 = vmatprep.subr.mxu0 0.0
  %4263 = vmatpush1.msra.mxu0 0.0
  %4264 = vmatprep.subr.mxu0 0.0
  %4265 = vmatpush1.msra.mxu0 0.0
  %4266 = vmatprep.subr.mxu0 0.0
  %4267 = vmatpush1.msra.mxu0 0.0
  %4268 = vmatprep.subr.mxu0 0.0
  %4269 = vmatpush1.msra.mxu0 0.0
  %4270 = vmatprep.subr.mxu0 0.0
  %4271 = vmatpush1.msra.mxu0 0.0
  %4272 = vmatprep.subr.mxu0 0.0
  %4273 = vmatpush1.msra.mxu0 0.0
  %4274 = vmatprep.subr.mxu0 0.0
  %4275 = vmatpush1.msra.mxu0 0.0
  %4276 = vmatprep.subr.mxu0 0.0
  %4277 = vmatpush1.msra.mxu0 0.0
  %4278 = vmatprep.subr.mxu0 0.0
  %4279 = vmatpush1.msra.mxu0 0.0
  %4280 = vmatprep.subr.mxu0 0.0
  %4281 = vmatpush1.msra.mxu0 0.0
  %4282 = vmatprep.subr.mxu0 0.0
  %4283 = vmatpush1.msra.mxu0 0.0
  %4284 = vmatprep.subr.mxu0 0.0
  %4285 = vmatpush1.msra.mxu0 0.0
  %4286 = vmatprep.subr.mxu0 0.0
  %4287 = vmatpush1.msra.mxu0 0.0
  %4288 = vmatprep.subr.mxu0 0.0
  %4289 = vmatpush1.msra.mxu0 0.0
  %4290 = vmatprep.subr.mxu0 0.0
  %4291 = vmatpush1.msra.mxu0 0.0
  %4292 = vmatprep.subr.mxu0 0.0
  %4293 = vmatpush1.msra.mxu0 0.0
  %4294 = vmatprep.subr.mxu0 0.0
  %4295 = vmatpush1.msra.mxu0 0.0
  %4296 = vmatprep.subr.mxu0 0.0
  %4297 = vmatpush1.msra.mxu0 0.0
  %4298 = vmatprep.subr.mxu0 0.0
  %4299 = vmatpush1.msra.mxu0 0.0
  %4300 = vmatprep.mubr.f32.mxu0 0.0
  %4301 = vmatmul.mubr.f32.gmra.mrb[0].mxu0 %v4141
  %v4302 = vpop.f32.mrb[0].mxu0
  %v4303 = vadd.f32 0.0, %v4302
  %v4304 = vpop.f32.mrb[0].mxu0
  %4305 = vmatprep.mubr.f32.mxu0 0.0
  %4306 = vmatmul.mubr.f32.gmra.mrb[0].mxu0 %v4144
  %v4307 = vpop.f32.mrb[0].mxu0
  %v4308 = vadd.f32 0.0, %v4307
  %v4309 = vpop.f32.mrb[0].mxu0
  %4310 = vmatprep.mubr.f32.mxu0 0.0
  %4311 = vmatmul.mubr.f32.gmra.mrb[0].mxu0 %v4147
  %v4312 = vpop.f32.mrb[0].mxu0
  %v4313 = vadd.f32 0.0, %v4312
  %v4314 = vpop.f32.mrb[0].mxu0
  %4315 = vmatprep.mubr.f32.mxu0 0.0
  %4316 = vmatmul.mubr.f32.gmra.mrb[0].mxu0 %v4150
  %v4317 = vpop.f32.mrb[0].mxu0
  %v4318 = vadd.f32 0.0, %v4317
  %v4319 = vpop.f32.mrb[0].mxu0
  %4320 = vmatprep.mubr.f32.mxu0 0.0
  %4321 = vmatmul.mubr.f32.gmra.mrb[0].mxu0 %v4153
  %v4322 = vpop.f32.mrb[0].mxu0
  %v4323 = vadd.f32 0.0, %v4322
  %v4324 = vpop.f32.mrb[0].mxu0
  %4325 = vmatprep.mubr.f32.mxu0 0.0
  %4326 = vmatmul.mubr.f32.gmra.mrb[0].mxu0 %v4156
  %v4327 = vpop.f32.mrb[0].mxu0
  %v4328 = vadd.f32 0.0, %v4327
  %v4329 = vpop.f32.mrb[0].mxu0
  %4330 = vmatprep.mubr.f32.mxu0 0.0
  %4331 = vmatmul.mubr.f32.gmra.mrb[0].mxu0 %v4159
  %v4332 = vpop.f32.mrb[0].mxu0
  %v4333 = vadd.f32 0.0, %v4332
  %v4334 = vpop.f32.mrb[0].mxu0
  %4335 = vmatprep.mubr.f32.mxu0 0.0
  %4336 = vmatmul.mubr.f32.gmra.mrb[0].mxu0 %v4162
  %v4337 = vpop.f32.mrb[0].mxu0
  %v4338 = vadd.f32 0.0, %v4337
  %v4339 = vpop.f32.mrb[0].mxu0
  %4340 = vmatprep.mubr.f32.mxu0 0.0
  %4341 = vmatmul.mubr.f32.gmra.mrb[0].mxu0 %v4165
  %v4342 = vpop.f32.mrb[0].mxu0
  %v4343 = vadd.f32 0.0, %v4342
  %v4344 = vpop.f32.mrb[0].mxu0
  %4345 = vmatprep.mubr.f32.mxu0 0.0
  %4346 = vmatmul.mubr.f32.gmra.mrb[0].mxu0 %v4168
  %v4347 = vpop.f32.mrb[0].mxu0
  %v4348 = vadd.f32 0.0, %v4347
  %v4349 = vpop.f32.mrb[0].mxu0
  %4350 = vmatprep.mubr.f32.mxu0 0.0
  %4351 = vmatmul.mubr.f32.gmra.mrb[0].mxu0 %v4171
  %v4352 = vpop.f32.mrb[0].mxu0
  %v4353 = vadd.f32 0.0, %v4352
  %v4354 = vpop.f32.mrb[0].mxu0
  %4355 = vmatprep.mubr.f32.mxu0 0.0
  %4356 = vmatmul.mubr.f32.gmra.mrb[0].mxu0 %v4174
  %v4357 = vpop.f32.mrb[0].mxu0
  %v4358 = vadd.f32 0.0, %v4357
  %v4359 = vpop.f32.mrb[0].mxu0
  %4360 = vmatprep.mubr.f32.mxu0 0.0
  %4361 = vmatmul.mubr.f32.gmra.mrb[0].mxu0 %v4177
  %v4362 = vpop.f32.mrb[0].mxu0
  %v4363 = vadd.f32 0.0, %v4362
  %v4364 = vpop.f32.mrb[0].mxu0
  %4365 = vmatprep.mubr.f32.mxu0 0.0
  %4366 = vmatmul.mubr.f32.gmra.mrb[0].mxu0 %v4180
  %v4367 = vpop.f32.mrb[0].mxu0
  %v4368 = vadd.f32 0.0, %v4367
  %v4369 = vpop.f32.mrb[0].mxu0
  %4370 = vmatprep.mubr.f32.mxu0 0.0
  %4371 = vmatmul.mubr.f32.gmra.mrb[0].mxu0 %v4183
  %v4372 = vpop.f32.mrb[0].mxu0
  %v4373 = vadd.f32 0.0, %v4372
  %v4374 = vpop.f32.mrb[0].mxu0
  %4375 = vmatprep.mubr.f32.mxu0 0.0
  %4376 = vmatmul.mubr.f32.gmra.mrb[0].mxu0 %v4186
  %v4377 = vpop.f32.mrb[0].mxu0
  %v4378 = vadd.f32 0.0, %v4377
  %v4379 = vpop.f32.mrb[0].mxu0
  %4380 = vmatprep.mubr.f32.mxu0 0.0
  %4381 = vmatmul.mubr.f32.gmra.mrb[0].mxu0 %v4189
  %v4382 = vpop.f32.mrb[0].mxu0
  %v4383 = vadd.f32 0.0, %v4382
  %v4384 = vpop.f32.mrb[0].mxu0
  %4385 = vmatprep.mubr.f32.mxu0 0.0
  %4386 = vmatmul.mubr.f32.gmra.mrb[0].mxu0 %v4192
  %v4387 = vpop.f32.mrb[0].mxu0
  %v4388 = vadd.f32 0.0, %v4387
  %v4389 = vpop.f32.mrb[0].mxu0
  %4390 = vmatprep.mubr.f32.mxu0 0.0
  %4391 = vmatmul.mubr.f32.gmra.mrb[0].mxu0 %v4195
  %v4392 = vpop.f32.mrb[0].mxu0
  %v4393 = vadd.f32 0.0, %v4392
  %v4394 = vpop.f32.mrb[0].mxu0
  %4395 = vmatprep.mubr.f32.mxu0 0.0
  %4396 = vmatmul.mubr.f32.gmra.mrb[0].mxu0 %v4198
  %v4397 = vpop.f32.mrb[0].mxu0
  %v4398 = vadd.f32 0.0, %v4397
  %v4399 = vpop.f32.mrb[0].mxu0
  %4400 = vmatprep.mubr.f32.mxu0 0.0
  %4401 = vmatmul.mubr.f32.gmra.mrb[0].mxu0 %v4201
  %v4402 = vpop.f32.mrb[0].mxu0
  %v4403 = vadd.f32 0.0, %v4402
  %v4404 = vpop.f32.mrb[0].mxu0
  %4405 = vmatprep.mubr.f32.mxu0 0.0
  %4406 = vmatmul.mubr.f32.gmra.mrb[0].mxu0 %v4204
  %v4407 = vpop.f32.mrb[0].mxu0
  %v4408 = vadd.f32 0.0, %v4407
  %v4409 = vpop.f32.mrb[0].mxu0
  %4410 = vmatprep.mubr.f32.mxu0 0.0
  %4411 = vmatmul.mubr.f32.gmra.mrb[0].mxu0 %v4207
  %v4412 = vpop.f32.mrb[0].mxu0
  %v4413 = vadd.f32 0.0, %v4412
  %v4414 = vpop.f32.mrb[0].mxu0
  %4415 = vmatprep.mubr.f32.mxu0 0.0
  %4416 = vmatmul.mubr.f32.gmra.mrb[0].mxu0 %v4210
  %v4417 = vpop.f32.mrb[0].mxu0
  %v4418 = vadd.f32 0.0, %v4417
  %v4419 = vpop.f32.mrb[0].mxu0
  %4420 = vmatprep.mubr.f32.mxu0 0.0
  %4421 = vmatmul.mubr.f32.gmra.mrb[0].mxu0 %v4213
  %v4422 = vpop.f32.mrb[0].mxu0
  %v4423 = vadd.f32 0.0, %v4422
  %v4424 = vpop.f32.mrb[0].mxu0
  %4425 = vmatprep.mubr.f32.mxu0 0.0
  %4426 = vmatmul.mubr.f32.gmra.mrb[0].mxu0 %v4216
  %v4427 = vpop.f32.mrb[0].mxu0
  %v4428 = vadd.f32 0.0, %v4427
  %v4429 = vpop.f32.mrb[0].mxu0
  %4430 = vmatprep.mubr.f32.mxu0 0.0
  %4431 = vmatmul.mubr.f32.gmra.mrb[0].mxu0 %v4219
  %v4432 = vpop.f32.mrb[0].mxu0
  %v4433 = vadd.f32 0.0, %v4432
  %v4434 = vpop.f32.mrb[0].mxu0
  %4435 = vmatprep.mubr.f32.mxu0 0.0
  %4436 = vmatmul.mubr.f32.gmra.mrb[0].mxu0 %v4222
  %v4437 = vpop.f32.mrb[0].mxu0
  %v4438 = vadd.f32 0.0, %v4437
  %v4439 = vpop.f32.mrb[0].mxu0
  %4440 = vmatprep.mubr.f32.mxu0 0.0
  %4441 = vmatmul.mubr.f32.gmra.mrb[0].mxu0 %v4225
  %v4442 = vpop.f32.mrb[0].mxu0
  %v4443 = vadd.f32 0.0, %v4442
  %v4444 = vpop.f32.mrb[0].mxu0
  %4445 = vmatprep.mubr.f32.mxu0 0.0
  %4446 = vmatmul.mubr.f32.gmra.mrb[0].mxu0 %v4228
  %v4447 = vpop.f32.mrb[0].mxu0
  %v4448 = vadd.f32 0.0, %v4447
  %v4449 = vpop.f32.mrb[0].mxu0
  %4450 = vmatprep.mubr.f32.mxu0 0.0
  %4451 = vmatmul.mubr.f32.gmra.mrb[0].mxu0 %v4231
  %v4452 = vpop.f32.mrb[0].mxu0
  %v4453 = vadd.f32 0.0, %v4452
  %v4454 = vpop.f32.mrb[0].mxu0
  %4455 = vmatprep.mubr.f32.mxu0 0.0
  %4456 = vmatmul.mubr.f32.gmra.mrb[0].mxu0 %v4234
  %v4457 = vpop.f32.mrb[0].mxu0
  %v4458 = vadd.f32 0.0, %v4457
  %v4459 = vpop.f32.mrb[0].mxu0
  %4460 = vdwg.mxu0
  %v4461 = vmul.f32 %v3950, %v3950
  %v4462 = vmul.f32 %v3955, %v3955
  %v4463 = vmul.f32 %v3960, %v3960
  %v4464 = vmul.f32 %v3965, %v3965
  %v4465 = vmul.f32 %v3970, %v3970
  %v4466 = vmul.f32 %v3975, %v3975
  %v4467 = vmul.f32 %v3980, %v3980
  %v4468 = vmul.f32 %v3985, %v3985
  %v4469 = vmul.f32 %v3990, %v3990
  %v4470 = vmul.f32 %v3995, %v3995
  %v4471 = vmul.f32 %v4000, %v4000
  %v4472 = vmul.f32 %v4005, %v4005
  %v4473 = vmul.f32 %v4010, %v4010
  %v4474 = vmul.f32 %v4015, %v4015
  %v4475 = vmul.f32 %v4020, %v4020
  %v4476 = vmul.f32 %v4025, %v4025
  %v4477 = vmul.f32 %v4030, %v4030
  %v4478 = vmul.f32 %v4035, %v4035
  %v4479 = vmul.f32 %v4040, %v4040
  %v4480 = vmul.f32 %v4045, %v4045
  %v4481 = vmul.f32 %v4050, %v4050
  %v4482 = vmul.f32 %v4055, %v4055
  %v4483 = vmul.f32 %v4060, %v4060
  %v4484 = vmul.f32 %v4065, %v4065
  %v4485 = vmul.f32 %v4070, %v4070
  %v4486 = vmul.f32 %v4075, %v4075
  %v4487 = vmul.f32 %v4080, %v4080
  %v4488 = vmul.f32 %v4085, %v4085
  %v4489 = vmul.f32 %v4090, %v4090
  %v4490 = vmul.f32 %v4095, %v4095
  %v4491 = vmul.f32 %v4100, %v4100
  %v4492 = vmul.f32 %v4105, %v4105
  %v4493 = vsub.f32 %v4303, %v4461
  %v4494 = vsub.f32 %v4308, %v4462
  %v4495 = vsub.f32 %v4313, %v4463
  %v4496 = vsub.f32 %v4318, %v4464
  %v4497 = vsub.f32 %v4323, %v4465
  %v4498 = vsub.f32 %v4328, %v4466
  %v4499 = vsub.f32 %v4333, %v4467
  %v4500 = vsub.f32 %v4338, %v4468
  %v4501 = vsub.f32 %v4343, %v4469
  %v4502 = vsub.f32 %v4348, %v4470
  %v4503 = vsub.f32 %v4353, %v4471
  %v4504 = vsub.f32 %v4358, %v4472
  %v4505 = vsub.f32 %v4363, %v4473
  %v4506 = vsub.f32 %v4368, %v4474
  %v4507 = vsub.f32 %v4373, %v4475
  %v4508 = vsub.f32 %v4378, %v4476
  %v4509 = vsub.f32 %v4383, %v4477
  %v4510 = vsub.f32 %v4388, %v4478
  %v4511 = vsub.f32 %v4393, %v4479
  %v4512 = vsub.f32 %v4398, %v4480
  %v4513 = vsub.f32 %v4403, %v4481
  %v4514 = vsub.f32 %v4408, %v4482
  %v4515 = vsub.f32 %v4413, %v4483
  %v4516 = vsub.f32 %v4418, %v4484
  %v4517 = vsub.f32 %v4423, %v4485
  %v4518 = vsub.f32 %v4428, %v4486
  %v4519 = vsub.f32 %v4433, %v4487
  %v4520 = vsub.f32 %v4438, %v4488
  %v4521 = vsub.f32 %v4443, %v4489
  %v4522 = vsub.f32 %v4448, %v4490
  %v4523 = vsub.f32 %v4453, %v4491
  %v4524 = vsub.f32 %v4458, %v4492
  %v4525 = vmax.f32 %v4493, 0.0
  %v4526 = vmax.f32 %v4494, 0.0
  %v4527 = vmax.f32 %v4495, 0.0
  %v4528 = vmax.f32 %v4496, 0.0
  %v4529 = vmax.f32 %v4497, 0.0
  %v4530 = vmax.f32 %v4498, 0.0
  %v4531 = vmax.f32 %v4499, 0.0
  %v4532 = vmax.f32 %v4500, 0.0
  %v4533 = vmax.f32 %v4501, 0.0
  %v4534 = vmax.f32 %v4502, 0.0
  %v4535 = vmax.f32 %v4503, 0.0
  %v4536 = vmax.f32 %v4504, 0.0
  %v4537 = vmax.f32 %v4505, 0.0
  %v4538 = vmax.f32 %v4506, 0.0
  %v4539 = vmax.f32 %v4507, 0.0
  %v4540 = vmax.f32 %v4508, 0.0
  %v4541 = vmax.f32 %v4509, 0.0
  %v4542 = vmax.f32 %v4510, 0.0
  %v4543 = vmax.f32 %v4511, 0.0
  %v4544 = vmax.f32 %v4512, 0.0
  %v4545 = vmax.f32 %v4513, 0.0
  %v4546 = vmax.f32 %v4514, 0.0
  %v4547 = vmax.f32 %v4515, 0.0
  %v4548 = vmax.f32 %v4516, 0.0
  %v4549 = vmax.f32 %v4517, 0.0
  %v4550 = vmax.f32 %v4518, 0.0
  %v4551 = vmax.f32 %v4519, 0.0
  %v4552 = vmax.f32 %v4520, 0.0
  %v4553 = vmax.f32 %v4521, 0.0
  %v4554 = vmax.f32 %v4522, 0.0
  %v4555 = vmax.f32 %v4523, 0.0
  %v4556 = vmax.f32 %v4524, 0.0
  %v4557 = vsub.f32 %v3627, %v3950
  %v4558 = vsub.f32 %v3632, %v3955
  %v4559 = vsub.f32 %v3637, %v3960
  %v4560 = vsub.f32 %v3642, %v3965
  %v4561 = vsub.f32 %v3647, %v3970
  %v4562 = vsub.f32 %v3652, %v3975
  %v4563 = vsub.f32 %v3657, %v3980
  %v4564 = vsub.f32 %v3662, %v3985
  %v4565 = vsub.f32 %v3667, %v3990
  %v4566 = vsub.f32 %v3672, %v3995
  %v4567 = vsub.f32 %v3677, %v4000
  %v4568 = vsub.f32 %v3682, %v4005
  %v4569 = vsub.f32 %v3687, %v4010
  %v4570 = vsub.f32 %v3692, %v4015
  %v4571 = vsub.f32 %v3697, %v4020
  %v4572 = vsub.f32 %v3702, %v4025
  %v4573 = vsub.f32 %v3707, %v4030
  %v4574 = vsub.f32 %v3712, %v4035
  %v4575 = vsub.f32 %v3717, %v4040
  %v4576 = vsub.f32 %v3722, %v4045
  %v4577 = vsub.f32 %v3727, %v4050
  %v4578 = vsub.f32 %v3732, %v4055
  %v4579 = vsub.f32 %v3737, %v4060
  %v4580 = vsub.f32 %v3742, %v4065
  %v4581 = vsub.f32 %v3747, %v4070
  %v4582 = vsub.f32 %v3752, %v4075
  %v4583 = vsub.f32 %v3757, %v4080
  %v4584 = vsub.f32 %v3762, %v4085
  %v4585 = vsub.f32 %v3767, %v4090
  %v4586 = vsub.f32 %v3772, %v4095
  %v4587 = vsub.f32 %v3777, %v4100
  %v4588 = vsub.f32 %v3782, %v4105
  %v4589 = vadd.f32 %v4525, 1e-05
  %v4590 = vadd.f32 %v4526, 1e-05
  %v4591 = vadd.f32 %v4527, 1e-05
  %v4592 = vadd.f32 %v4528, 1e-05
  %v4593 = vadd.f32 %v4529, 1e-05
  %v4594 = vadd.f32 %v4530, 1e-05
  %v4595 = vadd.f32 %v4531, 1e-05
  %v4596 = vadd.f32 %v4532, 1e-05
  %v4597 = vadd.f32 %v4533, 1e-05
  %v4598 = vadd.f32 %v4534, 1e-05
  %v4599 = vadd.f32 %v4535, 1e-05
  %v4600 = vadd.f32 %v4536, 1e-05
  %v4601 = vadd.f32 %v4537, 1e-05
  %v4602 = vadd.f32 %v4538, 1e-05
  %v4603 = vadd.f32 %v4539, 1e-05
  %v4604 = vadd.f32 %v4540, 1e-05
  %v4605 = vadd.f32 %v4541, 1e-05
  %v4606 = vadd.f32 %v4542, 1e-05
  %v4607 = vadd.f32 %v4543, 1e-05
  %v4608 = vadd.f32 %v4544, 1e-05
  %v4609 = vadd.f32 %v4545, 1e-05
  %v4610 = vadd.f32 %v4546, 1e-05
  %v4611 = vadd.f32 %v4547, 1e-05
  %v4612 = vadd.f32 %v4548, 1e-05
  %v4613 = vadd.f32 %v4549, 1e-05
  %v4614 = vadd.f32 %v4550, 1e-05
  %v4615 = vadd.f32 %v4551, 1e-05
  %v4616 = vadd.f32 %v4552, 1e-05
  %v4617 = vadd.f32 %v4553, 1e-05
  %v4618 = vadd.f32 %v4554, 1e-05
  %v4619 = vadd.f32 %v4555, 1e-05
  %v4620 = vadd.f32 %v4556, 1e-05
  %v4621 = vrsqrt.pop %v4589
  %v4622 = vrsqrt.pop %v4590
  %v4623 = vrsqrt.pop %v4591
  %v4624 = vrsqrt.pop %v4592
  %v4625 = vrsqrt.pop %v4593
  %v4626 = vrsqrt.pop %v4594
  %v4627 = vrsqrt.pop %v4595
  %v4628 = vrsqrt.pop %v4596
  %v4629 = vrsqrt.pop %v4597
  %v4630 = vrsqrt.pop %v4598
  %v4631 = vrsqrt.pop %v4599
  %v4632 = vrsqrt.pop %v4600
  %v4633 = vrsqrt.pop %v4601
  %v4634 = vrsqrt.pop %v4602
  %v4635 = vrsqrt.pop %v4603
  %v4636 = vrsqrt.pop %v4604
  %v4637 = vrsqrt.pop %v4605
  %v4638 = vrsqrt.pop %v4606
  %v4639 = vrsqrt.pop %v4607
  %v4640 = vrsqrt.pop %v4608
  %v4641 = vrsqrt.pop %v4609
  %v4642 = vrsqrt.pop %v4610
  %v4643 = vrsqrt.pop %v4611
  %v4644 = vrsqrt.pop %v4612
  %v4645 = vrsqrt.pop %v4613
  %v4646 = vrsqrt.pop %v4614
  %v4647 = vrsqrt.pop %v4615
  %v4648 = vrsqrt.pop %v4616
  %v4649 = vrsqrt.pop %v4617
  %v4650 = vrsqrt.pop %v4618
  %v4651 = vrsqrt.pop %v4619
  %v4652 = vrsqrt.pop %v4620
  %v4653 = vmul.f32 %v4557, %v4621
  %v4654 = vmul.f32 %v4558, %v4622
  %v4655 = vmul.f32 %v4559, %v4623
  %v4656 = vmul.f32 %v4560, %v4624
  %v4657 = vmul.f32 %v4561, %v4625
  %v4658 = vmul.f32 %v4562, %v4626
  %v4659 = vmul.f32 %v4563, %v4627
  %v4660 = vmul.f32 %v4564, %v4628
  %v4661 = vmul.f32 %v4565, %v4629
  %v4662 = vmul.f32 %v4566, %v4630
  %v4663 = vmul.f32 %v4567, %v4631
  %v4664 = vmul.f32 %v4568, %v4632
  %v4665 = vmul.f32 %v4569, %v4633
  %v4666 = vmul.f32 %v4570, %v4634
  %v4667 = vmul.f32 %v4571, %v4635
  %v4668 = vmul.f32 %v4572, %v4636
  %v4669 = vmul.f32 %v4573, %v4637
  %v4670 = vmul.f32 %v4574, %v4638
  %v4671 = vmul.f32 %v4575, %v4639
  %v4672 = vmul.f32 %v4576, %v4640
  %v4673 = vmul.f32 %v4577, %v4641
  %v4674 = vmul.f32 %v4578, %v4642
  %v4675 = vmul.f32 %v4579, %v4643
  %v4676 = vmul.f32 %v4580, %v4644
  %v4677 = vmul.f32 %v4581, %v4645
  %v4678 = vmul.f32 %v4582, %v4646
  %v4679 = vmul.f32 %v4583, %v4647
  %v4680 = vmul.f32 %v4584, %v4648
  %v4681 = vmul.f32 %v4585, %v4649
  %v4682 = vmul.f32 %v4586, %v4650
  %v4683 = vmul.f32 %v4587, %v4651
  %v4684 = vmul.f32 %v4588, %v4652
  %v4685 = vlaneseq
  %v4686 = vshrl.u32 %v4685, 7
  %v4687 = vsub.s32 0, %v4686
  %v4688 = vrot.slane %v3785, %v4687
  %v4689 = vmul.f32 %v4653, %v4688
  %v4690 = vmul.f32 %v4654, %v4688
  %v4691 = vmul.f32 %v4655, %v4688
  %v4692 = vmul.f32 %v4656, %v4688
  %v4693 = vmul.f32 %v4657, %v4688
  %v4694 = vmul.f32 %v4658, %v4688
  %v4695 = vmul.f32 %v4659, %v4688
  %v4696 = vmul.f32 %v4660, %v4688
  %v4697 = vmul.f32 %v4661, %v4688
  %v4698 = vmul.f32 %v4662, %v4688
  %v4699 = vmul.f32 %v4663, %v4688
  %v4700 = vmul.f32 %v4664, %v4688
  %v4701 = vmul.f32 %v4665, %v4688
  %v4702 = vmul.f32 %v4666, %v4688
  %v4703 = vmul.f32 %v4667, %v4688
  %v4704 = vmul.f32 %v4668, %v4688
  %v4705 = vmul.f32 %v4669, %v4688
  %v4706 = vmul.f32 %v4670, %v4688
  %v4707 = vmul.f32 %v4671, %v4688
  %v4708 = vmul.f32 %v4672, %v4688
  %v4709 = vmul.f32 %v4673, %v4688
  %v4710 = vmul.f32 %v4674, %v4688
  %v4711 = vmul.f32 %v4675, %v4688
  %v4712 = vmul.f32 %v4676, %v4688
  %v4713 = vmul.f32 %v4677, %v4688
  %v4714 = vmul.f32 %v4678, %v4688
  %v4715 = vmul.f32 %v4679, %v4688
  %v4716 = vmul.f32 %v4680, %v4688
  %v4717 = vmul.f32 %v4681, %v4688
  %v4718 = vmul.f32 %v4682, %v4688
  %v4719 = vmul.f32 %v4683, %v4688
  %v4720 = vmul.f32 %v4684, %v4688
  %v4721 = vlaneseq
  %v4722 = vshrl.u32 %v4721, 7
  %v4723 = vsub.s32 0, %v4722
  %v4724 = vrot.slane %v3786, %v4723
  %v4725 = vadd.f32 %v4689, %v4724
  %v4726 = vadd.f32 %v4690, %v4724
  %v4727 = vadd.f32 %v4691, %v4724
  %v4728 = vadd.f32 %v4692, %v4724
  %v4729 = vadd.f32 %v4693, %v4724
  %v4730 = vadd.f32 %v4694, %v4724
  %v4731 = vadd.f32 %v4695, %v4724
  %v4732 = vadd.f32 %v4696, %v4724
  %v4733 = vadd.f32 %v4697, %v4724
  %v4734 = vadd.f32 %v4698, %v4724
  %v4735 = vadd.f32 %v4699, %v4724
  %v4736 = vadd.f32 %v4700, %v4724
  %v4737 = vadd.f32 %v4701, %v4724
  %v4738 = vadd.f32 %v4702, %v4724
  %v4739 = vadd.f32 %v4703, %v4724
  %v4740 = vadd.f32 %v4704, %v4724
  %v4741 = vadd.f32 %v4705, %v4724
  %v4742 = vadd.f32 %v4706, %v4724
  %v4743 = vadd.f32 %v4707, %v4724
  %v4744 = vadd.f32 %v4708, %v4724
  %v4745 = vadd.f32 %v4709, %v4724
  %v4746 = vadd.f32 %v4710, %v4724
  %v4747 = vadd.f32 %v4711, %v4724
  %v4748 = vadd.f32 %v4712, %v4724
  %v4749 = vadd.f32 %v4713, %v4724
  %v4750 = vadd.f32 %v4714, %v4724
  %v4751 = vadd.f32 %v4715, %v4724
  %v4752 = vadd.f32 %v4716, %v4724
  %v4753 = vadd.f32 %v4717, %v4724
  %v4754 = vadd.f32 %v4718, %v4724
  %v4755 = vadd.f32 %v4719, %v4724
  %v4756 = vadd.f32 %v4720, %v4724
  %v4757 = vmin.f32 %v4725, 20.0
  %v4758 = vmin.f32 %v4726, 20.0
  %v4759 = vmin.f32 %v4727, 20.0
  %v4760 = vmin.f32 %v4728, 20.0
  %v4761 = vmin.f32 %v4729, 20.0
  %v4762 = vmin.f32 %v4730, 20.0
  %v4763 = vmin.f32 %v4731, 20.0
  %v4764 = vmin.f32 %v4732, 20.0
  %v4765 = vmin.f32 %v4733, 20.0
  %v4766 = vmin.f32 %v4734, 20.0
  %v4767 = vmin.f32 %v4735, 20.0
  %v4768 = vmin.f32 %v4736, 20.0
  %v4769 = vmin.f32 %v4737, 20.0
  %v4770 = vmin.f32 %v4738, 20.0
  %v4771 = vmin.f32 %v4739, 20.0
  %v4772 = vmin.f32 %v4740, 20.0
  %v4773 = vmin.f32 %v4741, 20.0
  %v4774 = vmin.f32 %v4742, 20.0
  %v4775 = vmin.f32 %v4743, 20.0
  %v4776 = vmin.f32 %v4744, 20.0
  %v4777 = vmin.f32 %v4745, 20.0
  %v4778 = vmin.f32 %v4746, 20.0
  %v4779 = vmin.f32 %v4747, 20.0
  %v4780 = vmin.f32 %v4748, 20.0
  %v4781 = vmin.f32 %v4749, 20.0
  %v4782 = vmin.f32 %v4750, 20.0
  %v4783 = vmin.f32 %v4751, 20.0
  %v4784 = vmin.f32 %v4752, 20.0
  %v4785 = vmin.f32 %v4753, 20.0
  %v4786 = vmin.f32 %v4754, 20.0
  %v4787 = vmin.f32 %v4755, 20.0
  %v4788 = vmin.f32 %v4756, 20.0
  %v4789 = vmul.f32 %v4757, 1.442695
  %v4790 = vpow.pop %v4789
  %v4791 = vmul.f32 %v4758, 1.442695
  %v4792 = vpow.pop %v4791
  %v4793 = vmul.f32 %v4759, 1.442695
  %v4794 = vpow.pop %v4793
  %v4795 = vmul.f32 %v4760, 1.442695
  %v4796 = vpow.pop %v4795
  %v4797 = vmul.f32 %v4761, 1.442695
  %v4798 = vpow.pop %v4797
  %v4799 = vmul.f32 %v4762, 1.442695
  %v4800 = vpow.pop %v4799
  %v4801 = vmul.f32 %v4763, 1.442695
  %v4802 = vpow.pop %v4801
  %v4803 = vmul.f32 %v4764, 1.442695
  %v4804 = vpow.pop %v4803
  %v4805 = vmul.f32 %v4765, 1.442695
  %v4806 = vpow.pop %v4805
  %v4807 = vmul.f32 %v4766, 1.442695
  %v4808 = vpow.pop %v4807
  %v4809 = vmul.f32 %v4767, 1.442695
  %v4810 = vpow.pop %v4809
  %v4811 = vmul.f32 %v4768, 1.442695
  %v4812 = vpow.pop %v4811
  %v4813 = vmul.f32 %v4769, 1.442695
  %v4814 = vpow.pop %v4813
  %v4815 = vmul.f32 %v4770, 1.442695
  %v4816 = vpow.pop %v4815
  %v4817 = vmul.f32 %v4771, 1.442695
  %v4818 = vpow.pop %v4817
  %v4819 = vmul.f32 %v4772, 1.442695
  %v4820 = vpow.pop %v4819
  %v4821 = vmul.f32 %v4773, 1.442695
  %v4822 = vpow.pop %v4821
  %v4823 = vmul.f32 %v4774, 1.442695
  %v4824 = vpow.pop %v4823
  %v4825 = vmul.f32 %v4775, 1.442695
  %v4826 = vpow.pop %v4825
  %v4827 = vmul.f32 %v4776, 1.442695
  %v4828 = vpow.pop %v4827
  %v4829 = vmul.f32 %v4777, 1.442695
  %v4830 = vpow.pop %v4829
  %v4831 = vmul.f32 %v4778, 1.442695
  %v4832 = vpow.pop %v4831
  %v4833 = vmul.f32 %v4779, 1.442695
  %v4834 = vpow.pop %v4833
  %v4835 = vmul.f32 %v4780, 1.442695
  %v4836 = vpow.pop %v4835
  %v4837 = vmul.f32 %v4781, 1.442695
  %v4838 = vpow.pop %v4837
  %v4839 = vmul.f32 %v4782, 1.442695
  %v4840 = vpow.pop %v4839
  %v4841 = vmul.f32 %v4783, 1.442695
  %v4842 = vpow.pop %v4841
  %v4843 = vmul.f32 %v4784, 1.442695
  %v4844 = vpow.pop %v4843
  %v4845 = vmul.f32 %v4785, 1.442695
  %v4846 = vpow.pop %v4845
  %v4847 = vmul.f32 %v4786, 1.442695
  %v4848 = vpow.pop %v4847
  %v4849 = vmul.f32 %v4787, 1.442695
  %v4850 = vpow.pop %v4849
  %v4851 = vmul.f32 %v4788, 1.442695
  %v4852 = vpow.pop %v4851
  %v4853 = vadd.f32 %v4790, 2.0
  %v4854 = vadd.f32 %v4792, 2.0
  %v4855 = vadd.f32 %v4794, 2.0
  %v4856 = vadd.f32 %v4796, 2.0
  %v4857 = vadd.f32 %v4798, 2.0
  %v4858 = vadd.f32 %v4800, 2.0
  %v4859 = vadd.f32 %v4802, 2.0
  %v4860 = vadd.f32 %v4804, 2.0
  %v4861 = vadd.f32 %v4806, 2.0
  %v4862 = vadd.f32 %v4808, 2.0
  %v4863 = vadd.f32 %v4810, 2.0
  %v4864 = vadd.f32 %v4812, 2.0
  %v4865 = vadd.f32 %v4814, 2.0
  %v4866 = vadd.f32 %v4816, 2.0
  %v4867 = vadd.f32 %v4818, 2.0
  %v4868 = vadd.f32 %v4820, 2.0
  %v4869 = vadd.f32 %v4822, 2.0
  %v4870 = vadd.f32 %v4824, 2.0
  %v4871 = vadd.f32 %v4826, 2.0
  %v4872 = vadd.f32 %v4828, 2.0
  %v4873 = vadd.f32 %v4830, 2.0
  %v4874 = vadd.f32 %v4832, 2.0
  %v4875 = vadd.f32 %v4834, 2.0
  %v4876 = vadd.f32 %v4836, 2.0
  %v4877 = vadd.f32 %v4838, 2.0
  %v4878 = vadd.f32 %v4840, 2.0
  %v4879 = vadd.f32 %v4842, 2.0
  %v4880 = vadd.f32 %v4844, 2.0
  %v4881 = vadd.f32 %v4846, 2.0
  %v4882 = vadd.f32 %v4848, 2.0
  %v4883 = vadd.f32 %v4850, 2.0
  %v4884 = vadd.f32 %v4852, 2.0
  %v4885 = vmul.f32 %v4790, %v4853
  %v4886 = vmul.f32 %v4792, %v4854
  %v4887 = vmul.f32 %v4794, %v4855
  %v4888 = vmul.f32 %v4796, %v4856
  %v4889 = vmul.f32 %v4798, %v4857
  %v4890 = vmul.f32 %v4800, %v4858
  %v4891 = vmul.f32 %v4802, %v4859
  %v4892 = vmul.f32 %v4804, %v4860
  %v4893 = vmul.f32 %v4806, %v4861
  %v4894 = vmul.f32 %v4808, %v4862
  %v4895 = vmul.f32 %v4810, %v4863
  %v4896 = vmul.f32 %v4812, %v4864
  %v4897 = vmul.f32 %v4814, %v4865
  %v4898 = vmul.f32 %v4816, %v4866
  %v4899 = vmul.f32 %v4818, %v4867
  %v4900 = vmul.f32 %v4820, %v4868
  %v4901 = vmul.f32 %v4822, %v4869
  %v4902 = vmul.f32 %v4824, %v4870
  %v4903 = vmul.f32 %v4826, %v4871
  %v4904 = vmul.f32 %v4828, %v4872
  %v4905 = vmul.f32 %v4830, %v4873
  %v4906 = vmul.f32 %v4832, %v4874
  %v4907 = vmul.f32 %v4834, %v4875
  %v4908 = vmul.f32 %v4836, %v4876
  %v4909 = vmul.f32 %v4838, %v4877
  %v4910 = vmul.f32 %v4840, %v4878
  %v4911 = vmul.f32 %v4842, %v4879
  %v4912 = vmul.f32 %v4844, %v4880
  %v4913 = vmul.f32 %v4846, %v4881
  %v4914 = vmul.f32 %v4848, %v4882
  %v4915 = vmul.f32 %v4850, %v4883
  %v4916 = vmul.f32 %v4852, %v4884
  %v4917 = vmul.f32 %v4725, %v4885
  %v4918 = vmul.f32 %v4726, %v4886
  %v4919 = vmul.f32 %v4727, %v4887
  %v4920 = vmul.f32 %v4728, %v4888
  %v4921 = vmul.f32 %v4729, %v4889
  %v4922 = vmul.f32 %v4730, %v4890
  %v4923 = vmul.f32 %v4731, %v4891
  %v4924 = vmul.f32 %v4732, %v4892
  %v4925 = vmul.f32 %v4733, %v4893
  %v4926 = vmul.f32 %v4734, %v4894
  %v4927 = vmul.f32 %v4735, %v4895
  %v4928 = vmul.f32 %v4736, %v4896
  %v4929 = vmul.f32 %v4737, %v4897
  %v4930 = vmul.f32 %v4738, %v4898
  %v4931 = vmul.f32 %v4739, %v4899
  %v4932 = vmul.f32 %v4740, %v4900
  %v4933 = vmul.f32 %v4741, %v4901
  %v4934 = vmul.f32 %v4742, %v4902
  %v4935 = vmul.f32 %v4743, %v4903
  %v4936 = vmul.f32 %v4744, %v4904
  %v4937 = vmul.f32 %v4745, %v4905
  %v4938 = vmul.f32 %v4746, %v4906
  %v4939 = vmul.f32 %v4747, %v4907
  %v4940 = vmul.f32 %v4748, %v4908
  %v4941 = vmul.f32 %v4749, %v4909
  %v4942 = vmul.f32 %v4750, %v4910
  %v4943 = vmul.f32 %v4751, %v4911
  %v4944 = vmul.f32 %v4752, %v4912
  %v4945 = vmul.f32 %v4753, %v4913
  %v4946 = vmul.f32 %v4754, %v4914
  %v4947 = vmul.f32 %v4755, %v4915
  %v4948 = vmul.f32 %v4756, %v4916
  %v4949 = vadd.f32 %v4885, 2.0
  %v4950 = vadd.f32 %v4886, 2.0
  %v4951 = vadd.f32 %v4887, 2.0
  %v4952 = vadd.f32 %v4888, 2.0
  %v4953 = vadd.f32 %v4889, 2.0
  %v4954 = vadd.f32 %v4890, 2.0
  %v4955 = vadd.f32 %v4891, 2.0
  %v4956 = vadd.f32 %v4892, 2.0
  %v4957 = vadd.f32 %v4893, 2.0
  %v4958 = vadd.f32 %v4894, 2.0
  %v4959 = vadd.f32 %v4895, 2.0
  %v4960 = vadd.f32 %v4896, 2.0
  %v4961 = vadd.f32 %v4897, 2.0
  %v4962 = vadd.f32 %v4898, 2.0
  %v4963 = vadd.f32 %v4899, 2.0
  %v4964 = vadd.f32 %v4900, 2.0
  %v4965 = vadd.f32 %v4901, 2.0
  %v4966 = vadd.f32 %v4902, 2.0
  %v4967 = vadd.f32 %v4903, 2.0
  %v4968 = vadd.f32 %v4904, 2.0
  %v4969 = vadd.f32 %v4905, 2.0
  %v4970 = vadd.f32 %v4906, 2.0
  %v4971 = vadd.f32 %v4907, 2.0
  %v4972 = vadd.f32 %v4908, 2.0
  %v4973 = vadd.f32 %v4909, 2.0
  %v4974 = vadd.f32 %v4910, 2.0
  %v4975 = vadd.f32 %v4911, 2.0
  %v4976 = vadd.f32 %v4912, 2.0
  %v4977 = vadd.f32 %v4913, 2.0
  %v4978 = vadd.f32 %v4914, 2.0
  %v4979 = vadd.f32 %v4915, 2.0
  %v4980 = vadd.f32 %v4916, 2.0
  %v4981 = vrcp.pop %v4949
  %v4982 = vrcp.pop %v4950
  %v4983 = vrcp.pop %v4951
  %v4984 = vrcp.pop %v4952
  %v4985 = vrcp.pop %v4953
  %v4986 = vrcp.pop %v4954
  %v4987 = vrcp.pop %v4955
  %v4988 = vrcp.pop %v4956
  %v4989 = vrcp.pop %v4957
  %v4990 = vrcp.pop %v4958
  %v4991 = vrcp.pop %v4959
  %v4992 = vrcp.pop %v4960
  %v4993 = vrcp.pop %v4961
  %v4994 = vrcp.pop %v4962
  %v4995 = vrcp.pop %v4963
  %v4996 = vrcp.pop %v4964
  %v4997 = vrcp.pop %v4965
  %v4998 = vrcp.pop %v4966
  %v4999 = vrcp.pop %v4967
  %v5000 = vrcp.pop %v4968
  %v5001 = vrcp.pop %v4969
  %v5002 = vrcp.pop %v4970
  %v5003 = vrcp.pop %v4971
  %v5004 = vrcp.pop %v4972
  %v5005 = vrcp.pop %v4973
  %v5006 = vrcp.pop %v4974
  %v5007 = vrcp.pop %v4975
  %v5008 = vrcp.pop %v4976
  %v5009 = vrcp.pop %v4977
  %v5010 = vrcp.pop %v4978
  %v5011 = vrcp.pop %v4979
  %v5012 = vrcp.pop %v4980
  %v5013 = vmul.f32 %v4917, %v4981
  %v5014 = vmul.f32 %v4918, %v4982
  %v5015 = vmul.f32 %v4919, %v4983
  %v5016 = vmul.f32 %v4920, %v4984
  %v5017 = vmul.f32 %v4921, %v4985
  %v5018 = vmul.f32 %v4922, %v4986
  %v5019 = vmul.f32 %v4923, %v4987
  %v5020 = vmul.f32 %v4924, %v4988
  %v5021 = vmul.f32 %v4925, %v4989
  %v5022 = vmul.f32 %v4926, %v4990
  %v5023 = vmul.f32 %v4927, %v4991
  %v5024 = vmul.f32 %v4928, %v4992
  %v5025 = vmul.f32 %v4929, %v4993
  %v5026 = vmul.f32 %v4930, %v4994
  %v5027 = vmul.f32 %v4931, %v4995
  %v5028 = vmul.f32 %v4932, %v4996
  %v5029 = vmul.f32 %v4933, %v4997
  %v5030 = vmul.f32 %v4934, %v4998
  %v5031 = vmul.f32 %v4935, %v4999
  %v5032 = vmul.f32 %v4936, %v5000
  %v5033 = vmul.f32 %v4937, %v5001
  %v5034 = vmul.f32 %v4938, %v5002
  %v5035 = vmul.f32 %v4939, %v5003
  %v5036 = vmul.f32 %v4940, %v5004
  %v5037 = vmul.f32 %v4941, %v5005
  %v5038 = vmul.f32 %v4942, %v5006
  %v5039 = vmul.f32 %v4943, %v5007
  %v5040 = vmul.f32 %v4944, %v5008
  %v5041 = vmul.f32 %v4945, %v5009
  %v5042 = vmul.f32 %v4946, %v5010
  %v5043 = vmul.f32 %v4947, %v5011
  %v5044 = vmul.f32 %v4948, %v5012
  %vm5045 = vcmp.gt.f32.partialorder %v4725, 20.0
  %vm5046 = vcmp.gt.f32.partialorder %v4726, 20.0
  %vm5047 = vcmp.gt.f32.partialorder %v4727, 20.0
  %vm5048 = vcmp.gt.f32.partialorder %v4728, 20.0
  %vm5049 = vcmp.gt.f32.partialorder %v4729, 20.0
  %vm5050 = vcmp.gt.f32.partialorder %v4730, 20.0
  %vm5051 = vcmp.gt.f32.partialorder %v4731, 20.0
  %vm5052 = vcmp.gt.f32.partialorder %v4732, 20.0
  %vm5053 = vcmp.gt.f32.partialorder %v4733, 20.0
  %vm5054 = vcmp.gt.f32.partialorder %v4734, 20.0
  %vm5055 = vcmp.gt.f32.partialorder %v4735, 20.0
  %vm5056 = vcmp.gt.f32.partialorder %v4736, 20.0
  %vm5057 = vcmp.gt.f32.partialorder %v4737, 20.0
  %vm5058 = vcmp.gt.f32.partialorder %v4738, 20.0
  %vm5059 = vcmp.gt.f32.partialorder %v4739, 20.0
  %vm5060 = vcmp.gt.f32.partialorder %v4740, 20.0
  %vm5061 = vcmp.gt.f32.partialorder %v4741, 20.0
  %vm5062 = vcmp.gt.f32.partialorder %v4742, 20.0
  %vm5063 = vcmp.gt.f32.partialorder %v4743, 20.0
  %vm5064 = vcmp.gt.f32.partialorder %v4744, 20.0
  %vm5065 = vcmp.gt.f32.partialorder %v4745, 20.0
  %vm5066 = vcmp.gt.f32.partialorder %v4746, 20.0
  %vm5067 = vcmp.gt.f32.partialorder %v4747, 20.0
  %vm5068 = vcmp.gt.f32.partialorder %v4748, 20.0
  %vm5069 = vcmp.gt.f32.partialorder %v4749, 20.0
  %vm5070 = vcmp.gt.f32.partialorder %v4750, 20.0
  %vm5071 = vcmp.gt.f32.partialorder %v4751, 20.0
  %vm5072 = vcmp.gt.f32.partialorder %v4752, 20.0
  %vm5073 = vcmp.gt.f32.partialorder %v4753, 20.0
  %vm5074 = vcmp.gt.f32.partialorder %v4754, 20.0
  %vm5075 = vcmp.gt.f32.partialorder %v4755, 20.0
  %vm5076 = vcmp.gt.f32.partialorder %v4756, 20.0
  %v5077 = vsel %vm5045, %v4725, %v5013
  %v5078 = vsel %vm5046, %v4726, %v5014
  %v5079 = vsel %vm5047, %v4727, %v5015
  %v5080 = vsel %vm5048, %v4728, %v5016
  %v5081 = vsel %vm5049, %v4729, %v5017
  %v5082 = vsel %vm5050, %v4730, %v5018
  %v5083 = vsel %vm5051, %v4731, %v5019
  %v5084 = vsel %vm5052, %v4732, %v5020
  %v5085 = vsel %vm5053, %v4733, %v5021
  %v5086 = vsel %vm5054, %v4734, %v5022
  %v5087 = vsel %vm5055, %v4735, %v5023
  %v5088 = vsel %vm5056, %v4736, %v5024
  %v5089 = vsel %vm5057, %v4737, %v5025
  %v5090 = vsel %vm5058, %v4738, %v5026
  %v5091 = vsel %vm5059, %v4739, %v5027
  %v5092 = vsel %vm5060, %v4740, %v5028
  %v5093 = vsel %vm5061, %v4741, %v5029
  %v5094 = vsel %vm5062, %v4742, %v5030
  %v5095 = vsel %vm5063, %v4743, %v5031
  %v5096 = vsel %vm5064, %v4744, %v5032
  %v5097 = vsel %vm5065, %v4745, %v5033
  %v5098 = vsel %vm5066, %v4746, %v5034
  %v5099 = vsel %vm5067, %v4747, %v5035
  %v5100 = vsel %vm5068, %v4748, %v5036
  %v5101 = vsel %vm5069, %v4749, %v5037
  %v5102 = vsel %vm5070, %v4750, %v5038
  %v5103 = vsel %vm5071, %v4751, %v5039
  %v5104 = vsel %vm5072, %v4752, %v5040
  %v5105 = vsel %vm5073, %v4753, %v5041
  %v5106 = vsel %vm5074, %v4754, %v5042
  %v5107 = vsel %vm5075, %v4755, %v5043
  %v5108 = vsel %vm5076, %v4756, %v5044
  %v5109 = vld [vmem:[%s6] sm:$0xff]
  %v5110 = vld [vmem:[%s6 + $0x8] sm:$0xff]
  %v5111 = vld [vmem:[%s6 + $0x10] sm:$0xff]
  %v5112 = vld [vmem:[%s6 + $0x18] sm:$0xff]
  %v5113 = vld [vmem:[%s6 + $0x20] sm:$0xff]
  %v5114 = vld [vmem:[%s6 + $0x28] sm:$0xff]
  %v5115 = vld [vmem:[%s6 + $0x30] sm:$0xff]
  %v5116 = vld [vmem:[%s6 + $0x38] sm:$0xff]
  %v5117 = vld [vmem:[%s7] sm:$0x1]
  %v5119 = vlaneseq
  %v5120 = vshrl.u32 %v5119, 7
  %v5121 = vsub.s32 0, %v5120
  %v5122 = vrot.slane %v5117, %v5121
  %v5125 = vsel %vm789, %v5077, 0
  %v5128 = vsel %vm789, %v5078, 0
  %v5131 = vsel %vm789, %v5079, 0
  %v5134 = vsel %vm789, %v5080, 0
  %v5137 = vsel %vm789, %v5081, 0
  %v5140 = vsel %vm789, %v5082, 0
  %v5143 = vsel %vm789, %v5083, 0
  %v5146 = vsel %vm789, %v5084, 0
  %v5149 = vsel %vm789, %v5085, 0
  %v5152 = vsel %vm789, %v5086, 0
  %v5155 = vsel %vm789, %v5087, 0
  %v5158 = vsel %vm789, %v5088, 0
  %v5161 = vsel %vm789, %v5089, 0
  %v5164 = vsel %vm789, %v5090, 0
  %v5167 = vsel %vm789, %v5091, 0
  %v5170 = vsel %vm789, %v5092, 0
  %v5173 = vsel %vm789, %v5093, 0
  %v5176 = vsel %vm789, %v5094, 0
  %v5179 = vsel %vm789, %v5095, 0
  %v5182 = vsel %vm789, %v5096, 0
  %v5185 = vsel %vm789, %v5097, 0
  %v5188 = vsel %vm789, %v5098, 0
  %v5191 = vsel %vm789, %v5099, 0
  %v5194 = vsel %vm789, %v5100, 0
  %v5197 = vsel %vm789, %v5101, 0
  %v5200 = vsel %vm789, %v5102, 0
  %v5203 = vsel %vm789, %v5103, 0
  %v5206 = vsel %vm789, %v5104, 0
  %v5209 = vsel %vm789, %v5105, 0
  %v5212 = vsel %vm789, %v5106, 0
  %v5215 = vsel %vm789, %v5107, 0
  %v5218 = vsel %vm789, %v5108, 0
  %5220 = vmatprep.subr.mxu0 0.0
  %5221 = vmatpush1.msra.mxu0 %v5109
  %5222 = vmatprep.subr.mxu0 0.0
  %5223 = vmatpush1.msra.mxu0 %v5110
  %5224 = vmatprep.subr.mxu0 0.0
  %5225 = vmatpush1.msra.mxu0 %v5111
  %5226 = vmatprep.subr.mxu0 0.0
  %5227 = vmatpush1.msra.mxu0 %v5112
  %5228 = vmatprep.subr.mxu0 0.0
  %5229 = vmatpush1.msra.mxu0 %v5113
  %5230 = vmatprep.subr.mxu0 0.0
  %5231 = vmatpush1.msra.mxu0 %v5114
  %5232 = vmatprep.subr.mxu0 0.0
  %5233 = vmatpush1.msra.mxu0 %v5115
  %5234 = vmatprep.subr.mxu0 0.0
  %5235 = vmatpush1.msra.mxu0 %v5116
  %5236 = vmatprep.subr.mxu0 0.0
  %5237 = vmatpush1.msra.mxu0 0.0
  %5238 = vmatprep.subr.mxu0 0.0
  %5239 = vmatpush1.msra.mxu0 0.0
  %5240 = vmatprep.subr.mxu0 0.0
  %5241 = vmatpush1.msra.mxu0 0.0
  %5242 = vmatprep.subr.mxu0 0.0
  %5243 = vmatpush1.msra.mxu0 0.0
  %5244 = vmatprep.subr.mxu0 0.0
  %5245 = vmatpush1.msra.mxu0 0.0
  %5246 = vmatprep.subr.mxu0 0.0
  %5247 = vmatpush1.msra.mxu0 0.0
  %5248 = vmatprep.subr.mxu0 0.0
  %5249 = vmatpush1.msra.mxu0 0.0
  %5250 = vmatprep.subr.mxu0 0.0
  %5251 = vmatpush1.msra.mxu0 0.0
  %5252 = vmatprep.subr.mxu0 0.0
  %5253 = vmatpush1.msra.mxu0 0.0
  %5254 = vmatprep.subr.mxu0 0.0
  %5255 = vmatpush1.msra.mxu0 0.0
  %5256 = vmatprep.subr.mxu0 0.0
  %5257 = vmatpush1.msra.mxu0 0.0
  %5258 = vmatprep.subr.mxu0 0.0
  %5259 = vmatpush1.msra.mxu0 0.0
  %5260 = vmatprep.subr.mxu0 0.0
  %5261 = vmatpush1.msra.mxu0 0.0
  %5262 = vmatprep.subr.mxu0 0.0
  %5263 = vmatpush1.msra.mxu0 0.0
  %5264 = vmatprep.subr.mxu0 0.0
  %5265 = vmatpush1.msra.mxu0 0.0
  %5266 = vmatprep.subr.mxu0 0.0
  %5267 = vmatpush1.msra.mxu0 0.0
  %5268 = vmatprep.subr.mxu0 0.0
  %5269 = vmatpush1.msra.mxu0 0.0
  %5270 = vmatprep.subr.mxu0 0.0
  %5271 = vmatpush1.msra.mxu0 0.0
  %5272 = vmatprep.subr.mxu0 0.0
  %5273 = vmatpush1.msra.mxu0 0.0
  %5274 = vmatprep.subr.mxu0 0.0
  %5275 = vmatpush1.msra.mxu0 0.0
  %5276 = vmatprep.subr.mxu0 0.0
  %5277 = vmatpush1.msra.mxu0 0.0
  %5278 = vmatprep.subr.mxu0 0.0
  %5279 = vmatpush1.msra.mxu0 0.0
  %5280 = vmatprep.subr.mxu0 0.0
  %5281 = vmatpush1.msra.mxu0 0.0
  %5282 = vmatprep.subr.mxu0 0.0
  %5283 = vmatpush1.msra.mxu0 0.0
  %5284 = vmatprep.mubr.f32.mxu0 0.0
  %5285 = vmatmul.mubr.f32.gmra.mrb[0].mxu0 %v5125
  %v5286 = vpop.f32.mrb[0].mxu0
  %v5287 = vadd.f32 %v5122, %v5286
  %v5288 = vpop.f32.mrb[0].mxu0
  %5289 = vmatprep.mubr.f32.mxu0 0.0
  %5290 = vmatmul.mubr.f32.gmra.mrb[0].mxu0 %v5128
  %v5291 = vpop.f32.mrb[0].mxu0
  %v5292 = vadd.f32 %v5122, %v5291
  %v5293 = vpop.f32.mrb[0].mxu0
  %5294 = vmatprep.mubr.f32.mxu0 0.0
  %5295 = vmatmul.mubr.f32.gmra.mrb[0].mxu0 %v5131
  %v5296 = vpop.f32.mrb[0].mxu0
  %v5297 = vadd.f32 %v5122, %v5296
  %v5298 = vpop.f32.mrb[0].mxu0
  %5299 = vmatprep.mubr.f32.mxu0 0.0
  %5300 = vmatmul.mubr.f32.gmra.mrb[0].mxu0 %v5134
  %v5301 = vpop.f32.mrb[0].mxu0
  %v5302 = vadd.f32 %v5122, %v5301
  %v5303 = vpop.f32.mrb[0].mxu0
  %5304 = vmatprep.mubr.f32.mxu0 0.0
  %5305 = vmatmul.mubr.f32.gmra.mrb[0].mxu0 %v5137
  %v5306 = vpop.f32.mrb[0].mxu0
  %v5307 = vadd.f32 %v5122, %v5306
  %v5308 = vpop.f32.mrb[0].mxu0
  %5309 = vmatprep.mubr.f32.mxu0 0.0
  %5310 = vmatmul.mubr.f32.gmra.mrb[0].mxu0 %v5140
  %v5311 = vpop.f32.mrb[0].mxu0
  %v5312 = vadd.f32 %v5122, %v5311
  %v5313 = vpop.f32.mrb[0].mxu0
  %5314 = vmatprep.mubr.f32.mxu0 0.0
  %5315 = vmatmul.mubr.f32.gmra.mrb[0].mxu0 %v5143
  %v5316 = vpop.f32.mrb[0].mxu0
  %v5317 = vadd.f32 %v5122, %v5316
  %v5318 = vpop.f32.mrb[0].mxu0
  %5319 = vmatprep.mubr.f32.mxu0 0.0
  %5320 = vmatmul.mubr.f32.gmra.mrb[0].mxu0 %v5146
  %v5321 = vpop.f32.mrb[0].mxu0
  %v5322 = vadd.f32 %v5122, %v5321
  %v5323 = vpop.f32.mrb[0].mxu0
  %5324 = vmatprep.mubr.f32.mxu0 0.0
  %5325 = vmatmul.mubr.f32.gmra.mrb[0].mxu0 %v5149
  %v5326 = vpop.f32.mrb[0].mxu0
  %v5327 = vadd.f32 %v5122, %v5326
  %v5328 = vpop.f32.mrb[0].mxu0
  %5329 = vmatprep.mubr.f32.mxu0 0.0
  %5330 = vmatmul.mubr.f32.gmra.mrb[0].mxu0 %v5152
  %v5331 = vpop.f32.mrb[0].mxu0
  %v5332 = vadd.f32 %v5122, %v5331
  %v5333 = vpop.f32.mrb[0].mxu0
  %5334 = vmatprep.mubr.f32.mxu0 0.0
  %5335 = vmatmul.mubr.f32.gmra.mrb[0].mxu0 %v5155
  %v5336 = vpop.f32.mrb[0].mxu0
  %v5337 = vadd.f32 %v5122, %v5336
  %v5338 = vpop.f32.mrb[0].mxu0
  %5339 = vmatprep.mubr.f32.mxu0 0.0
  %5340 = vmatmul.mubr.f32.gmra.mrb[0].mxu0 %v5158
  %v5341 = vpop.f32.mrb[0].mxu0
  %v5342 = vadd.f32 %v5122, %v5341
  %v5343 = vpop.f32.mrb[0].mxu0
  %5344 = vmatprep.mubr.f32.mxu0 0.0
  %5345 = vmatmul.mubr.f32.gmra.mrb[0].mxu0 %v5161
  %v5346 = vpop.f32.mrb[0].mxu0
  %v5347 = vadd.f32 %v5122, %v5346
  %v5348 = vpop.f32.mrb[0].mxu0
  %5349 = vmatprep.mubr.f32.mxu0 0.0
  %5350 = vmatmul.mubr.f32.gmra.mrb[0].mxu0 %v5164
  %v5351 = vpop.f32.mrb[0].mxu0
  %v5352 = vadd.f32 %v5122, %v5351
  %v5353 = vpop.f32.mrb[0].mxu0
  %5354 = vmatprep.mubr.f32.mxu0 0.0
  %5355 = vmatmul.mubr.f32.gmra.mrb[0].mxu0 %v5167
  %v5356 = vpop.f32.mrb[0].mxu0
  %v5357 = vadd.f32 %v5122, %v5356
  %v5358 = vpop.f32.mrb[0].mxu0
  %5359 = vmatprep.mubr.f32.mxu0 0.0
  %5360 = vmatmul.mubr.f32.gmra.mrb[0].mxu0 %v5170
  %v5361 = vpop.f32.mrb[0].mxu0
  %v5362 = vadd.f32 %v5122, %v5361
  %v5363 = vpop.f32.mrb[0].mxu0
  %5364 = vmatprep.mubr.f32.mxu0 0.0
  %5365 = vmatmul.mubr.f32.gmra.mrb[0].mxu0 %v5173
  %v5366 = vpop.f32.mrb[0].mxu0
  %v5367 = vadd.f32 %v5122, %v5366
  %v5368 = vpop.f32.mrb[0].mxu0
  %5369 = vmatprep.mubr.f32.mxu0 0.0
  %5370 = vmatmul.mubr.f32.gmra.mrb[0].mxu0 %v5176
  %v5371 = vpop.f32.mrb[0].mxu0
  %v5372 = vadd.f32 %v5122, %v5371
  %v5373 = vpop.f32.mrb[0].mxu0
  %5374 = vmatprep.mubr.f32.mxu0 0.0
  %5375 = vmatmul.mubr.f32.gmra.mrb[0].mxu0 %v5179
  %v5376 = vpop.f32.mrb[0].mxu0
  %v5377 = vadd.f32 %v5122, %v5376
  %v5378 = vpop.f32.mrb[0].mxu0
  %5379 = vmatprep.mubr.f32.mxu0 0.0
  %5380 = vmatmul.mubr.f32.gmra.mrb[0].mxu0 %v5182
  %v5381 = vpop.f32.mrb[0].mxu0
  %v5382 = vadd.f32 %v5122, %v5381
  %v5383 = vpop.f32.mrb[0].mxu0
  %5384 = vmatprep.mubr.f32.mxu0 0.0
  %5385 = vmatmul.mubr.f32.gmra.mrb[0].mxu0 %v5185
  %v5386 = vpop.f32.mrb[0].mxu0
  %v5387 = vadd.f32 %v5122, %v5386
  %v5388 = vpop.f32.mrb[0].mxu0
  %5389 = vmatprep.mubr.f32.mxu0 0.0
  %5390 = vmatmul.mubr.f32.gmra.mrb[0].mxu0 %v5188
  %v5391 = vpop.f32.mrb[0].mxu0
  %v5392 = vadd.f32 %v5122, %v5391
  %v5393 = vpop.f32.mrb[0].mxu0
  %5394 = vmatprep.mubr.f32.mxu0 0.0
  %5395 = vmatmul.mubr.f32.gmra.mrb[0].mxu0 %v5191
  %v5396 = vpop.f32.mrb[0].mxu0
  %v5397 = vadd.f32 %v5122, %v5396
  %v5398 = vpop.f32.mrb[0].mxu0
  %5399 = vmatprep.mubr.f32.mxu0 0.0
  %5400 = vmatmul.mubr.f32.gmra.mrb[0].mxu0 %v5194
  %v5401 = vpop.f32.mrb[0].mxu0
  %v5402 = vadd.f32 %v5122, %v5401
  %v5403 = vpop.f32.mrb[0].mxu0
  %5404 = vmatprep.mubr.f32.mxu0 0.0
  %5405 = vmatmul.mubr.f32.gmra.mrb[0].mxu0 %v5197
  %v5406 = vpop.f32.mrb[0].mxu0
  %v5407 = vadd.f32 %v5122, %v5406
  %v5408 = vpop.f32.mrb[0].mxu0
  %5409 = vmatprep.mubr.f32.mxu0 0.0
  %5410 = vmatmul.mubr.f32.gmra.mrb[0].mxu0 %v5200
  %v5411 = vpop.f32.mrb[0].mxu0
  %v5412 = vadd.f32 %v5122, %v5411
  %v5413 = vpop.f32.mrb[0].mxu0
  %5414 = vmatprep.mubr.f32.mxu0 0.0
  %5415 = vmatmul.mubr.f32.gmra.mrb[0].mxu0 %v5203
  %v5416 = vpop.f32.mrb[0].mxu0
  %v5417 = vadd.f32 %v5122, %v5416
  %v5418 = vpop.f32.mrb[0].mxu0
  %5419 = vmatprep.mubr.f32.mxu0 0.0
  %5420 = vmatmul.mubr.f32.gmra.mrb[0].mxu0 %v5206
  %v5421 = vpop.f32.mrb[0].mxu0
  %v5422 = vadd.f32 %v5122, %v5421
  %v5423 = vpop.f32.mrb[0].mxu0
  %5424 = vmatprep.mubr.f32.mxu0 0.0
  %5425 = vmatmul.mubr.f32.gmra.mrb[0].mxu0 %v5209
  %v5426 = vpop.f32.mrb[0].mxu0
  %v5427 = vadd.f32 %v5122, %v5426
  %v5428 = vpop.f32.mrb[0].mxu0
  %5429 = vmatprep.mubr.f32.mxu0 0.0
  %5430 = vmatmul.mubr.f32.gmra.mrb[0].mxu0 %v5212
  %v5431 = vpop.f32.mrb[0].mxu0
  %v5432 = vadd.f32 %v5122, %v5431
  %v5433 = vpop.f32.mrb[0].mxu0
  %5434 = vmatprep.mubr.f32.mxu0 0.0
  %5435 = vmatmul.mubr.f32.gmra.mrb[0].mxu0 %v5215
  %v5436 = vpop.f32.mrb[0].mxu0
  %v5437 = vadd.f32 %v5122, %v5436
  %v5438 = vpop.f32.mrb[0].mxu0
  %5439 = vmatprep.mubr.f32.mxu0 0.0
  %5440 = vmatmul.mubr.f32.gmra.mrb[0].mxu0 %v5218
  %v5441 = vpop.f32.mrb[0].mxu0
  %v5442 = vadd.f32 %v5122, %v5441
  %v5443 = vpop.f32.mrb[0].mxu0
  %5444 = vdwg.mxu0
  %vm5445 = vcmask 15360
  %5446 = vst.msk [vmem:[%s8] sm:$0xff] %vm5445, %v5287
  %5447 = vst.msk [vmem:[%s8 + $0x8] sm:$0xff] %vm5445, %v5292
  %5448 = vst.msk [vmem:[%s8 + $0x10] sm:$0xff] %vm5445, %v5297
  %5449 = vst.msk [vmem:[%s8 + $0x18] sm:$0xff] %vm5445, %v5302
  %5450 = vst.msk [vmem:[%s8 + $0x20] sm:$0xff] %vm5445, %v5307
  %5451 = vst.msk [vmem:[%s8 + $0x28] sm:$0xff] %vm5445, %v5312
  %5452 = vst.msk [vmem:[%s8 + $0x30] sm:$0xff] %vm5445, %v5317
  %5453 = vst.msk [vmem:[%s8 + $0x38] sm:$0xff] %vm5445, %v5322
  %5454 = vst.msk [vmem:[%s8 + $0x40] sm:$0xff] %vm5445, %v5327
  %5455 = vst.msk [vmem:[%s8 + $0x48] sm:$0xff] %vm5445, %v5332
  %5456 = vst.msk [vmem:[%s8 + $0x50] sm:$0xff] %vm5445, %v5337
  %5457 = vst.msk [vmem:[%s8 + $0x58] sm:$0xff] %vm5445, %v5342
  %5458 = vst.msk [vmem:[%s8 + $0x60] sm:$0xff] %vm5445, %v5347
  %5459 = vst.msk [vmem:[%s8 + $0x68] sm:$0xff] %vm5445, %v5352
  %5460 = vst.msk [vmem:[%s8 + $0x70] sm:$0xff] %vm5445, %v5357
  %5461 = vst.msk [vmem:[%s8 + $0x78] sm:$0xff] %vm5445, %v5362
  %5462 = vst.msk [vmem:[%s8 + $0x80] sm:$0xff] %vm5445, %v5367
  %5463 = vst.msk [vmem:[%s8 + $0x88] sm:$0xff] %vm5445, %v5372
  %5464 = vst.msk [vmem:[%s8 + $0x90] sm:$0xff] %vm5445, %v5377
  %5465 = vst.msk [vmem:[%s8 + $0x98] sm:$0xff] %vm5445, %v5382
  %5466 = vst.msk [vmem:[%s8 + $0xa0] sm:$0xff] %vm5445, %v5387
  %5467 = vst.msk [vmem:[%s8 + $0xa8] sm:$0xff] %vm5445, %v5392
  %5468 = vst.msk [vmem:[%s8 + $0xb0] sm:$0xff] %vm5445, %v5397
  %5469 = vst.msk [vmem:[%s8 + $0xb8] sm:$0xff] %vm5445, %v5402
  %5470 = vst.msk [vmem:[%s8 + $0xc0] sm:$0xff] %vm5445, %v5407
  %5471 = vst.msk [vmem:[%s8 + $0xc8] sm:$0xff] %vm5445, %v5412
  %5472 = vst.msk [vmem:[%s8 + $0xd0] sm:$0xff] %vm5445, %v5417
  %5473 = vst.msk [vmem:[%s8 + $0xd8] sm:$0xff] %vm5445, %v5422
  %5474 = vst.msk [vmem:[%s8 + $0xe0] sm:$0xff] %vm5445, %v5427
  %5475 = vst.msk [vmem:[%s8 + $0xe8] sm:$0xff] %vm5445, %v5432
  %5476 = vst.msk [vmem:[%s8 + $0xf0] sm:$0xff] %vm5445, %v5437
  %5477 = vst.msk [vmem:[%s8 + $0xf8] sm:$0xff] %vm5445, %v5442
  // Predicated region
  $region34: #{dql_critic_forward.1} parent=0 // pred_check
    _
  $region35: #{dql_critic_forward.1} parent=0 // pred_check_branch
    %5479 = sbr.rel (0) target = $region37
  $region36: #{dql_critic_forward.1} parent=0 // pred_region
    _
  $region37: #{dql_critic_forward.1} parent=0 // pred_fallthru
    _
  // Predicated region
  $region38: #{dql_critic_forward.1} parent=0 // pred_check
    _
  $region39: #{dql_critic_forward.1} parent=0 // pred_check_branch
    %5481 = sbr.rel (0) target = $region41
  $region40: #{dql_critic_forward.1} parent=0 // pred_region
    _
  $region41: #{dql_critic_forward.1} parent=0 // pred_fallthru
    _

</llo_original>
